<compile_context>
chip_gen: v5e
topology: v5e:2x2
jax: 0.10.0
libtpu: 0.0.40
codegen_flags: <defaults>
</compile_context>

<pallas_src>
import numpy as np

import jax
import jax.numpy as jnp
from jax.experimental import pallas as pl
from jax.experimental.pallas import tpu as pltpu


# ---------------------------------------------------------------------------
# helpers
# ---------------------------------------------------------------------------
def _pool_select_mats(h_grid, w_grid, h_out, w_out, n_cols):
    """0/1 selection matrices implementing the MaxPool2d(2) column gather.

    S[d, p, r] = 1 iff r < h_out*w_out and
                 p == (2*(r // w_out) + dh) * w_grid + 2*(r % w_out) + dw,
    so max_d (act @ S[d]) is the 2x2 / stride-2 max pool of an activation laid
    out as (channels, h_grid*w_grid), re-laid onto n_cols lane-dense columns
    (extra columns become exact zeros = padding for the next conv's reads).
    """
    sel = np.zeros((4, h_grid * w_grid, n_cols), np.float32)
    for d, (dh, dw) in enumerate(((0, 0), (0, 1), (1, 0), (1, 1))):
        for r in range(h_out * w_out):
            hh, ww = divmod(r, w_out)
            sel[d, (2 * hh + dh) * w_grid + (2 * ww + dw), r] = 1.0
    return jnp.asarray(sel)


def _whole_array_spec(a):
    """Full-array block (loaded once; block index constant across the grid)."""
    nd = a.ndim
    return pl.BlockSpec(a.shape, lambda i: (0,) * nd)


# ---------------------------------------------------------------------------
# fused LeNet
# ---------------------------------------------------------------------------
def make_lenet(img_height=28, img_width=28, num_labels=10, img_channels=1):
    K = 5
    CI, C1, C2 = img_channels, 6, 16
    NL = num_labels

    H1, W1 = img_height, img_width
    HW1 = H1 * W1
    PAD1 = (K - 1) * (W1 + 1)                 # lane padding for conv1 shifts
    HO1, WO1 = H1 - K + 1, W1 - K + 1
    assert HO1 % 2 == 0 and WO1 % 2 == 0
    H2, W2 = HO1 // 2, WO1 // 2               # pool1 / conv2-input grid
    HW2 = H2 * W2
    PAD2 = (K - 1) * (W2 + 1)                 # lane padding for conv2 shifts
    HO2, WO2 = H2 - K + 1, W2 - K + 1
    assert HO2 % 2 == 0 and WO2 % 2 == 0
    H3, W3 = HO2 // 2, WO2 // 2               # pool2 grid
    P2 = H3 * W3                              # spatial size fed to fc1 (16)

    # MaxPool2d(2) selection matrices (constants, built once on host).
    s1 = _pool_select_mats(H1, W1, H2, W2, HW2 + PAD2)   # (4, HW1, HW2+PAD2)
    s2 = _pool_select_mats(H2, W2, H3, W3, P2)           # (4, HW2, P2)

    def prepare(params):
        """One-time repack of PyTorch-layout parameters into kernel layout."""
        w1 = jnp.asarray(params["conv1_w"], jnp.float32)      # (C1, CI, K, K)
        w2 = jnp.asarray(params["conv2_w"], jnp.float32)      # (C2, C1, K, K)
        assert w1.shape == (C1, CI, K, K) and w2.shape == (C2, C1, K, K)
        assert params["fc1_w"].shape[1] == C2 * P2
        return {
            # conv weights as (Co, (kh*K+kw)*Ci + ci) to match in-kernel im2col
            "w1": w1.transpose(0, 2, 3, 1).reshape(C1, K * K * CI),
            "b1": jnp.asarray(params["conv1_b"], jnp.float32).reshape(C1, 1),
            "w2": w2.transpose(0, 2, 3, 1).reshape(C2, K * K * C1),
            "b2": jnp.asarray(params["conv2_b"], jnp.float32).reshape(C2, 1),
            # FC weights pre-transposed once (feedback: no .T in the hot path)
            "fc1w": jnp.asarray(params["fc1_w"], jnp.float32).T,  # (C2*P2,120)
            "fc1b": jnp.asarray(params["fc1_b"], jnp.float32).reshape(1, -1),
            "fc2w": jnp.asarray(params["fc2_w"], jnp.float32).T,  # (120, 84)
            "fc2b": jnp.asarray(params["fc2_b"], jnp.float32).reshape(1, -1),
            "fc3w": jnp.asarray(params["fc3_w"], jnp.float32).T,  # (84, NL)
            "fc3b": jnp.asarray(params["fc3_b"], jnp.float32).reshape(1, -1),
            "s1": s1,
            "s2": s2,
        }

    def kernel(x_ref, w1_ref, b1_ref, s1_ref, w2_ref, b2_ref, s2_ref,
               fc1w_ref, fc1b_ref, fc2w_ref, fc2b_ref, fc3w_ref, fc3b_ref,
               out_ref, cols1_ref, cols2_ref):
        def mm(a, b):
            return jnp.dot(a, b, preferred_element_type=jnp.float32)

        # ---- conv1: in-kernel im2col into VMEM scratch, then ONE lane-dense
        #      transposed matmul  (C1, K*K*CI) @ (K*K*CI, HW1).
        x_img = x_ref[0]                                     # (CI, HW1 + PAD1)
        for kh in range(K):
            for kw in range(K):
                r = (kh * K + kw) * CI
                s = kh * W1 + kw
                cols1_ref[r:r + CI, :] = x_img[:, s:s + HW1]
        y = jnp.maximum(mm(w1_ref[...], cols1_ref[...]) + b1_ref[...], 0.0)

        # ---- pool1: max of four 0/1 selection matmuls; result is already on
        #      the zero-padded 12x12 grid conv2's shifted reads expect.
        act1 = jnp.maximum(jnp.maximum(mm(y, s1_ref[0]), mm(y, s1_ref[1])),
                           jnp.maximum(mm(y, s1_ref[2]), mm(y, s1_ref[3])))

        # ---- conv2: im2col straight from the VMEM-resident activation.
        for kh in range(K):
            for kw in range(K):
                r = (kh * K + kw) * C1
                s = kh * W2 + kw
                cols2_ref[r:r + C1, :] = act1[:, s:s + HW2]
        y = jnp.maximum(mm(w2_ref[...], cols2_ref[...]) + b2_ref[...], 0.0)

        # ---- pool2 -> (C2, P2): rows = channels, cols = 4x4 spatial.
        feat = jnp.maximum(jnp.maximum(mm(y, s2_ref[0]), mm(y, s2_ref[1])),
                           jnp.maximum(mm(y, s2_ref[2]), mm(y, s2_ref[3])))

        # ---- fc1 with the NCHW flatten folded in (PyTorch index = c*P2 + q),
        #      then fc2 / fc3 (+ReLU after each, incl. relu5, per the module).
        h = fc1b_ref[...]
        for c in range(C2):
            h = h + mm(feat[c:c + 1, :], fc1w_ref[c * P2:(c + 1) * P2, :])
        h = jnp.maximum(h, 0.0)
        h = jnp.maximum(mm(h, fc2w_ref[...]) + fc2b_ref[...], 0.0)
        h = jnp.maximum(mm(h, fc3w_ref[...]) + fc3b_ref[...], 0.0)
        out_ref[0] = h

    def forward(x, prep):
        n = x.shape[0]
        # Flatten spatial onto lanes + zero-pad so all 25 conv1 shifts exist.
        xr = jnp.pad(x.astype(jnp.float32).reshape(n, CI, HW1),
                     ((0, 0), (0, 0), (0, PAD1)))
        args = (xr, prep["w1"], prep["b1"], prep["s1"],
                prep["w2"], prep["b2"], prep["s2"],
                prep["fc1w"], prep["fc1b"], prep["fc2w"], prep["fc2b"],
                prep["fc3w"], prep["fc3b"])
        in_specs = ([pl.BlockSpec((1, CI, HW1 + PAD1), lambda i: (i, 0, 0))]
                    + [_whole_array_spec(a) for a in args[1:]])
        out = pl.pallas_call(
            kernel,
            out_shape=jax.ShapeDtypeStruct((n, 1, NL), jnp.float32),
            grid=(n,),
            in_specs=in_specs,
            out_specs=pl.BlockSpec((1, 1, NL), lambda i: (i, 0, 0)),
            scratch_shapes=[
                pltpu.VMEM((K * K * CI, HW1), jnp.float32),   # conv1 im2col
                pltpu.VMEM((K * K * C1, HW2), jnp.float32),   # conv2 im2col
            ],
            compiler_params=pltpu.CompilerParams(
                dimension_semantics=("parallel",),
                vmem_limit_bytes=32 * 1024 * 1024),
        )(*args)
        return out.reshape(n, NL)

    return prepare, forward


# ---------------------------------------------------------------------------
# params (PyTorch layout) + pure-JAX reference for a correctness check
# ---------------------------------------------------------------------------
def init_params(key, img_height=28, img_width=28, num_labels=10, img_channels=1):
    fc1_in = int(((img_height - 4) / 2 - 4) / 2 * (((img_width - 4) / 2 - 4) / 2) * 16)
    ks = jax.random.split(key, 10)
    s = 0.1
    return {
        "conv1_w": s * jax.random.normal(ks[0], (6, img_channels, 5, 5), jnp.float32),
        "conv1_b": s * jax.random.normal(ks[1], (6,), jnp.float32),
        "conv2_w": s * jax.random.normal(ks[2], (16, 6, 5, 5), jnp.float32),
        "conv2_b": s * jax.random.normal(ks[3], (16,), jnp.float32),
        "fc1_w": s * jax.random.normal(ks[4], (120, fc1_in), jnp.float32),
        "fc1_b": s * jax.random.normal(ks[5], (120,), jnp.float32),
        "fc2_w": s * jax.random.normal(ks[6], (84, 120), jnp.float32),
        "fc2_b": s * jax.random.normal(ks[7], (84,), jnp.float32),
        "fc3_w": s * jax.random.normal(ks[8], (num_labels, 84), jnp.float32),
        "fc3_b": s * jax.random.normal(ks[9], (num_labels,), jnp.float32),
    }


def lenet_reference(x, p):
    dn = ("NCHW", "OIHW", "NCHW")
    y = jax.lax.conv_general_dilated(x, p["conv1_w"], (1, 1), "VALID",
                                     dimension_numbers=dn)
    y = jax.nn.relu(y + p["conv1_b"][None, :, None, None])
    y = jax.lax.reduce_window(y, -jnp.inf, jax.lax.max,
                              (1, 1, 2, 2), (1, 1, 2, 2), "VALID")
    y = jax.lax.conv_general_dilated(y, p["conv2_w"], (1, 1), "VALID",
                                     dimension_numbers=dn)
    y = jax.nn.relu(y + p["conv2_b"][None, :, None, None])
    y = jax.lax.reduce_window(y, -jnp.inf, jax.lax.max,
                              (1, 1, 2, 2), (1, 1, 2, 2), "VALID")
    y = y.reshape(y.shape[0], -1)
    y = jax.nn.relu(y @ p["fc1_w"].T + p["fc1_b"])
    y = jax.nn.relu(y @ p["fc2_w"].T + p["fc2_b"])
    y = jax.nn.relu(y @ p["fc3_w"].T + p["fc3_b"])   # module applies relu5 too
    return y


if __name__ == "__main__":
    key = jax.random.PRNGKey(0)
    k_params, k_x = jax.random.split(key)
    params = init_params(k_params)
    x = jax.random.normal(k_x, (2, 1, 28, 28), jnp.float32)

    prepare, forward = make_lenet()
    prep = prepare(params)          # one-time weight repack (not in hot path)

    fwd = jax.jit(forward)
    out = fwd(x, prep)
    jax.block_until_ready(out)
    assert out.shape == (2, 10), out.shape

    ref = lenet_reference(x, params)
    max_err = float(jnp.max(jnp.abs(out - ref)))
    assert jnp.allclose(out, ref, atol=5e-2, rtol=5e-2), max_err

    print("KERNEL_OK")
</pallas_src>

<mosaic_0001>
module attributes {stable_mosaic.version = 11 : i64} {
  func.func @kernel(%arg0: i32, %arg1: memref<1x1x900xf32, #tpu.memory_space<vmem>>, %arg2: memref<6x25xf32, #tpu.memory_space<vmem>>, %arg3: memref<6x1xf32, #tpu.memory_space<vmem>>, %arg4: memref<4x784x196xf32, #tpu.memory_space<vmem>>, %arg5: memref<16x150xf32, #tpu.memory_space<vmem>>, %arg6: memref<16x1xf32, #tpu.memory_space<vmem>>, %arg7: memref<4x144x16xf32, #tpu.memory_space<vmem>>, %arg8: memref<256x120xf32, #tpu.memory_space<vmem>>, %arg9: memref<1x120xf32, #tpu.memory_space<vmem>>, %arg10: memref<120x84xf32, #tpu.memory_space<vmem>>, %arg11: memref<1x84xf32, #tpu.memory_space<vmem>>, %arg12: memref<84x10xf32, #tpu.memory_space<vmem>>, %arg13: memref<1x10xf32, #tpu.memory_space<vmem>>, %arg14: memref<1x1x10xf32, #tpu.memory_space<vmem>>, %arg15: memref<25x784xf32, #tpu.memory_space<vmem>>, %arg16: memref<150x144xf32, #tpu.memory_space<vmem>>) attributes {dimension_semantics = [#tpu.dimension_semantics<parallel>], iteration_bounds = array<i64: 2>, scalar_prefetch = 0 : i64, scratch_operands = 2 : i64, tpu.core_type = #tpu.core_type<tc>, window_params = [{transform_indices = @transform_0, window_bounds = array<i64: 1, 1, 900>}, {pipeline_mode = #tpu.pipeline_mode<synchronous>, transform_indices = @transform_1, window_bounds = array<i64: 6, 25>}, {pipeline_mode = #tpu.pipeline_mode<synchronous>, transform_indices = @transform_2, window_bounds = array<i64: 6, 1>}, {pipeline_mode = #tpu.pipeline_mode<synchronous>, transform_indices = @transform_3, window_bounds = array<i64: 4, 784, 196>}, {pipeline_mode = #tpu.pipeline_mode<synchronous>, transform_indices = @transform_4, window_bounds = array<i64: 16, 150>}, {pipeline_mode = #tpu.pipeline_mode<synchronous>, transform_indices = @transform_5, window_bounds = array<i64: 16, 1>}, {pipeline_mode = #tpu.pipeline_mode<synchronous>, transform_indices = @transform_6, window_bounds = array<i64: 4, 144, 16>}, {pipeline_mode = #tpu.pipeline_mode<synchronous>, transform_indices = @transform_7, window_bounds = array<i64: 256, 120>}, {pipeline_mode = #tpu.pipeline_mode<synchronous>, transform_indices = @transform_8, window_bounds = array<i64: 1, 120>}, {pipeline_mode = #tpu.pipeline_mode<synchronous>, transform_indices = @transform_9, window_bounds = array<i64: 120, 84>}, {pipeline_mode = #tpu.pipeline_mode<synchronous>, transform_indices = @transform_10, window_bounds = array<i64: 1, 84>}, {pipeline_mode = #tpu.pipeline_mode<synchronous>, transform_indices = @transform_11, window_bounds = array<i64: 84, 10>}, {pipeline_mode = #tpu.pipeline_mode<synchronous>, transform_indices = @transform_12, window_bounds = array<i64: 1, 10>}, {transform_indices = @transform_13, window_bounds = array<i64: 1, 1, 10>}]} {
    %c0 = arith.constant 0 : index
    %c0_0 = arith.constant 0 : index
    %c0_1 = arith.constant 0 : index
    %0 = vector.load %arg1[%c0, %c0_0, %c0_1] : memref<1x1x900xf32, #tpu.memory_space<vmem>>, vector<1x1x900xf32>
    %1 = vector.shape_cast %0 : vector<1x1x900xf32> to vector<1x900xf32>
    %2 = vector.extract_strided_slice %1 {offsets = [0, 0], sizes = [1, 784], strides = [1, 1]} : vector<1x900xf32> to vector<1x784xf32>
    %c0_2 = arith.constant 0 : index
    %c0_3 = arith.constant 0 : index
    %3 = vector.load %arg15[%c0_2, %c0_3] : memref<25x784xf32, #tpu.memory_space<vmem>>, vector<1x784xf32>
    tpu.vector_store %arg15[%c0_2, %c0_3], %2 {strides = array<i32>} : memref<25x784xf32, #tpu.memory_space<vmem>>, vector<1x784xf32>,
    %4 = vector.extract_strided_slice %1 {offsets = [0, 1], sizes = [1, 784], strides = [1, 1]} : vector<1x900xf32> to vector<1x784xf32>
    %c1 = arith.constant 1 : index
    %c0_4 = arith.constant 0 : index
    %5 = vector.load %arg15[%c1, %c0_4] : memref<25x784xf32, #tpu.memory_space<vmem>>, vector<1x784xf32>
    tpu.vector_store %arg15[%c1, %c0_4], %4 {strides = array<i32>} : memref<25x784xf32, #tpu.memory_space<vmem>>, vector<1x784xf32>,
    %6 = vector.extract_strided_slice %1 {offsets = [0, 2], sizes = [1, 784], strides = [1, 1]} : vector<1x900xf32> to vector<1x784xf32>
    %c2 = arith.constant 2 : index
    %c0_5 = arith.constant 0 : index
    %7 = vector.load %arg15[%c2, %c0_5] : memref<25x784xf32, #tpu.memory_space<vmem>>, vector<1x784xf32>
    tpu.vector_store %arg15[%c2, %c0_5], %6 {strides = array<i32>} : memref<25x784xf32, #tpu.memory_space<vmem>>, vector<1x784xf32>,
    %8 = vector.extract_strided_slice %1 {offsets = [0, 3], sizes = [1, 784], strides = [1, 1]} : vector<1x900xf32> to vector<1x784xf32>
    %c3 = arith.constant 3 : index
    %c0_6 = arith.constant 0 : index
    %9 = vector.load %arg15[%c3, %c0_6] : memref<25x784xf32, #tpu.memory_space<vmem>>, vector<1x784xf32>
    tpu.vector_store %arg15[%c3, %c0_6], %8 {strides = array<i32>} : memref<25x784xf32, #tpu.memory_space<vmem>>, vector<1x784xf32>,
    %10 = vector.extract_strided_slice %1 {offsets = [0, 4], sizes = [1, 784], strides = [1, 1]} : vector<1x900xf32> to vector<1x784xf32>
    %c4 = arith.constant 4 : index
    %c0_7 = arith.constant 0 : index
    %11 = vector.load %arg15[%c4, %c0_7] : memref<25x784xf32, #tpu.memory_space<vmem>>, vector<1x784xf32>
    tpu.vector_store %arg15[%c4, %c0_7], %10 {strides = array<i32>} : memref<25x784xf32, #tpu.memory_space<vmem>>, vector<1x784xf32>,
    %12 = vector.extract_strided_slice %1 {offsets = [0, 28], sizes = [1, 784], strides = [1, 1]} : vector<1x900xf32> to vector<1x784xf32>
    %c5 = arith.constant 5 : index
    %c0_8 = arith.constant 0 : index
    %13 = vector.load %arg15[%c5, %c0_8] : memref<25x784xf32, #tpu.memory_space<vmem>>, vector<1x784xf32>
    tpu.vector_store %arg15[%c5, %c0_8], %12 {strides = array<i32>} : memref<25x784xf32, #tpu.memory_space<vmem>>, vector<1x784xf32>,
    %14 = vector.extract_strided_slice %1 {offsets = [0, 29], sizes = [1, 784], strides = [1, 1]} : vector<1x900xf32> to vector<1x784xf32>
    %c6 = arith.constant 6 : index
    %c0_9 = arith.constant 0 : index
    %15 = vector.load %arg15[%c6, %c0_9] : memref<25x784xf32, #tpu.memory_space<vmem>>, vector<1x784xf32>
    tpu.vector_store %arg15[%c6, %c0_9], %14 {strides = array<i32>} : memref<25x784xf32, #tpu.memory_space<vmem>>, vector<1x784xf32>,
    %16 = vector.extract_strided_slice %1 {offsets = [0, 30], sizes = [1, 784], strides = [1, 1]} : vector<1x900xf32> to vector<1x784xf32>
    %c7 = arith.constant 7 : index
    %c0_10 = arith.constant 0 : index
    %17 = vector.load %arg15[%c7, %c0_10] : memref<25x784xf32, #tpu.memory_space<vmem>>, vector<1x784xf32>
    tpu.vector_store %arg15[%c7, %c0_10], %16 {strides = array<i32>} : memref<25x784xf32, #tpu.memory_space<vmem>>, vector<1x784xf32>,
    %18 = vector.extract_strided_slice %1 {offsets = [0, 31], sizes = [1, 784], strides = [1, 1]} : vector<1x900xf32> to vector<1x784xf32>
    %c8 = arith.constant 8 : index
    %c0_11 = arith.constant 0 : index
    %19 = vector.load %arg15[%c8, %c0_11] : memref<25x784xf32, #tpu.memory_space<vmem>>, vector<1x784xf32>
    tpu.vector_store %arg15[%c8, %c0_11], %18 {strides = array<i32>} : memref<25x784xf32, #tpu.memory_space<vmem>>, vector<1x784xf32>,
    %20 = vector.extract_strided_slice %1 {offsets = [0, 32], sizes = [1, 784], strides = [1, 1]} : vector<1x900xf32> to vector<1x784xf32>
    %c9 = arith.constant 9 : index
    %c0_12 = arith.constant 0 : index
    %21 = vector.load %arg15[%c9, %c0_12] : memref<25x784xf32, #tpu.memory_space<vmem>>, vector<1x784xf32>
    tpu.vector_store %arg15[%c9, %c0_12], %20 {strides = array<i32>} : memref<25x784xf32, #tpu.memory_space<vmem>>, vector<1x784xf32>,
    %22 = vector.extract_strided_slice %1 {offsets = [0, 56], sizes = [1, 784], strides = [1, 1]} : vector<1x900xf32> to vector<1x784xf32>
    %c10 = arith.constant 10 : index
    %c0_13 = arith.constant 0 : index
    %23 = vector.load %arg15[%c10, %c0_13] : memref<25x784xf32, #tpu.memory_space<vmem>>, vector<1x784xf32>
    tpu.vector_store %arg15[%c10, %c0_13], %22 {strides = array<i32>} : memref<25x784xf32, #tpu.memory_space<vmem>>, vector<1x784xf32>,
    %24 = vector.extract_strided_slice %1 {offsets = [0, 57], sizes = [1, 784], strides = [1, 1]} : vector<1x900xf32> to vector<1x784xf32>
    %c11 = arith.constant 11 : index
    %c0_14 = arith.constant 0 : index
    %25 = vector.load %arg15[%c11, %c0_14] : memref<25x784xf32, #tpu.memory_space<vmem>>, vector<1x784xf32>
    tpu.vector_store %arg15[%c11, %c0_14], %24 {strides = array<i32>} : memref<25x784xf32, #tpu.memory_space<vmem>>, vector<1x784xf32>,
    %26 = vector.extract_strided_slice %1 {offsets = [0, 58], sizes = [1, 784], strides = [1, 1]} : vector<1x900xf32> to vector<1x784xf32>
    %c12 = arith.constant 12 : index
    %c0_15 = arith.constant 0 : index
    %27 = vector.load %arg15[%c12, %c0_15] : memref<25x784xf32, #tpu.memory_space<vmem>>, vector<1x784xf32>
    tpu.vector_store %arg15[%c12, %c0_15], %26 {strides = array<i32>} : memref<25x784xf32, #tpu.memory_space<vmem>>, vector<1x784xf32>,
    %28 = vector.extract_strided_slice %1 {offsets = [0, 59], sizes = [1, 784], strides = [1, 1]} : vector<1x900xf32> to vector<1x784xf32>
    %c13 = arith.constant 13 : index
    %c0_16 = arith.constant 0 : index
    %29 = vector.load %arg15[%c13, %c0_16] : memref<25x784xf32, #tpu.memory_space<vmem>>, vector<1x784xf32>
    tpu.vector_store %arg15[%c13, %c0_16], %28 {strides = array<i32>} : memref<25x784xf32, #tpu.memory_space<vmem>>, vector<1x784xf32>,
    %30 = vector.extract_strided_slice %1 {offsets = [0, 60], sizes = [1, 784], strides = [1, 1]} : vector<1x900xf32> to vector<1x784xf32>
    %c14 = arith.constant 14 : index
    %c0_17 = arith.constant 0 : index
    %31 = vector.load %arg15[%c14, %c0_17] : memref<25x784xf32, #tpu.memory_space<vmem>>, vector<1x784xf32>
    tpu.vector_store %arg15[%c14, %c0_17], %30 {strides = array<i32>} : memref<25x784xf32, #tpu.memory_space<vmem>>, vector<1x784xf32>,
    %32 = vector.extract_strided_slice %1 {offsets = [0, 84], sizes = [1, 784], strides = [1, 1]} : vector<1x900xf32> to vector<1x784xf32>
    %c15 = arith.constant 15 : index
    %c0_18 = arith.constant 0 : index
    %33 = vector.load %arg15[%c15, %c0_18] : memref<25x784xf32, #tpu.memory_space<vmem>>, vector<1x784xf32>
    tpu.vector_store %arg15[%c15, %c0_18], %32 {strides = array<i32>} : memref<25x784xf32, #tpu.memory_space<vmem>>, vector<1x784xf32>,
    %34 = vector.extract_strided_slice %1 {offsets = [0, 85], sizes = [1, 784], strides = [1, 1]} : vector<1x900xf32> to vector<1x784xf32>
    %c16 = arith.constant 16 : index
    %c0_19 = arith.constant 0 : index
    %35 = vector.load %arg15[%c16, %c0_19] : memref<25x784xf32, #tpu.memory_space<vmem>>, vector<1x784xf32>
    tpu.vector_store %arg15[%c16, %c0_19], %34 {strides = array<i32>} : memref<25x784xf32, #tpu.memory_space<vmem>>, vector<1x784xf32>,
    %36 = vector.extract_strided_slice %1 {offsets = [0, 86], sizes = [1, 784], strides = [1, 1]} : vector<1x900xf32> to vector<1x784xf32>
    %c17 = arith.constant 17 : index
    %c0_20 = arith.constant 0 : index
    %37 = vector.load %arg15[%c17, %c0_20] : memref<25x784xf32, #tpu.memory_space<vmem>>, vector<1x784xf32>
    tpu.vector_store %arg15[%c17, %c0_20], %36 {strides = array<i32>} : memref<25x784xf32, #tpu.memory_space<vmem>>, vector<1x784xf32>,
    %38 = vector.extract_strided_slice %1 {offsets = [0, 87], sizes = [1, 784], strides = [1, 1]} : vector<1x900xf32> to vector<1x784xf32>
    %c18 = arith.constant 18 : index
    %c0_21 = arith.constant 0 : index
    %39 = vector.load %arg15[%c18, %c0_21] : memref<25x784xf32, #tpu.memory_space<vmem>>, vector<1x784xf32>
    tpu.vector_store %arg15[%c18, %c0_21], %38 {strides = array<i32>} : memref<25x784xf32, #tpu.memory_space<vmem>>, vector<1x784xf32>,
    %40 = vector.extract_strided_slice %1 {offsets = [0, 88], sizes = [1, 784], strides = [1, 1]} : vector<1x900xf32> to vector<1x784xf32>
    %c19 = arith.constant 19 : index
    %c0_22 = arith.constant 0 : index
    %41 = vector.load %arg15[%c19, %c0_22] : memref<25x784xf32, #tpu.memory_space<vmem>>, vector<1x784xf32>
    tpu.vector_store %arg15[%c19, %c0_22], %40 {strides = array<i32>} : memref<25x784xf32, #tpu.memory_space<vmem>>, vector<1x784xf32>,
    %42 = vector.extract_strided_slice %1 {offsets = [0, 112], sizes = [1, 784], strides = [1, 1]} : vector<1x900xf32> to vector<1x784xf32>
    %c20 = arith.constant 20 : index
    %c0_23 = arith.constant 0 : index
    %43 = vector.load %arg15[%c20, %c0_23] : memref<25x784xf32, #tpu.memory_space<vmem>>, vector<1x784xf32>
    tpu.vector_store %arg15[%c20, %c0_23], %42 {strides = array<i32>} : memref<25x784xf32, #tpu.memory_space<vmem>>, vector<1x784xf32>,
    %44 = vector.extract_strided_slice %1 {offsets = [0, 113], sizes = [1, 784], strides = [1, 1]} : vector<1x900xf32> to vector<1x784xf32>
    %c21 = arith.constant 21 : index
    %c0_24 = arith.constant 0 : index
    %45 = vector.load %arg15[%c21, %c0_24] : memref<25x784xf32, #tpu.memory_space<vmem>>, vector<1x784xf32>
    tpu.vector_store %arg15[%c21, %c0_24], %44 {strides = array<i32>} : memref<25x784xf32, #tpu.memory_space<vmem>>, vector<1x784xf32>,
    %46 = vector.extract_strided_slice %1 {offsets = [0, 114], sizes = [1, 784], strides = [1, 1]} : vector<1x900xf32> to vector<1x784xf32>
    %c22 = arith.constant 22 : index
    %c0_25 = arith.constant 0 : index
    %47 = vector.load %arg15[%c22, %c0_25] : memref<25x784xf32, #tpu.memory_space<vmem>>, vector<1x784xf32>
    tpu.vector_store %arg15[%c22, %c0_25], %46 {strides = array<i32>} : memref<25x784xf32, #tpu.memory_space<vmem>>, vector<1x784xf32>,
    %48 = vector.extract_strided_slice %1 {offsets = [0, 115], sizes = [1, 784], strides = [1, 1]} : vector<1x900xf32> to vector<1x784xf32>
    %c23 = arith.constant 23 : index
    %c0_26 = arith.constant 0 : index
    %49 = vector.load %arg15[%c23, %c0_26] : memref<25x784xf32, #tpu.memory_space<vmem>>, vector<1x784xf32>
    tpu.vector_store %arg15[%c23, %c0_26], %48 {strides = array<i32>} : memref<25x784xf32, #tpu.memory_space<vmem>>, vector<1x784xf32>,
    %50 = vector.extract_strided_slice %1 {offsets = [0, 116], sizes = [1, 784], strides = [1, 1]} : vector<1x900xf32> to vector<1x784xf32>
    %c24 = arith.constant 24 : index
    %c0_27 = arith.constant 0 : index
    %51 = vector.load %arg15[%c24, %c0_27] : memref<25x784xf32, #tpu.memory_space<vmem>>, vector<1x784xf32>
    tpu.vector_store %arg15[%c24, %c0_27], %50 {strides = array<i32>} : memref<25x784xf32, #tpu.memory_space<vmem>>, vector<1x784xf32>,
    %c0_28 = arith.constant 0 : index
    %c0_29 = arith.constant 0 : index
    %52 = vector.load %arg2[%c0_28, %c0_29] : memref<6x25xf32, #tpu.memory_space<vmem>>, vector<6x25xf32>
    %c0_30 = arith.constant 0 : index
    %c0_31 = arith.constant 0 : index
    %53 = vector.load %arg15[%c0_30, %c0_31] : memref<25x784xf32, #tpu.memory_space<vmem>>, vector<25x784xf32>
    %cst = arith.constant dense<0.000000e+00> : vector<6x784xf32>
    %54 = tpu.matmul %52, %53, %cst {dimension_numbers = #tpu.dot_dimension_numbers<[1], [0], [0], [1], [0, 0, 1, 1], [], []>} : vector<6x25xf32>, vector<25x784xf32>, vector<6x784xf32> -> vector<6x784xf32>
    %c0_32 = arith.constant 0 : index
    %c0_33 = arith.constant 0 : index
    %55 = vector.load %arg3[%c0_32, %c0_33] : memref<6x1xf32, #tpu.memory_space<vmem>>, vector<6x1xf32>
    %56 = vector.broadcast %55 : vector<6x1xf32> to vector<6x784xf32>
    %57 = arith.addf %54, %56 : vector<6x784xf32>
    %cst_34 = arith.constant 0.000000e+00 : f32
    %58 = vector.broadcast %cst_34 : f32 to vector<6x784xf32>
    %59 = arith.maximumf %57, %58 : vector<6x784xf32>
    %c0_35 = arith.constant 0 : index
    %c0_36 = arith.constant 0 : index
    %c0_37 = arith.constant 0 : index
    %60 = vector.load %arg4[%c0_35, %c0_36, %c0_37] : memref<4x784x196xf32, #tpu.memory_space<vmem>>, vector<1x784x196xf32>
    %61 = vector.shape_cast %60 : vector<1x784x196xf32> to vector<784x196xf32>
    %cst_38 = arith.constant dense<0.000000e+00> : vector<6x196xf32>
    %62 = tpu.matmul %59, %61, %cst_38 {dimension_numbers = #tpu.dot_dimension_numbers<[1], [0], [0], [1], [0, 0, 1, 1], [], []>} : vector<6x784xf32>, vector<784x196xf32>, vector<6x196xf32> -> vector<6x196xf32>
    %c1_39 = arith.constant 1 : index
    %c0_40 = arith.constant 0 : index
    %c0_41 = arith.constant 0 : index
    %63 = vector.load %arg4[%c1_39, %c0_40, %c0_41] : memref<4x784x196xf32, #tpu.memory_space<vmem>>, vector<1x784x196xf32>
    %64 = vector.shape_cast %63 : vector<1x784x196xf32> to vector<784x196xf32>
    %cst_42 = arith.constant dense<0.000000e+00> : vector<6x196xf32>
    %65 = tpu.matmul %59, %64, %cst_42 {dimension_numbers = #tpu.dot_dimension_numbers<[1], [0], [0], [1], [0, 0, 1, 1], [], []>} : vector<6x784xf32>, vector<784x196xf32>, vector<6x196xf32> -> vector<6x196xf32>
    %66 = arith.maximumf %62, %65 : vector<6x196xf32>
    %c2_43 = arith.constant 2 : index
    %c0_44 = arith.constant 0 : index
    %c0_45 = arith.constant 0 : index
    %67 = vector.load %arg4[%c2_43, %c0_44, %c0_45] : memref<4x784x196xf32, #tpu.memory_space<vmem>>, vector<1x784x196xf32>
    %68 = vector.shape_cast %67 : vector<1x784x196xf32> to vector<784x196xf32>
    %cst_46 = arith.constant dense<0.000000e+00> : vector<6x196xf32>
    %69 = tpu.matmul %59, %68, %cst_46 {dimension_numbers = #tpu.dot_dimension_numbers<[1], [0], [0], [1], [0, 0, 1, 1], [], []>} : vector<6x784xf32>, vector<784x196xf32>, vector<6x196xf32> -> vector<6x196xf32>
    %c3_47 = arith.constant 3 : index
    %c0_48 = arith.constant 0 : index
    %c0_49 = arith.constant 0 : index
    %70 = vector.load %arg4[%c3_47, %c0_48, %c0_49] : memref<4x784x196xf32, #tpu.memory_space<vmem>>, vector<1x784x196xf32>
    %71 = vector.shape_cast %70 : vector<1x784x196xf32> to vector<784x196xf32>
    %cst_50 = arith.constant dense<0.000000e+00> : vector<6x196xf32>
    %72 = tpu.matmul %59, %71, %cst_50 {dimension_numbers = #tpu.dot_dimension_numbers<[1], [0], [0], [1], [0, 0, 1, 1], [], []>} : vector<6x784xf32>, vector<784x196xf32>, vector<6x196xf32> -> vector<6x196xf32>
    %73 = arith.maximumf %69, %72 : vector<6x196xf32>
    %74 = arith.maximumf %66, %73 : vector<6x196xf32>
    %75 = vector.extract_strided_slice %74 {offsets = [0, 0], sizes = [6, 144], strides = [1, 1]} : vector<6x196xf32> to vector<6x144xf32>
    %c0_51 = arith.constant 0 : index
    %c0_52 = arith.constant 0 : index
    %76 = vector.load %arg16[%c0_51, %c0_52] : memref<150x144xf32, #tpu.memory_space<vmem>>, vector<6x144xf32>
    tpu.vector_store %arg16[%c0_51, %c0_52], %75 {strides = array<i32>} : memref<150x144xf32, #tpu.memory_space<vmem>>, vector<6x144xf32>,
    %77 = vector.extract_strided_slice %74 {offsets = [0, 1], sizes = [6, 144], strides = [1, 1]} : vector<6x196xf32> to vector<6x144xf32>
    %c6_53 = arith.constant 6 : index
    %c0_54 = arith.constant 0 : index
    %78 = vector.load %arg16[%c6_53, %c0_54] : memref<150x144xf32, #tpu.memory_space<vmem>>, vector<6x144xf32>
    tpu.vector_store %arg16[%c6_53, %c0_54], %77 {strides = array<i32>} : memref<150x144xf32, #tpu.memory_space<vmem>>, vector<6x144xf32>,
    %79 = vector.extract_strided_slice %74 {offsets = [0, 2], sizes = [6, 144], strides = [1, 1]} : vector<6x196xf32> to vector<6x144xf32>
    %c12_55 = arith.constant 12 : index
    %c0_56 = arith.constant 0 : index
    %80 = vector.load %arg16[%c12_55, %c0_56] : memref<150x144xf32, #tpu.memory_space<vmem>>, vector<6x144xf32>
    tpu.vector_store %arg16[%c12_55, %c0_56], %79 {strides = array<i32>} : memref<150x144xf32, #tpu.memory_space<vmem>>, vector<6x144xf32>,
    %81 = vector.extract_strided_slice %74 {offsets = [0, 3], sizes = [6, 144], strides = [1, 1]} : vector<6x196xf32> to vector<6x144xf32>
    %c18_57 = arith.constant 18 : index
    %c0_58 = arith.constant 0 : index
    %82 = vector.load %arg16[%c18_57, %c0_58] : memref<150x144xf32, #tpu.memory_space<vmem>>, vector<6x144xf32>
    tpu.vector_store %arg16[%c18_57, %c0_58], %81 {strides = array<i32>} : memref<150x144xf32, #tpu.memory_space<vmem>>, vector<6x144xf32>,
    %83 = vector.extract_strided_slice %74 {offsets = [0, 4], sizes = [6, 144], strides = [1, 1]} : vector<6x196xf32> to vector<6x144xf32>
    %c24_59 = arith.constant 24 : index
    %c0_60 = arith.constant 0 : index
    %84 = vector.load %arg16[%c24_59, %c0_60] : memref<150x144xf32, #tpu.memory_space<vmem>>, vector<6x144xf32>
    tpu.vector_store %arg16[%c24_59, %c0_60], %83 {strides = array<i32>} : memref<150x144xf32, #tpu.memory_space<vmem>>, vector<6x144xf32>,
    %85 = vector.extract_strided_slice %74 {offsets = [0, 12], sizes = [6, 144], strides = [1, 1]} : vector<6x196xf32> to vector<6x144xf32>
    %c30 = arith.constant 30 : index
    %c0_61 = arith.constant 0 : index
    %86 = vector.load %arg16[%c30, %c0_61] : memref<150x144xf32, #tpu.memory_space<vmem>>, vector<6x144xf32>
    tpu.vector_store %arg16[%c30, %c0_61], %85 {strides = array<i32>} : memref<150x144xf32, #tpu.memory_space<vmem>>, vector<6x144xf32>,
    %87 = vector.extract_strided_slice %74 {offsets = [0, 13], sizes = [6, 144], strides = [1, 1]} : vector<6x196xf32> to vector<6x144xf32>
    %c36 = arith.constant 36 : index
    %c0_62 = arith.constant 0 : index
    %88 = vector.load %arg16[%c36, %c0_62] : memref<150x144xf32, #tpu.memory_space<vmem>>, vector<6x144xf32>
    tpu.vector_store %arg16[%c36, %c0_62], %87 {strides = array<i32>} : memref<150x144xf32, #tpu.memory_space<vmem>>, vector<6x144xf32>,
    %89 = vector.extract_strided_slice %74 {offsets = [0, 14], sizes = [6, 144], strides = [1, 1]} : vector<6x196xf32> to vector<6x144xf32>
    %c42 = arith.constant 42 : index
    %c0_63 = arith.constant 0 : index
    %90 = vector.load %arg16[%c42, %c0_63] : memref<150x144xf32, #tpu.memory_space<vmem>>, vector<6x144xf32>
    tpu.vector_store %arg16[%c42, %c0_63], %89 {strides = array<i32>} : memref<150x144xf32, #tpu.memory_space<vmem>>, vector<6x144xf32>,
    %91 = vector.extract_strided_slice %74 {offsets = [0, 15], sizes = [6, 144], strides = [1, 1]} : vector<6x196xf32> to vector<6x144xf32>
    %c48 = arith.constant 48 : index
    %c0_64 = arith.constant 0 : index
    %92 = vector.load %arg16[%c48, %c0_64] : memref<150x144xf32, #tpu.memory_space<vmem>>, vector<6x144xf32>
    tpu.vector_store %arg16[%c48, %c0_64], %91 {strides = array<i32>} : memref<150x144xf32, #tpu.memory_space<vmem>>, vector<6x144xf32>,
    %93 = vector.extract_strided_slice %74 {offsets = [0, 16], sizes = [6, 144], strides = [1, 1]} : vector<6x196xf32> to vector<6x144xf32>
    %c54 = arith.constant 54 : index
    %c0_65 = arith.constant 0 : index
    %94 = vector.load %arg16[%c54, %c0_65] : memref<150x144xf32, #tpu.memory_space<vmem>>, vector<6x144xf32>
    tpu.vector_store %arg16[%c54, %c0_65], %93 {strides = array<i32>} : memref<150x144xf32, #tpu.memory_space<vmem>>, vector<6x144xf32>,
    %95 = vector.extract_strided_slice %74 {offsets = [0, 24], sizes = [6, 144], strides = [1, 1]} : vector<6x196xf32> to vector<6x144xf32>
    %c60 = arith.constant 60 : index
    %c0_66 = arith.constant 0 : index
    %96 = vector.load %arg16[%c60, %c0_66] : memref<150x144xf32, #tpu.memory_space<vmem>>, vector<6x144xf32>
    tpu.vector_store %arg16[%c60, %c0_66], %95 {strides = array<i32>} : memref<150x144xf32, #tpu.memory_space<vmem>>, vector<6x144xf32>,
    %97 = vector.extract_strided_slice %74 {offsets = [0, 25], sizes = [6, 144], strides = [1, 1]} : vector<6x196xf32> to vector<6x144xf32>
    %c66 = arith.constant 66 : index
    %c0_67 = arith.constant 0 : index
    %98 = vector.load %arg16[%c66, %c0_67] : memref<150x144xf32, #tpu.memory_space<vmem>>, vector<6x144xf32>
    tpu.vector_store %arg16[%c66, %c0_67], %97 {strides = array<i32>} : memref<150x144xf32, #tpu.memory_space<vmem>>, vector<6x144xf32>,
    %99 = vector.extract_strided_slice %74 {offsets = [0, 26], sizes = [6, 144], strides = [1, 1]} : vector<6x196xf32> to vector<6x144xf32>
    %c72 = arith.constant 72 : index
    %c0_68 = arith.constant 0 : index
    %100 = vector.load %arg16[%c72, %c0_68] : memref<150x144xf32, #tpu.memory_space<vmem>>, vector<6x144xf32>
    tpu.vector_store %arg16[%c72, %c0_68], %99 {strides = array<i32>} : memref<150x144xf32, #tpu.memory_space<vmem>>, vector<6x144xf32>,
    %101 = vector.extract_strided_slice %74 {offsets = [0, 27], sizes = [6, 144], strides = [1, 1]} : vector<6x196xf32> to vector<6x144xf32>
    %c78 = arith.constant 78 : index
    %c0_69 = arith.constant 0 : index
    %102 = vector.load %arg16[%c78, %c0_69] : memref<150x144xf32, #tpu.memory_space<vmem>>, vector<6x144xf32>
    tpu.vector_store %arg16[%c78, %c0_69], %101 {strides = array<i32>} : memref<150x144xf32, #tpu.memory_space<vmem>>, vector<6x144xf32>,
    %103 = vector.extract_strided_slice %74 {offsets = [0, 28], sizes = [6, 144], strides = [1, 1]} : vector<6x196xf32> to vector<6x144xf32>
    %c84 = arith.constant 84 : index
    %c0_70 = arith.constant 0 : index
    %104 = vector.load %arg16[%c84, %c0_70] : memref<150x144xf32, #tpu.memory_space<vmem>>, vector<6x144xf32>
    tpu.vector_store %arg16[%c84, %c0_70], %103 {strides = array<i32>} : memref<150x144xf32, #tpu.memory_space<vmem>>, vector<6x144xf32>,
    %105 = vector.extract_strided_slice %74 {offsets = [0, 36], sizes = [6, 144], strides = [1, 1]} : vector<6x196xf32> to vector<6x144xf32>
    %c90 = arith.constant 90 : index
    %c0_71 = arith.constant 0 : index
    %106 = vector.load %arg16[%c90, %c0_71] : memref<150x144xf32, #tpu.memory_space<vmem>>, vector<6x144xf32>
    tpu.vector_store %arg16[%c90, %c0_71], %105 {strides = array<i32>} : memref<150x144xf32, #tpu.memory_space<vmem>>, vector<6x144xf32>,
    %107 = vector.extract_strided_slice %74 {offsets = [0, 37], sizes = [6, 144], strides = [1, 1]} : vector<6x196xf32> to vector<6x144xf32>
    %c96 = arith.constant 96 : index
    %c0_72 = arith.constant 0 : index
    %108 = vector.load %arg16[%c96, %c0_72] : memref<150x144xf32, #tpu.memory_space<vmem>>, vector<6x144xf32>
    tpu.vector_store %arg16[%c96, %c0_72], %107 {strides = array<i32>} : memref<150x144xf32, #tpu.memory_space<vmem>>, vector<6x144xf32>,
    %109 = vector.extract_strided_slice %74 {offsets = [0, 38], sizes = [6, 144], strides = [1, 1]} : vector<6x196xf32> to vector<6x144xf32>
    %c102 = arith.constant 102 : index
    %c0_73 = arith.constant 0 : index
    %110 = vector.load %arg16[%c102, %c0_73] : memref<150x144xf32, #tpu.memory_space<vmem>>, vector<6x144xf32>
    tpu.vector_store %arg16[%c102, %c0_73], %109 {strides = array<i32>} : memref<150x144xf32, #tpu.memory_space<vmem>>, vector<6x144xf32>,
    %111 = vector.extract_strided_slice %74 {offsets = [0, 39], sizes = [6, 144], strides = [1, 1]} : vector<6x196xf32> to vector<6x144xf32>
    %c108 = arith.constant 108 : index
    %c0_74 = arith.constant 0 : index
    %112 = vector.load %arg16[%c108, %c0_74] : memref<150x144xf32, #tpu.memory_space<vmem>>, vector<6x144xf32>
    tpu.vector_store %arg16[%c108, %c0_74], %111 {strides = array<i32>} : memref<150x144xf32, #tpu.memory_space<vmem>>, vector<6x144xf32>,
    %113 = vector.extract_strided_slice %74 {offsets = [0, 40], sizes = [6, 144], strides = [1, 1]} : vector<6x196xf32> to vector<6x144xf32>
    %c114 = arith.constant 114 : index
    %c0_75 = arith.constant 0 : index
    %114 = vector.load %arg16[%c114, %c0_75] : memref<150x144xf32, #tpu.memory_space<vmem>>, vector<6x144xf32>
    tpu.vector_store %arg16[%c114, %c0_75], %113 {strides = array<i32>} : memref<150x144xf32, #tpu.memory_space<vmem>>, vector<6x144xf32>,
    %115 = vector.extract_strided_slice %74 {offsets = [0, 48], sizes = [6, 144], strides = [1, 1]} : vector<6x196xf32> to vector<6x144xf32>
    %c120 = arith.constant 120 : index
    %c0_76 = arith.constant 0 : index
    %116 = vector.load %arg16[%c120, %c0_76] : memref<150x144xf32, #tpu.memory_space<vmem>>, vector<6x144xf32>
    tpu.vector_store %arg16[%c120, %c0_76], %115 {strides = array<i32>} : memref<150x144xf32, #tpu.memory_space<vmem>>, vector<6x144xf32>,
    %117 = vector.extract_strided_slice %74 {offsets = [0, 49], sizes = [6, 144], strides = [1, 1]} : vector<6x196xf32> to vector<6x144xf32>
    %c126 = arith.constant 126 : index
    %c0_77 = arith.constant 0 : index
    %118 = vector.load %arg16[%c126, %c0_77] : memref<150x144xf32, #tpu.memory_space<vmem>>, vector<6x144xf32>
    tpu.vector_store %arg16[%c126, %c0_77], %117 {strides = array<i32>} : memref<150x144xf32, #tpu.memory_space<vmem>>, vector<6x144xf32>,
    %119 = vector.extract_strided_slice %74 {offsets = [0, 50], sizes = [6, 144], strides = [1, 1]} : vector<6x196xf32> to vector<6x144xf32>
    %c132 = arith.constant 132 : index
    %c0_78 = arith.constant 0 : index
    %120 = vector.load %arg16[%c132, %c0_78] : memref<150x144xf32, #tpu.memory_space<vmem>>, vector<6x144xf32>
    tpu.vector_store %arg16[%c132, %c0_78], %119 {strides = array<i32>} : memref<150x144xf32, #tpu.memory_space<vmem>>, vector<6x144xf32>,
    %121 = vector.extract_strided_slice %74 {offsets = [0, 51], sizes = [6, 144], strides = [1, 1]} : vector<6x196xf32> to vector<6x144xf32>
    %c138 = arith.constant 138 : index
    %c0_79 = arith.constant 0 : index
    %122 = vector.load %arg16[%c138, %c0_79] : memref<150x144xf32, #tpu.memory_space<vmem>>, vector<6x144xf32>
    tpu.vector_store %arg16[%c138, %c0_79], %121 {strides = array<i32>} : memref<150x144xf32, #tpu.memory_space<vmem>>, vector<6x144xf32>,
    %123 = vector.extract_strided_slice %74 {offsets = [0, 52], sizes = [6, 144], strides = [1, 1]} : vector<6x196xf32> to vector<6x144xf32>
    %c144 = arith.constant 144 : index
    %c0_80 = arith.constant 0 : index
    %124 = vector.load %arg16[%c144, %c0_80] : memref<150x144xf32, #tpu.memory_space<vmem>>, vector<6x144xf32>
    tpu.vector_store %arg16[%c144, %c0_80], %123 {strides = array<i32>} : memref<150x144xf32, #tpu.memory_space<vmem>>, vector<6x144xf32>,
    %c0_81 = arith.constant 0 : index
    %c0_82 = arith.constant 0 : index
    %125 = vector.load %arg5[%c0_81, %c0_82] : memref<16x150xf32, #tpu.memory_space<vmem>>, vector<16x150xf32>
    %c0_83 = arith.constant 0 : index
    %c0_84 = arith.constant 0 : index
    %126 = vector.load %arg16[%c0_83, %c0_84] : memref<150x144xf32, #tpu.memory_space<vmem>>, vector<150x144xf32>
    %cst_85 = arith.constant dense<0.000000e+00> : vector<16x144xf32>
    %127 = tpu.matmul %125, %126, %cst_85 {dimension_numbers = #tpu.dot_dimension_numbers<[1], [0], [0], [1], [0, 0, 1, 1], [], []>} : vector<16x150xf32>, vector<150x144xf32>, vector<16x144xf32> -> vector<16x144xf32>
    %c0_86 = arith.constant 0 : index
    %c0_87 = arith.constant 0 : index
    %128 = vector.load %arg6[%c0_86, %c0_87] : memref<16x1xf32, #tpu.memory_space<vmem>>, vector<16x1xf32>
    %129 = vector.broadcast %128 : vector<16x1xf32> to vector<16x144xf32>
    %130 = arith.addf %127, %129 : vector<16x144xf32>
    %cst_88 = arith.constant 0.000000e+00 : f32
    %131 = vector.broadcast %cst_88 : f32 to vector<16x144xf32>
    %132 = arith.maximumf %130, %131 : vector<16x144xf32>
    %c0_89 = arith.constant 0 : index
    %c0_90 = arith.constant 0 : index
    %c0_91 = arith.constant 0 : index
    %133 = vector.load %arg7[%c0_89, %c0_90, %c0_91] : memref<4x144x16xf32, #tpu.memory_space<vmem>>, vector<1x144x16xf32>
    %134 = vector.shape_cast %133 : vector<1x144x16xf32> to vector<144x16xf32>
    %cst_92 = arith.constant dense<0.000000e+00> : vector<16x16xf32>
    %135 = tpu.matmul %132, %134, %cst_92 {dimension_numbers = #tpu.dot_dimension_numbers<[1], [0], [0], [1], [0, 0, 1, 1], [], []>} : vector<16x144xf32>, vector<144x16xf32>, vector<16x16xf32> -> vector<16x16xf32>
    %c1_93 = arith.constant 1 : index
    %c0_94 = arith.constant 0 : index
    %c0_95 = arith.constant 0 : index
    %136 = vector.load %arg7[%c1_93, %c0_94, %c0_95] : memref<4x144x16xf32, #tpu.memory_space<vmem>>, vector<1x144x16xf32>
    %137 = vector.shape_cast %136 : vector<1x144x16xf32> to vector<144x16xf32>
    %cst_96 = arith.constant dense<0.000000e+00> : vector<16x16xf32>
    %138 = tpu.matmul %132, %137, %cst_96 {dimension_numbers = #tpu.dot_dimension_numbers<[1], [0], [0], [1], [0, 0, 1, 1], [], []>} : vector<16x144xf32>, vector<144x16xf32>, vector<16x16xf32> -> vector<16x16xf32>
    %139 = arith.maximumf %135, %138 : vector<16x16xf32>
    %c2_97 = arith.constant 2 : index
    %c0_98 = arith.constant 0 : index
    %c0_99 = arith.constant 0 : index
    %140 = vector.load %arg7[%c2_97, %c0_98, %c0_99] : memref<4x144x16xf32, #tpu.memory_space<vmem>>, vector<1x144x16xf32>
    %141 = vector.shape_cast %140 : vector<1x144x16xf32> to vector<144x16xf32>
    %cst_100 = arith.constant dense<0.000000e+00> : vector<16x16xf32>
    %142 = tpu.matmul %132, %141, %cst_100 {dimension_numbers = #tpu.dot_dimension_numbers<[1], [0], [0], [1], [0, 0, 1, 1], [], []>} : vector<16x144xf32>, vector<144x16xf32>, vector<16x16xf32> -> vector<16x16xf32>
    %c3_101 = arith.constant 3 : index
    %c0_102 = arith.constant 0 : index
    %c0_103 = arith.constant 0 : index
    %143 = vector.load %arg7[%c3_101, %c0_102, %c0_103] : memref<4x144x16xf32, #tpu.memory_space<vmem>>, vector<1x144x16xf32>
    %144 = vector.shape_cast %143 : vector<1x144x16xf32> to vector<144x16xf32>
    %cst_104 = arith.constant dense<0.000000e+00> : vector<16x16xf32>
    %145 = tpu.matmul %132, %144, %cst_104 {dimension_numbers = #tpu.dot_dimension_numbers<[1], [0], [0], [1], [0, 0, 1, 1], [], []>} : vector<16x144xf32>, vector<144x16xf32>, vector<16x16xf32> -> vector<16x16xf32>
    %146 = arith.maximumf %142, %145 : vector<16x16xf32>
    %147 = arith.maximumf %139, %146 : vector<16x16xf32>
    %c0_105 = arith.constant 0 : index
    %c0_106 = arith.constant 0 : index
    %148 = vector.load %arg9[%c0_105, %c0_106] : memref<1x120xf32, #tpu.memory_space<vmem>>, vector<1x120xf32>
    %149 = vector.extract_strided_slice %147 {offsets = [0, 0], sizes = [1, 16], strides = [1, 1]} : vector<16x16xf32> to vector<1x16xf32>
    %c0_107 = arith.constant 0 : index
    %c0_108 = arith.constant 0 : index
    %150 = vector.load %arg8[%c0_107, %c0_108] : memref<256x120xf32, #tpu.memory_space<vmem>>, vector<16x120xf32>
    %cst_109 = arith.constant dense<0.000000e+00> : vector<1x120xf32>
    %151 = tpu.matmul %149, %150, %cst_109 {dimension_numbers = #tpu.dot_dimension_numbers<[1], [0], [0], [1], [0, 0, 1, 1], [], []>} : vector<1x16xf32>, vector<16x120xf32>, vector<1x120xf32> -> vector<1x120xf32>
    %152 = arith.addf %148, %151 : vector<1x120xf32>
    %153 = vector.extract_strided_slice %147 {offsets = [1, 0], sizes = [1, 16], strides = [1, 1]} : vector<16x16xf32> to vector<1x16xf32>
    %c16_110 = arith.constant 16 : index
    %c0_111 = arith.constant 0 : index
    %154 = vector.load %arg8[%c16_110, %c0_111] : memref<256x120xf32, #tpu.memory_space<vmem>>, vector<16x120xf32>
    %cst_112 = arith.constant dense<0.000000e+00> : vector<1x120xf32>
    %155 = tpu.matmul %153, %154, %cst_112 {dimension_numbers = #tpu.dot_dimension_numbers<[1], [0], [0], [1], [0, 0, 1, 1], [], []>} : vector<1x16xf32>, vector<16x120xf32>, vector<1x120xf32> -> vector<1x120xf32>
    %156 = arith.addf %152, %155 : vector<1x120xf32>
    %157 = vector.extract_strided_slice %147 {offsets = [2, 0], sizes = [1, 16], strides = [1, 1]} : vector<16x16xf32> to vector<1x16xf32>
    %c32 = arith.constant 32 : index
    %c0_113 = arith.constant 0 : index
    %158 = vector.load %arg8[%c32, %c0_113] : memref<256x120xf32, #tpu.memory_space<vmem>>, vector<16x120xf32>
    %cst_114 = arith.constant dense<0.000000e+00> : vector<1x120xf32>
    %159 = tpu.matmul %157, %158, %cst_114 {dimension_numbers = #tpu.dot_dimension_numbers<[1], [0], [0], [1], [0, 0, 1, 1], [], []>} : vector<1x16xf32>, vector<16x120xf32>, vector<1x120xf32> -> vector<1x120xf32>
    %160 = arith.addf %156, %159 : vector<1x120xf32>
    %161 = vector.extract_strided_slice %147 {offsets = [3, 0], sizes = [1, 16], strides = [1, 1]} : vector<16x16xf32> to vector<1x16xf32>
    %c48_115 = arith.constant 48 : index
    %c0_116 = arith.constant 0 : index
    %162 = vector.load %arg8[%c48_115, %c0_116] : memref<256x120xf32, #tpu.memory_space<vmem>>, vector<16x120xf32>
    %cst_117 = arith.constant dense<0.000000e+00> : vector<1x120xf32>
    %163 = tpu.matmul %161, %162, %cst_117 {dimension_numbers = #tpu.dot_dimension_numbers<[1], [0], [0], [1], [0, 0, 1, 1], [], []>} : vector<1x16xf32>, vector<16x120xf32>, vector<1x120xf32> -> vector<1x120xf32>
    %164 = arith.addf %160, %163 : vector<1x120xf32>
    %165 = vector.extract_strided_slice %147 {offsets = [4, 0], sizes = [1, 16], strides = [1, 1]} : vector<16x16xf32> to vector<1x16xf32>
    %c64 = arith.constant 64 : index
    %c0_118 = arith.constant 0 : index
    %166 = vector.load %arg8[%c64, %c0_118] : memref<256x120xf32, #tpu.memory_space<vmem>>, vector<16x120xf32>
    %cst_119 = arith.constant dense<0.000000e+00> : vector<1x120xf32>
    %167 = tpu.matmul %165, %166, %cst_119 {dimension_numbers = #tpu.dot_dimension_numbers<[1], [0], [0], [1], [0, 0, 1, 1], [], []>} : vector<1x16xf32>, vector<16x120xf32>, vector<1x120xf32> -> vector<1x120xf32>
    %168 = arith.addf %164, %167 : vector<1x120xf32>
    %169 = vector.extract_strided_slice %147 {offsets = [5, 0], sizes = [1, 16], strides = [1, 1]} : vector<16x16xf32> to vector<1x16xf32>
    %c80 = arith.constant 80 : index
    %c0_120 = arith.constant 0 : index
    %170 = vector.load %arg8[%c80, %c0_120] : memref<256x120xf32, #tpu.memory_space<vmem>>, vector<16x120xf32>
    %cst_121 = arith.constant dense<0.000000e+00> : vector<1x120xf32>
    %171 = tpu.matmul %169, %170, %cst_121 {dimension_numbers = #tpu.dot_dimension_numbers<[1], [0], [0], [1], [0, 0, 1, 1], [], []>} : vector<1x16xf32>, vector<16x120xf32>, vector<1x120xf32> -> vector<1x120xf32>
    %172 = arith.addf %168, %171 : vector<1x120xf32>
    %173 = vector.extract_strided_slice %147 {offsets = [6, 0], sizes = [1, 16], strides = [1, 1]} : vector<16x16xf32> to vector<1x16xf32>
    %c96_122 = arith.constant 96 : index
    %c0_123 = arith.constant 0 : index
    %174 = vector.load %arg8[%c96_122, %c0_123] : memref<256x120xf32, #tpu.memory_space<vmem>>, vector<16x120xf32>
    %cst_124 = arith.constant dense<0.000000e+00> : vector<1x120xf32>
    %175 = tpu.matmul %173, %174, %cst_124 {dimension_numbers = #tpu.dot_dimension_numbers<[1], [0], [0], [1], [0, 0, 1, 1], [], []>} : vector<1x16xf32>, vector<16x120xf32>, vector<1x120xf32> -> vector<1x120xf32>
    %176 = arith.addf %172, %175 : vector<1x120xf32>
    %177 = vector.extract_strided_slice %147 {offsets = [7, 0], sizes = [1, 16], strides = [1, 1]} : vector<16x16xf32> to vector<1x16xf32>
    %c112 = arith.constant 112 : index
    %c0_125 = arith.constant 0 : index
    %178 = vector.load %arg8[%c112, %c0_125] : memref<256x120xf32, #tpu.memory_space<vmem>>, vector<16x120xf32>
    %cst_126 = arith.constant dense<0.000000e+00> : vector<1x120xf32>
    %179 = tpu.matmul %177, %178, %cst_126 {dimension_numbers = #tpu.dot_dimension_numbers<[1], [0], [0], [1], [0, 0, 1, 1], [], []>} : vector<1x16xf32>, vector<16x120xf32>, vector<1x120xf32> -> vector<1x120xf32>
    %180 = arith.addf %176, %179 : vector<1x120xf32>
    %181 = vector.extract_strided_slice %147 {offsets = [8, 0], sizes = [1, 16], strides = [1, 1]} : vector<16x16xf32> to vector<1x16xf32>
    %c128 = arith.constant 128 : index
    %c0_127 = arith.constant 0 : index
    %182 = vector.load %arg8[%c128, %c0_127] : memref<256x120xf32, #tpu.memory_space<vmem>>, vector<16x120xf32>
    %cst_128 = arith.constant dense<0.000000e+00> : vector<1x120xf32>
    %183 = tpu.matmul %181, %182, %cst_128 {dimension_numbers = #tpu.dot_dimension_numbers<[1], [0], [0], [1], [0, 0, 1, 1], [], []>} : vector<1x16xf32>, vector<16x120xf32>, vector<1x120xf32> -> vector<1x120xf32>
    %184 = arith.addf %180, %183 : vector<1x120xf32>
    %185 = vector.extract_strided_slice %147 {offsets = [9, 0], sizes = [1, 16], strides = [1, 1]} : vector<16x16xf32> to vector<1x16xf32>
    %c144_129 = arith.constant 144 : index
    %c0_130 = arith.constant 0 : index
    %186 = vector.load %arg8[%c144_129, %c0_130] : memref<256x120xf32, #tpu.memory_space<vmem>>, vector<16x120xf32>
    %cst_131 = arith.constant dense<0.000000e+00> : vector<1x120xf32>
    %187 = tpu.matmul %185, %186, %cst_131 {dimension_numbers = #tpu.dot_dimension_numbers<[1], [0], [0], [1], [0, 0, 1, 1], [], []>} : vector<1x16xf32>, vector<16x120xf32>, vector<1x120xf32> -> vector<1x120xf32>
    %188 = arith.addf %184, %187 : vector<1x120xf32>
    %189 = vector.extract_strided_slice %147 {offsets = [10, 0], sizes = [1, 16], strides = [1, 1]} : vector<16x16xf32> to vector<1x16xf32>
    %c160 = arith.constant 160 : index
    %c0_132 = arith.constant 0 : index
    %190 = vector.load %arg8[%c160, %c0_132] : memref<256x120xf32, #tpu.memory_space<vmem>>, vector<16x120xf32>
    %cst_133 = arith.constant dense<0.000000e+00> : vector<1x120xf32>
    %191 = tpu.matmul %189, %190, %cst_133 {dimension_numbers = #tpu.dot_dimension_numbers<[1], [0], [0], [1], [0, 0, 1, 1], [], []>} : vector<1x16xf32>, vector<16x120xf32>, vector<1x120xf32> -> vector<1x120xf32>
    %192 = arith.addf %188, %191 : vector<1x120xf32>
    %193 = vector.extract_strided_slice %147 {offsets = [11, 0], sizes = [1, 16], strides = [1, 1]} : vector<16x16xf32> to vector<1x16xf32>
    %c176 = arith.constant 176 : index
    %c0_134 = arith.constant 0 : index
    %194 = vector.load %arg8[%c176, %c0_134] : memref<256x120xf32, #tpu.memory_space<vmem>>, vector<16x120xf32>
    %cst_135 = arith.constant dense<0.000000e+00> : vector<1x120xf32>
    %195 = tpu.matmul %193, %194, %cst_135 {dimension_numbers = #tpu.dot_dimension_numbers<[1], [0], [0], [1], [0, 0, 1, 1], [], []>} : vector<1x16xf32>, vector<16x120xf32>, vector<1x120xf32> -> vector<1x120xf32>
    %196 = arith.addf %192, %195 : vector<1x120xf32>
    %197 = vector.extract_strided_slice %147 {offsets = [12, 0], sizes = [1, 16], strides = [1, 1]} : vector<16x16xf32> to vector<1x16xf32>
    %c192 = arith.constant 192 : index
    %c0_136 = arith.constant 0 : index
    %198 = vector.load %arg8[%c192, %c0_136] : memref<256x120xf32, #tpu.memory_space<vmem>>, vector<16x120xf32>
    %cst_137 = arith.constant dense<0.000000e+00> : vector<1x120xf32>
    %199 = tpu.matmul %197, %198, %cst_137 {dimension_numbers = #tpu.dot_dimension_numbers<[1], [0], [0], [1], [0, 0, 1, 1], [], []>} : vector<1x16xf32>, vector<16x120xf32>, vector<1x120xf32> -> vector<1x120xf32>
    %200 = arith.addf %196, %199 : vector<1x120xf32>
    %201 = vector.extract_strided_slice %147 {offsets = [13, 0], sizes = [1, 16], strides = [1, 1]} : vector<16x16xf32> to vector<1x16xf32>
    %c208 = arith.constant 208 : index
    %c0_138 = arith.constant 0 : index
    %202 = vector.load %arg8[%c208, %c0_138] : memref<256x120xf32, #tpu.memory_space<vmem>>, vector<16x120xf32>
    %cst_139 = arith.constant dense<0.000000e+00> : vector<1x120xf32>
    %203 = tpu.matmul %201, %202, %cst_139 {dimension_numbers = #tpu.dot_dimension_numbers<[1], [0], [0], [1], [0, 0, 1, 1], [], []>} : vector<1x16xf32>, vector<16x120xf32>, vector<1x120xf32> -> vector<1x120xf32>
    %204 = arith.addf %200, %203 : vector<1x120xf32>
    %205 = vector.extract_strided_slice %147 {offsets = [14, 0], sizes = [1, 16], strides = [1, 1]} : vector<16x16xf32> to vector<1x16xf32>
    %c224 = arith.constant 224 : index
    %c0_140 = arith.constant 0 : index
    %206 = vector.load %arg8[%c224, %c0_140] : memref<256x120xf32, #tpu.memory_space<vmem>>, vector<16x120xf32>
    %cst_141 = arith.constant dense<0.000000e+00> : vector<1x120xf32>
    %207 = tpu.matmul %205, %206, %cst_141 {dimension_numbers = #tpu.dot_dimension_numbers<[1], [0], [0], [1], [0, 0, 1, 1], [], []>} : vector<1x16xf32>, vector<16x120xf32>, vector<1x120xf32> -> vector<1x120xf32>
    %208 = arith.addf %204, %207 : vector<1x120xf32>
    %209 = vector.extract_strided_slice %147 {offsets = [15, 0], sizes = [1, 16], strides = [1, 1]} : vector<16x16xf32> to vector<1x16xf32>
    %c240 = arith.constant 240 : index
    %c0_142 = arith.constant 0 : index
    %210 = vector.load %arg8[%c240, %c0_142] : memref<256x120xf32, #tpu.memory_space<vmem>>, vector<16x120xf32>
    %cst_143 = arith.constant dense<0.000000e+00> : vector<1x120xf32>
    %211 = tpu.matmul %209, %210, %cst_143 {dimension_numbers = #tpu.dot_dimension_numbers<[1], [0], [0], [1], [0, 0, 1, 1], [], []>} : vector<1x16xf32>, vector<16x120xf32>, vector<1x120xf32> -> vector<1x120xf32>
    %212 = arith.addf %208, %211 : vector<1x120xf32>
    %cst_144 = arith.constant 0.000000e+00 : f32
    %213 = vector.broadcast %cst_144 : f32 to vector<1x120xf32>
    %214 = arith.maximumf %212, %213 : vector<1x120xf32>
    %c0_145 = arith.constant 0 : index
    %c0_146 = arith.constant 0 : index
    %215 = vector.load %arg10[%c0_145, %c0_146] : memref<120x84xf32, #tpu.memory_space<vmem>>, vector<120x84xf32>
    %cst_147 = arith.constant dense<0.000000e+00> : vector<1x84xf32>
    %216 = tpu.matmul %214, %215, %cst_147 {dimension_numbers = #tpu.dot_dimension_numbers<[1], [0], [0], [1], [0, 0, 1, 1], [], []>} : vector<1x120xf32>, vector<120x84xf32>, vector<1x84xf32> -> vector<1x84xf32>
    %c0_148 = arith.constant 0 : index
    %c0_149 = arith.constant 0 : index
    %217 = vector.load %arg11[%c0_148, %c0_149] : memref<1x84xf32, #tpu.memory_space<vmem>>, vector<1x84xf32>
    %218 = arith.addf %216, %217 : vector<1x84xf32>
    %cst_150 = arith.constant 0.000000e+00 : f32
    %219 = vector.broadcast %cst_150 : f32 to vector<1x84xf32>
    %220 = arith.maximumf %218, %219 : vector<1x84xf32>
    %c0_151 = arith.constant 0 : index
    %c0_152 = arith.constant 0 : index
    %221 = vector.load %arg12[%c0_151, %c0_152] : memref<84x10xf32, #tpu.memory_space<vmem>>, vector<84x10xf32>
    %cst_153 = arith.constant dense<0.000000e+00> : vector<1x10xf32>
    %222 = tpu.matmul %220, %221, %cst_153 {dimension_numbers = #tpu.dot_dimension_numbers<[1], [0], [0], [1], [0, 0, 1, 1], [], []>} : vector<1x84xf32>, vector<84x10xf32>, vector<1x10xf32> -> vector<1x10xf32>
    %c0_154 = arith.constant 0 : index
    %c0_155 = arith.constant 0 : index
    %223 = vector.load %arg13[%c0_154, %c0_155] : memref<1x10xf32, #tpu.memory_space<vmem>>, vector<1x10xf32>
    %224 = arith.addf %222, %223 : vector<1x10xf32>
    %cst_156 = arith.constant 0.000000e+00 : f32
    %225 = vector.broadcast %cst_156 : f32 to vector<1x10xf32>
    %226 = arith.maximumf %224, %225 : vector<1x10xf32>
    %c0_157 = arith.constant 0 : index
    %c0_158 = arith.constant 0 : index
    %c0_159 = arith.constant 0 : index
    %227 = vector.load %arg14[%c0_157, %c0_158, %c0_159] : memref<1x1x10xf32, #tpu.memory_space<vmem>>, vector<1x1x10xf32>
    %228 = vector.shape_cast %227 : vector<1x1x10xf32> to vector<1x10xf32>
    %229 = vector.shape_cast %226 : vector<1x10xf32> to vector<1x1x10xf32>
    tpu.vector_store %arg14[%c0_157, %c0_158, %c0_159], %229 {strides = array<i32>} : memref<1x1x10xf32, #tpu.memory_space<vmem>>, vector<1x1x10xf32>,
    return
  }
  func.func @transform_0(%arg0: i32) -> (i32, i32, i32) {
    %c0_i32 = arith.constant 0 : i32
    %c0_i32_0 = arith.constant 0 : i32
    %c0_i32_1 = arith.constant 0 : i32
    return %arg0, %c0_i32, %c0_i32_0 : i32, i32, i32
  }
  func.func @transform_1(%arg0: i32) -> (i32, i32) {
    %c0_i32 = arith.constant 0 : i32
    %c0_i32_0 = arith.constant 0 : i32
    %c0_i32_1 = arith.constant 0 : i32
    return %c0_i32, %c0_i32_0 : i32, i32
  }
  func.func @transform_2(%arg0: i32) -> (i32, i32) {
    %c0_i32 = arith.constant 0 : i32
    %c0_i32_0 = arith.constant 0 : i32
    %c0_i32_1 = arith.constant 0 : i32
    return %c0_i32, %c0_i32_0 : i32, i32
  }
  func.func @transform_3(%arg0: i32) -> (i32, i32, i32) {
    %c0_i32 = arith.constant 0 : i32
    %c0_i32_0 = arith.constant 0 : i32
    %c0_i32_1 = arith.constant 0 : i32
    %c0_i32_2 = arith.constant 0 : i32
    return %c0_i32, %c0_i32_0, %c0_i32_1 : i32, i32, i32
  }
  func.func @transform_4(%arg0: i32) -> (i32, i32) {
    %c0_i32 = arith.constant 0 : i32
    %c0_i32_0 = arith.constant 0 : i32
    %c0_i32_1 = arith.constant 0 : i32
    return %c0_i32, %c0_i32_0 : i32, i32
  }
  func.func @transform_5(%arg0: i32) -> (i32, i32) {
    %c0_i32 = arith.constant 0 : i32
    %c0_i32_0 = arith.constant 0 : i32
    %c0_i32_1 = arith.constant 0 : i32
    return %c0_i32, %c0_i32_0 : i32, i32
  }
  func.func @transform_6(%arg0: i32) -> (i32, i32, i32) {
    %c0_i32 = arith.constant 0 : i32
    %c0_i32_0 = arith.constant 0 : i32
    %c0_i32_1 = arith.constant 0 : i32
    %c0_i32_2 = arith.constant 0 : i32
    return %c0_i32, %c0_i32_0, %c0_i32_1 : i32, i32, i32
  }
  func.func @transform_7(%arg0: i32) -> (i32, i32) {
    %c0_i32 = arith.constant 0 : i32
    %c0_i32_0 = arith.constant 0 : i32
    %c0_i32_1 = arith.constant 0 : i32
    return %c0_i32, %c0_i32_0 : i32, i32
  }
  func.func @transform_8(%arg0: i32) -> (i32, i32) {
    %c0_i32 = arith.constant 0 : i32
    %c0_i32_0 = arith.constant 0 : i32
    %c0_i32_1 = arith.constant 0 : i32
    return %c0_i32, %c0_i32_0 : i32, i32
  }
  func.func @transform_9(%arg0: i32) -> (i32, i32) {
    %c0_i32 = arith.constant 0 : i32
    %c0_i32_0 = arith.constant 0 : i32
    %c0_i32_1 = arith.constant 0 : i32
    return %c0_i32, %c0_i32_0 : i32, i32
  }
  func.func @transform_10(%arg0: i32) -> (i32, i32) {
    %c0_i32 = arith.constant 0 : i32
    %c0_i32_0 = arith.constant 0 : i32
    %c0_i32_1 = arith.constant 0 : i32
    return %c0_i32, %c0_i32_0 : i32, i32
  }
  func.func @transform_11(%arg0: i32) -> (i32, i32) {
    %c0_i32 = arith.constant 0 : i32
    %c0_i32_0 = arith.constant 0 : i32
    %c0_i32_1 = arith.constant 0 : i32
    return %c0_i32, %c0_i32_0 : i32, i32
  }
  func.func @transform_12(%arg0: i32) -> (i32, i32) {
    %c0_i32 = arith.constant 0 : i32
    %c0_i32_0 = arith.constant 0 : i32
    %c0_i32_1 = arith.constant 0 : i32
    return %c0_i32, %c0_i32_0 : i32, i32
  }
  func.func @transform_13(%arg0: i32) -> (i32, i32, i32) {
    %c0_i32 = arith.constant 0 : i32
    %c0_i32_0 = arith.constant 0 : i32
    %c0_i32_1 = arith.constant 0 : i32
    return %arg0, %c0_i32, %c0_i32_0 : i32, i32, i32
  }
}

</mosaic_0001>

<llo_original>
// kernel: forward.1
$region0: #{forward.1}
  #allocation0 [shape = 'u32[]', space=smem, size = 0x4, offset = 0x4, fixed_abs, tag = 'smem constant byte address 0x4 - core index']
  #allocation1 [shape = 'u32[72,128]{1,0:T(1,128)}', space=vmem, size = 0x9000, scoped, tag = 'internal scratch']
  #allocation2 [shape = 'f32[25,784]{1,0:T(8,128)}', space=vmem, size = 0x1c000, scoped, tag = 'scratch operand']
  #allocation3 [shape = 'f32[150,144]{1,0:T(8,128)}', space=vmem, size = 0x26000, scoped, tag = 'scratch operand']
  %s0 = inlined_call_operand.vmem [shape: f32[2,1,900], index: 0, kind: input, shape index: {}]
  %s1 = inlined_call_operand.vmem [shape: f32[6,25], index: 1, kind: input, shape index: {}]
  %s2 = inlined_call_operand.vmem [shape: f32[6,1], index: 2, kind: input, shape index: {}]
  %s3 = inlined_call_operand.vmem [shape: f32[4,784,196], index: 3, kind: input, shape index: {}]
  %s4 = inlined_call_operand.vmem [shape: f32[16,150], index: 4, kind: input, shape index: {}]
  %s5 = inlined_call_operand.vmem [shape: f32[16,1], index: 5, kind: input, shape index: {}]
  %s6 = inlined_call_operand.vmem [shape: f32[4,144,16], index: 6, kind: input, shape index: {}]
  %s7 = inlined_call_operand.vmem [shape: f32[256,120], index: 7, kind: input, shape index: {}]
  %s8 = inlined_call_operand.vmem [shape: f32[1,120], index: 8, kind: input, shape index: {}]
  %s9 = inlined_call_operand.vmem [shape: f32[120,84], index: 9, kind: input, shape index: {}]
  %s10 = inlined_call_operand.vmem [shape: f32[1,84], index: 10, kind: input, shape index: {}]
  %s11 = inlined_call_operand.vmem [shape: f32[84,10], index: 11, kind: input, shape index: {}]
  %s12 = inlined_call_operand.vmem [shape: f32[1,10], index: 12, kind: input, shape index: {}]
  %s13 = inlined_call_operand.hbm [shape: f32[2,1,10], index: 13, kind: output, shape index: {}]
  %s14 = sld [smem:[#allocation0]]
  $region85: #{forward.1} parent=0
    _
  %s16 = ssub.s32 1, %s14
  %s17 = scalar_select 0, %s16, %s14
  $region1: #{forward.1} parent=0
    #allocation4 [shape = 'u8[1024]{0}', space=vmem, size = 0x400, scoped, tag = 'output window, operand 0']
    #allocation5 [shape = 's32[2]{0}', space=sflag, size = 0x8, scoped, tag = 'scoped memory for forward.1']
    %18 = vsyncpa [#allocation5], 0
    %s19 = scalar_lea.sflag [#allocation5], 1
    %20 = vsyncpa %s19, 0
    loop: start=0, step=1, limit=4
    $region2: #{forward.1} parent=1 // loop_pre_header
      _
    $region3: #{forward.1} parent=1 // loop_header
      %s22 = sphi 0, %s26
      %p23 = scmp.ge.s32.totalorder %s22, 4
      %s32 = sphi 0, %s34
      %s35 = sphi 0, %s32
      %s36 = sphi 0, %s35
      %s52 = sphi 0, %s36
      %s56 = sphi 0, %s56
      %s58 = sphi 0, %s56
      %s59 = sphi 0, %s58
      %s73 = sphi 0, %s59
      %s77 = sphi 0, %s77
      %s79 = sphi 0, %s77
      %s80 = sphi 0, %s79
      %s94 = sphi 0, %s80
      %s98 = sphi 0, %s98
      %s100 = sphi 0, %s98
      %s101 = sphi 0, %s100
      %s115 = sphi 0, %s101
      %s119 = sphi 0, %s119
      %s121 = sphi 0, %s119
      %s122 = sphi 0, %s121
      %s136 = sphi 0, %s122
      %s140 = sphi 0, %s140
      %s142 = sphi 0, %s140
      %s143 = sphi 0, %s142
      %s157 = sphi 0, %s143
      %s161 = sphi 0, %s161
      %s163 = sphi 0, %s161
      %s164 = sphi 0, %s163
      %s178 = sphi 0, %s164
      %s182 = sphi 0, %s182
      %s184 = sphi 0, %s182
      %s185 = sphi 0, %s184
      %s199 = sphi 0, %s185
      %s203 = sphi 0, %s203
      %s205 = sphi 0, %s203
      %s206 = sphi 0, %s205
      %s220 = sphi 0, %s206
      %s224 = sphi 0, %s224
      %s226 = sphi 0, %s224
      %s227 = sphi 0, %s226
      %s241 = sphi 0, %s227
      %s245 = sphi 0, %s245
      %s247 = sphi 0, %s245
      %s248 = sphi 0, %s247
      %s262 = sphi 0, %s248
      %s266 = sphi 0, %s266
      %s268 = sphi 0, %s266
      %s269 = sphi 0, %s268
      %s283 = sphi 0, %s269
      %s287 = sphi 0, %s287
      %s289 = sphi 0, %s287
      %s290 = sphi 0, %s289
      %s304 = sphi 0, %s290
      %s310 = sphi 0, %s312
      %s313 = sphi 0, %s310
      %s314 = sphi 0, %s313
      %s330 = sphi 0, %s314
    $region4: #{forward.1} parent=1 // loop_header_branch
      %25 = sbr.rel (%p23) target = $region8
    $region5: #{forward.1} parent=1 // loop_body
      %s27 = ssub.s32 %s22, 1
      %s28 = ssub.s32 %s22, 2
      %s29 = sadd.s32 %s22, 1
      %s30 = ssub.s32 %s22, %s29
      %p31 = scmp.eq.s32.totalorder %s30, 0
      %s33 = sadd.s32 %s32, 1
      %s34 = scalar_select %p31, %s32, %s33
      %p37 = pneg %p31
      %p38 = scmp.eq.s32.totalorder %s22, 1
      %p39 = por %p37, %p38
      %p40 = scmp.ne.s32.totalorder %s32, %s35
      %p41 = scmp.eq.s32.totalorder %s22, 0
      %p42 = por %p40, %p41
      %p43 = scmp.ne.s32.totalorder %s32, %s35
      %p44 = scmp.eq.s32.totalorder %s27, 1
      %p45 = por %p43, %p44
      %p46 = scmp.ne.s32.totalorder %s35, %s36
      %p47 = scmp.eq.s32.totalorder %s27, 0
      %p48 = por %p46, %p47
      %p49 = scmp.ne.s32.totalorder %s35, %s36
      %p50 = scmp.eq.s32.totalorder %s28, 1
      %p51 = por %p49, %p50
      %p53 = scmp.ne.s32.totalorder %s36, %s52
      %p54 = scmp.eq.s32.totalorder %s28, 0
      %p55 = por %p53, %p54
      %s57 = sadd.s32 %s56, 1
      %p60 = scmp.eq.s32.totalorder %s22, 1
      %p61 = scmp.ne.s32.totalorder %s56, %s58
      %p62 = scmp.eq.s32.totalorder %s22, 0
      %p63 = por %p61, %p62
      %p64 = scmp.ne.s32.totalorder %s56, %s58
      %p65 = scmp.eq.s32.totalorder %s27, 1
      %p66 = por %p64, %p65
      %p67 = scmp.ne.s32.totalorder %s58, %s59
      %p68 = scmp.eq.s32.totalorder %s27, 0
      %p69 = por %p67, %p68
      %p70 = scmp.ne.s32.totalorder %s58, %s59
      %p71 = scmp.eq.s32.totalorder %s28, 1
      %p72 = por %p70, %p71
      %p74 = scmp.ne.s32.totalorder %s59, %s73
      %p75 = scmp.eq.s32.totalorder %s28, 0
      %p76 = por %p74, %p75
      %s78 = sadd.s32 %s77, 1
      %p81 = scmp.eq.s32.totalorder %s22, 1
      %p82 = scmp.ne.s32.totalorder %s77, %s79
      %p83 = scmp.eq.s32.totalorder %s22, 0
      %p84 = por %p82, %p83
      %p85 = scmp.ne.s32.totalorder %s77, %s79
      %p86 = scmp.eq.s32.totalorder %s27, 1
      %p87 = por %p85, %p86
      %p88 = scmp.ne.s32.totalorder %s79, %s80
      %p89 = scmp.eq.s32.totalorder %s27, 0
      %p90 = por %p88, %p89
      %p91 = scmp.ne.s32.totalorder %s79, %s80
      %p92 = scmp.eq.s32.totalorder %s28, 1
      %p93 = por %p91, %p92
      %p95 = scmp.ne.s32.totalorder %s80, %s94
      %p96 = scmp.eq.s32.totalorder %s28, 0
      %p97 = por %p95, %p96
      %s99 = sadd.s32 %s98, 1
      %p102 = scmp.eq.s32.totalorder %s22, 1
      %p103 = scmp.ne.s32.totalorder %s98, %s100
      %p104 = scmp.eq.s32.totalorder %s22, 0
      %p105 = por %p103, %p104
      %p106 = scmp.ne.s32.totalorder %s98, %s100
      %p107 = scmp.eq.s32.totalorder %s27, 1
      %p108 = por %p106, %p107
      %p109 = scmp.ne.s32.totalorder %s100, %s101
      %p110 = scmp.eq.s32.totalorder %s27, 0
      %p111 = por %p109, %p110
      %p112 = scmp.ne.s32.totalorder %s100, %s101
      %p113 = scmp.eq.s32.totalorder %s28, 1
      %p114 = por %p112, %p113
      %p116 = scmp.ne.s32.totalorder %s101, %s115
      %p117 = scmp.eq.s32.totalorder %s28, 0
      %p118 = por %p116, %p117
      %s120 = sadd.s32 %s119, 1
      %p123 = scmp.eq.s32.totalorder %s22, 1
      %p124 = scmp.ne.s32.totalorder %s119, %s121
      %p125 = scmp.eq.s32.totalorder %s22, 0
      %p126 = por %p124, %p125
      %p127 = scmp.ne.s32.totalorder %s119, %s121
      %p128 = scmp.eq.s32.totalorder %s27, 1
      %p129 = por %p127, %p128
      %p130 = scmp.ne.s32.totalorder %s121, %s122
      %p131 = scmp.eq.s32.totalorder %s27, 0
      %p132 = por %p130, %p131
      %p133 = scmp.ne.s32.totalorder %s121, %s122
      %p134 = scmp.eq.s32.totalorder %s28, 1
      %p135 = por %p133, %p134
      %p137 = scmp.ne.s32.totalorder %s122, %s136
      %p138 = scmp.eq.s32.totalorder %s28, 0
      %p139 = por %p137, %p138
      %s141 = sadd.s32 %s140, 1
      %p144 = scmp.eq.s32.totalorder %s22, 1
      %p145 = scmp.ne.s32.totalorder %s140, %s142
      %p146 = scmp.eq.s32.totalorder %s22, 0
      %p147 = por %p145, %p146
      %p148 = scmp.ne.s32.totalorder %s140, %s142
      %p149 = scmp.eq.s32.totalorder %s27, 1
      %p150 = por %p148, %p149
      %p151 = scmp.ne.s32.totalorder %s142, %s143
      %p152 = scmp.eq.s32.totalorder %s27, 0
      %p153 = por %p151, %p152
      %p154 = scmp.ne.s32.totalorder %s142, %s143
      %p155 = scmp.eq.s32.totalorder %s28, 1
      %p156 = por %p154, %p155
      %p158 = scmp.ne.s32.totalorder %s143, %s157
      %p159 = scmp.eq.s32.totalorder %s28, 0
      %p160 = por %p158, %p159
      %s162 = sadd.s32 %s161, 1
      %p165 = scmp.eq.s32.totalorder %s22, 1
      %p166 = scmp.ne.s32.totalorder %s161, %s163
      %p167 = scmp.eq.s32.totalorder %s22, 0
      %p168 = por %p166, %p167
      %p169 = scmp.ne.s32.totalorder %s161, %s163
      %p170 = scmp.eq.s32.totalorder %s27, 1
      %p171 = por %p169, %p170
      %p172 = scmp.ne.s32.totalorder %s163, %s164
      %p173 = scmp.eq.s32.totalorder %s27, 0
      %p174 = por %p172, %p173
      %p175 = scmp.ne.s32.totalorder %s163, %s164
      %p176 = scmp.eq.s32.totalorder %s28, 1
      %p177 = por %p175, %p176
      %p179 = scmp.ne.s32.totalorder %s164, %s178
      %p180 = scmp.eq.s32.totalorder %s28, 0
      %p181 = por %p179, %p180
      %s183 = sadd.s32 %s182, 1
      %p186 = scmp.eq.s32.totalorder %s22, 1
      %p187 = scmp.ne.s32.totalorder %s182, %s184
      %p188 = scmp.eq.s32.totalorder %s22, 0
      %p189 = por %p187, %p188
      %p190 = scmp.ne.s32.totalorder %s182, %s184
      %p191 = scmp.eq.s32.totalorder %s27, 1
      %p192 = por %p190, %p191
      %p193 = scmp.ne.s32.totalorder %s184, %s185
      %p194 = scmp.eq.s32.totalorder %s27, 0
      %p195 = por %p193, %p194
      %p196 = scmp.ne.s32.totalorder %s184, %s185
      %p197 = scmp.eq.s32.totalorder %s28, 1
      %p198 = por %p196, %p197
      %p200 = scmp.ne.s32.totalorder %s185, %s199
      %p201 = scmp.eq.s32.totalorder %s28, 0
      %p202 = por %p200, %p201
      %s204 = sadd.s32 %s203, 1
      %p207 = scmp.eq.s32.totalorder %s22, 1
      %p208 = scmp.ne.s32.totalorder %s203, %s205
      %p209 = scmp.eq.s32.totalorder %s22, 0
      %p210 = por %p208, %p209
      %p211 = scmp.ne.s32.totalorder %s203, %s205
      %p212 = scmp.eq.s32.totalorder %s27, 1
      %p213 = por %p211, %p212
      %p214 = scmp.ne.s32.totalorder %s205, %s206
      %p215 = scmp.eq.s32.totalorder %s27, 0
      %p216 = por %p214, %p215
      %p217 = scmp.ne.s32.totalorder %s205, %s206
      %p218 = scmp.eq.s32.totalorder %s28, 1
      %p219 = por %p217, %p218
      %p221 = scmp.ne.s32.totalorder %s206, %s220
      %p222 = scmp.eq.s32.totalorder %s28, 0
      %p223 = por %p221, %p222
      %s225 = sadd.s32 %s224, 1
      %p228 = scmp.eq.s32.totalorder %s22, 1
      %p229 = scmp.ne.s32.totalorder %s224, %s226
      %p230 = scmp.eq.s32.totalorder %s22, 0
      %p231 = por %p229, %p230
      %p232 = scmp.ne.s32.totalorder %s224, %s226
      %p233 = scmp.eq.s32.totalorder %s27, 1
      %p234 = por %p232, %p233
      %p235 = scmp.ne.s32.totalorder %s226, %s227
      %p236 = scmp.eq.s32.totalorder %s27, 0
      %p237 = por %p235, %p236
      %p238 = scmp.ne.s32.totalorder %s226, %s227
      %p239 = scmp.eq.s32.totalorder %s28, 1
      %p240 = por %p238, %p239
      %p242 = scmp.ne.s32.totalorder %s227, %s241
      %p243 = scmp.eq.s32.totalorder %s28, 0
      %p244 = por %p242, %p243
      %s246 = sadd.s32 %s245, 1
      %p249 = scmp.eq.s32.totalorder %s22, 1
      %p250 = scmp.ne.s32.totalorder %s245, %s247
      %p251 = scmp.eq.s32.totalorder %s22, 0
      %p252 = por %p250, %p251
      %p253 = scmp.ne.s32.totalorder %s245, %s247
      %p254 = scmp.eq.s32.totalorder %s27, 1
      %p255 = por %p253, %p254
      %p256 = scmp.ne.s32.totalorder %s247, %s248
      %p257 = scmp.eq.s32.totalorder %s27, 0
      %p258 = por %p256, %p257
      %p259 = scmp.ne.s32.totalorder %s247, %s248
      %p260 = scmp.eq.s32.totalorder %s28, 1
      %p261 = por %p259, %p260
      %p263 = scmp.ne.s32.totalorder %s248, %s262
      %p264 = scmp.eq.s32.totalorder %s28, 0
      %p265 = por %p263, %p264
      %s267 = sadd.s32 %s266, 1
      %p270 = scmp.eq.s32.totalorder %s22, 1
      %p271 = scmp.ne.s32.totalorder %s266, %s268
      %p272 = scmp.eq.s32.totalorder %s22, 0
      %p273 = por %p271, %p272
      %p274 = scmp.ne.s32.totalorder %s266, %s268
      %p275 = scmp.eq.s32.totalorder %s27, 1
      %p276 = por %p274, %p275
      %p277 = scmp.ne.s32.totalorder %s268, %s269
      %p278 = scmp.eq.s32.totalorder %s27, 0
      %p279 = por %p277, %p278
      %p280 = scmp.ne.s32.totalorder %s268, %s269
      %p281 = scmp.eq.s32.totalorder %s28, 1
      %p282 = por %p280, %p281
      %p284 = scmp.ne.s32.totalorder %s269, %s283
      %p285 = scmp.eq.s32.totalorder %s28, 0
      %p286 = por %p284, %p285
      %s288 = sadd.s32 %s287, 1
      %p291 = scmp.eq.s32.totalorder %s22, 1
      %p292 = scmp.ne.s32.totalorder %s287, %s289
      %p293 = scmp.eq.s32.totalorder %s22, 0
      %p294 = por %p292, %p293
      %p295 = scmp.ne.s32.totalorder %s287, %s289
      %p296 = scmp.eq.s32.totalorder %s27, 1
      %p297 = por %p295, %p296
      %p298 = scmp.ne.s32.totalorder %s289, %s290
      %p299 = scmp.eq.s32.totalorder %s27, 0
      %p300 = por %p298, %p299
      %p301 = scmp.ne.s32.totalorder %s289, %s290
      %p302 = scmp.eq.s32.totalorder %s28, 1
      %p303 = por %p301, %p302
      %p305 = scmp.ne.s32.totalorder %s290, %s304
      %p306 = scmp.eq.s32.totalorder %s28, 0
      %p307 = por %p305, %p306
      %s308 = ssub.s32 %s22, %s29
      %p309 = scmp.eq.s32.totalorder %s308, 0
      %s311 = sadd.s32 %s310, 1
      %s312 = scalar_select %p309, %s310, %s311
      %p315 = pneg %p309
      %p316 = scmp.eq.s32.totalorder %s22, 1
      %p317 = por %p315, %p316
      %p318 = scmp.ne.s32.totalorder %s310, %s313
      %p319 = scmp.eq.s32.totalorder %s22, 0
      %p320 = por %p318, %p319
      %p321 = scmp.ne.s32.totalorder %s310, %s313
      %p322 = scmp.eq.s32.totalorder %s27, 1
      %p323 = por %p321, %p322
      %p324 = scmp.ne.s32.totalorder %s313, %s314
      %p325 = scmp.eq.s32.totalorder %s27, 0
      %p326 = por %p324, %p325
      %p327 = scmp.ne.s32.totalorder %s313, %s314
      %p328 = scmp.eq.s32.totalorder %s28, 1
      %p329 = por %p327, %p328
      %p331 = scmp.ne.s32.totalorder %s314, %s330
      %p332 = scmp.eq.s32.totalorder %s28, 0
      %p333 = por %p331, %p332
      %p334 = scmp.le.s32.totalorder 1, %s22
      %p335 = scmp.lt.s32.totalorder %s22, 3
      %p336 = pnand %p334, %p335
      %p337 = pneg %p336
      // Predicated region
      $region9: #{forward.1} parent=5 // pred_check
        _
      $region10: #{forward.1} parent=5 // pred_check_branch
        %339 = sbr.rel (%p336) target = $region12
      $region11: #{forward.1} parent=5 // pred_region
        %s340 = ssub.s32 %s22, 1
        // Predicated region
        $region13: #{forward.1} parent=11 // pred_check
          %p341 = pneg %p69
        $region14: #{forward.1} parent=11 // pred_check_branch
          %343 = sbr.rel (%p341) target = $region16
        $region15: #{forward.1} parent=11 // pred_region
          _
        $region16: #{forward.1} parent=11 // pred_fallthru
          _
        // Predicated region
        $region17: #{forward.1} parent=11 // pred_check
          %p344 = pneg %p90
        $region18: #{forward.1} parent=11 // pred_check_branch
          %346 = sbr.rel (%p344) target = $region20
        $region19: #{forward.1} parent=11 // pred_region
          _
        $region20: #{forward.1} parent=11 // pred_fallthru
          _
        // Predicated region
        $region21: #{forward.1} parent=11 // pred_check
          %p347 = pneg %p111
        $region22: #{forward.1} parent=11 // pred_check_branch
          %349 = sbr.rel (%p347) target = $region24
        $region23: #{forward.1} parent=11 // pred_region
          _
        $region24: #{forward.1} parent=11 // pred_fallthru
          _
        // Predicated region
        $region25: #{forward.1} parent=11 // pred_check
          %p350 = pneg %p132
        $region26: #{forward.1} parent=11 // pred_check_branch
          %352 = sbr.rel (%p350) target = $region28
        $region27: #{forward.1} parent=11 // pred_region
          _
        $region28: #{forward.1} parent=11 // pred_fallthru
          _
        // Predicated region
        $region29: #{forward.1} parent=11 // pred_check
          %p353 = pneg %p153
        $region30: #{forward.1} parent=11 // pred_check_branch
          %355 = sbr.rel (%p353) target = $region32
        $region31: #{forward.1} parent=11 // pred_region
          _
        $region32: #{forward.1} parent=11 // pred_fallthru
          _
        // Predicated region
        $region33: #{forward.1} parent=11 // pred_check
          %p356 = pneg %p174
        $region34: #{forward.1} parent=11 // pred_check_branch
          %358 = sbr.rel (%p356) target = $region36
        $region35: #{forward.1} parent=11 // pred_region
          _
        $region36: #{forward.1} parent=11 // pred_fallthru
          _
        // Predicated region
        $region37: #{forward.1} parent=11 // pred_check
          %p359 = pneg %p195
        $region38: #{forward.1} parent=11 // pred_check_branch
          %361 = sbr.rel (%p359) target = $region40
        $region39: #{forward.1} parent=11 // pred_region
          _
        $region40: #{forward.1} parent=11 // pred_fallthru
          _
        // Predicated region
        $region41: #{forward.1} parent=11 // pred_check
          %p362 = pneg %p216
        $region42: #{forward.1} parent=11 // pred_check_branch
          %364 = sbr.rel (%p362) target = $region44
        $region43: #{forward.1} parent=11 // pred_region
          _
        $region44: #{forward.1} parent=11 // pred_fallthru
          _
        // Predicated region
        $region45: #{forward.1} parent=11 // pred_check
          %p365 = pneg %p237
        $region46: #{forward.1} parent=11 // pred_check_branch
          %367 = sbr.rel (%p365) target = $region48
        $region47: #{forward.1} parent=11 // pred_region
          _
        $region48: #{forward.1} parent=11 // pred_fallthru
          _
        // Predicated region
        $region49: #{forward.1} parent=11 // pred_check
          %p368 = pneg %p258
        $region50: #{forward.1} parent=11 // pred_check_branch
          %370 = sbr.rel (%p368) target = $region52
        $region51: #{forward.1} parent=11 // pred_region
          _
        $region52: #{forward.1} parent=11 // pred_fallthru
          _
        // Predicated region
        $region53: #{forward.1} parent=11 // pred_check
          %p371 = pneg %p279
        $region54: #{forward.1} parent=11 // pred_check_branch
          %373 = sbr.rel (%p371) target = $region56
        $region55: #{forward.1} parent=11 // pred_region
          _
        $region56: #{forward.1} parent=11 // pred_fallthru
          _
        // Predicated region
        $region57: #{forward.1} parent=11 // pred_check
          %p374 = pneg %p300
        $region58: #{forward.1} parent=11 // pred_check_branch
          %376 = sbr.rel (%p374) target = $region60
        $region59: #{forward.1} parent=11 // pred_region
          _
        $region60: #{forward.1} parent=11 // pred_fallthru
          _
      $region12: #{forward.1} parent=5 // pred_fallthru
        _
      %p377 = scmp.lt.s32.totalorder %s22, 2
      // Predicated region
      $region61: #{forward.1} parent=5 // pred_check
        %p378 = pneg %p377
      $region62: #{forward.1} parent=5 // pred_check_branch
        %380 = sbr.rel (%p378) target = $region64
      $region63: #{forward.1} parent=5 // pred_region
        // Predicated region
        $region65: #{forward.1} parent=63 // pred_check
          %p381 = pneg %p42
        $region66: #{forward.1} parent=63 // pred_check_branch
          %383 = sbr.rel (%p381) target = $region68
        $region67: #{forward.1} parent=63 // pred_region
          %p384 = scmp.lt.s32.totalorder %s22, 1
          %s385 = scalar_select %p384, %s22, 1
          %s386 = smul.addr %s385, 8
          %s387 = scalar_lea.vmem %s0, %s386
        $region68: #{forward.1} parent=63 // pred_fallthru
          _
      $region64: #{forward.1} parent=5 // pred_fallthru
        _
      %p388 = scmp.le.s32.totalorder 1, %s22
      %p389 = scmp.lt.s32.totalorder %s22, 3
      %p390 = pnand %p388, %p389
      %p391 = pneg %p390
      // Predicated region
      $region69: #{forward.1} parent=5 // pred_check
        _
      $region70: #{forward.1} parent=5 // pred_check_branch
        %393 = sbr.rel (%p390) target = $region72
      $region71: #{forward.1} parent=5 // pred_region
        %s394 = ssub.s32 %s22, 1
        %p395 = scmp.lt.s32.totalorder %s27, 1
        %s396 = scalar_select %p395, %s27, 1
        %s397 = smul.addr %s396, 8
        %s398 = scalar_lea.vmem %s0, %s397
        %p399 = pneg %p48
        %p400 = pneg %p45
        %p401 = pneg %p69
        %p402 = pneg %p66
        %p403 = pneg %p90
        %p404 = pneg %p87
        %p405 = pneg %p111
        %p406 = pneg %p108
        %p407 = pneg %p132
        %p408 = pneg %p129
        %p409 = pneg %p153
        %p410 = pneg %p150
        %p411 = pneg %p174
        %p412 = pneg %p171
        %p413 = pneg %p195
        %p414 = pneg %p192
        %p415 = pneg %p216
        %p416 = pneg %p213
        %p417 = pneg %p237
        %p418 = pneg %p234
        %p419 = pneg %p258
        %p420 = pneg %p255
        %p421 = pneg %p279
        %p422 = pneg %p276
        %p423 = pneg %p300
        %p424 = pneg %p297
        %p425 = pneg %p326
        %p426 = pneg %p323
        %s427 = sand.u32 %s313, 1
        %s428 = scalar_lea.sflag [#allocation5], %s427
        %s429 = sand.u32 %s313, 1
        %s430 = scalar_lea.vmem [#allocation4], %s429
        %p431 = scmp.lt.s32.totalorder %s27, 1
        %s432 = scalar_select %p431, %s27, 1
        %s433 = smul.addr %s432, 8
        %s434 = scalar_lea.vmem %s0, %s433
        %v435 = vld [vmem:[%s434] sm:$0xff]
        %v436 = vlaneseq
        %vm437 = vcmp.ge.s32.totalorder %v436, 0
        %vm438 = vcmp.lt.s32.totalorder %v436, 784
        %vm439 = vmand %vm437, %vm438
        %440 = vst.msk [vmem:[#allocation2] ss:$8 sm:$0xf] %vm439, %v435
        %441 = vst.msk [vmem:[#allocation2] ss:$8 sm:$0x70] %vm439, %v435
        %443 = vrot.lane.b32.xlu0 %v435, 127
        %v444 = vpop.permute.xlu0 %443
        %v445 = vrot.slane %v444, 1
        %vm446 = vcmask 1039360
        %v447 = vsel %vm446, %v444, %v445
        %s449 = scalar_lea.vmem [#allocation2], 1
        %450 = vst.msk [vmem:[%s449] ss:$8 sm:$0xf] %vm439, %v447
        %451 = vst.msk [vmem:[%s449] ss:$8 sm:$0x70] %vm439, %v447
        %452 = vrot.lane.b32.xlu0 %v435, 126
        %v453 = vpop.permute.xlu0 %452
        %v454 = vrot.slane %v453, 1
        %vm455 = vcmask 1031168
        %v456 = vsel %vm455, %v453, %v454
        %s458 = scalar_lea.vmem [#allocation2], 2
        %459 = vst.msk [vmem:[%s458] ss:$8 sm:$0xf] %vm439, %v456
        %460 = vst.msk [vmem:[%s458] ss:$8 sm:$0x70] %vm439, %v456
        %461 = vrot.lane.b32.xlu0 %v435, 125
        %v462 = vpop.permute.xlu0 %461
        %v463 = vrot.slane %v462, 1
        %vm464 = vcmask 1022976
        %v465 = vsel %vm464, %v462, %v463
        %s467 = scalar_lea.vmem [#allocation2], 3
        %468 = vst.msk [vmem:[%s467] ss:$8 sm:$0xf] %vm439, %v465
        %469 = vst.msk [vmem:[%s467] ss:$8 sm:$0x70] %vm439, %v465
        %470 = vrot.lane.b32.xlu0 %v435, 124
        %v471 = vpop.permute.xlu0 %470
        %v472 = vrot.slane %v471, 1
        %vm473 = vcmask 1014784
        %v474 = vsel %vm473, %v471, %v472
        %s476 = scalar_lea.vmem [#allocation2], 4
        %477 = vst.msk [vmem:[%s476] ss:$8 sm:$0xf] %vm439, %v474
        %478 = vst.msk [vmem:[%s476] ss:$8 sm:$0x70] %vm439, %v474
        %479 = vrot.lane.b32.xlu0 %v435, 100
        %v480 = vpop.permute.xlu0 %479
        %v481 = vrot.slane %v480, 1
        %vm482 = vcmask 818176
        %v483 = vsel %vm482, %v480, %v481
        %s485 = scalar_lea.vmem [#allocation2], 5
        %486 = vst.msk [vmem:[%s485] ss:$8 sm:$0xf] %vm439, %v483
        %487 = vst.msk [vmem:[%s485] ss:$8 sm:$0x70] %vm439, %v483
        %488 = vrot.lane.b32.xlu0 %v435, 99
        %v489 = vpop.permute.xlu0 %488
        %v490 = vrot.slane %v489, 1
        %vm491 = vcmask 809984
        %v492 = vsel %vm491, %v489, %v490
        %s494 = scalar_lea.vmem [#allocation2], 6
        %495 = vst.msk [vmem:[%s494] ss:$8 sm:$0xf] %vm439, %v492
        %496 = vst.msk [vmem:[%s494] ss:$8 sm:$0x70] %vm439, %v492
        %497 = vrot.lane.b32.xlu0 %v435, 98
        %v498 = vpop.permute.xlu0 %497
        %v499 = vrot.slane %v498, 1
        %vm500 = vcmask 801792
        %v501 = vsel %vm500, %v498, %v499
        %s503 = scalar_lea.vmem [#allocation2], 7
        %504 = vst.msk [vmem:[%s503] ss:$8 sm:$0xf] %vm439, %v501
        %505 = vst.msk [vmem:[%s503] ss:$8 sm:$0x70] %vm439, %v501
        %506 = vrot.lane.b32.xlu0 %v435, 97
        %v507 = vpop.permute.xlu0 %506
        %v508 = vrot.slane %v507, 1
        %vm509 = vcmask 793600
        %v510 = vsel %vm509, %v507, %v508
        %s512 = scalar_lea.vmem [#allocation2], 56
        %513 = vst.msk [vmem:[%s512] ss:$8 sm:$0xf] %vm439, %v510
        %514 = vst.msk [vmem:[%s512] ss:$8 sm:$0x70] %vm439, %v510
        %515 = vrot.lane.b32.xlu0 %v435, 96
        %v516 = vpop.permute.xlu0 %515
        %v517 = vrot.slane %v516, 1
        %vm518 = vcmask 785408
        %v519 = vsel %vm518, %v516, %v517
        %s521 = scalar_lea.vmem [#allocation2], 57
        %522 = vst.msk [vmem:[%s521] ss:$8 sm:$0xf] %vm439, %v519
        %523 = vst.msk [vmem:[%s521] ss:$8 sm:$0x70] %vm439, %v519
        %524 = vrot.lane.b32.xlu0 %v435, 72
        %v525 = vpop.permute.xlu0 %524
        %v526 = vrot.slane %v525, 1
        %vm527 = vcmask 588800
        %v528 = vsel %vm527, %v525, %v526
        %s530 = scalar_lea.vmem [#allocation2], 58
        %531 = vst.msk [vmem:[%s530] ss:$8 sm:$0xf] %vm439, %v528
        %532 = vst.msk [vmem:[%s530] ss:$8 sm:$0x70] %vm439, %v528
        %533 = vrot.lane.b32.xlu0 %v435, 71
        %v534 = vpop.permute.xlu0 %533
        %v535 = vrot.slane %v534, 1
        %vm536 = vcmask 580608
        %v537 = vsel %vm536, %v534, %v535
        %s539 = scalar_lea.vmem [#allocation2], 59
        %540 = vst.msk [vmem:[%s539] ss:$8 sm:$0xf] %vm439, %v537
        %541 = vst.msk [vmem:[%s539] ss:$8 sm:$0x70] %vm439, %v537
        %542 = vrot.lane.b32.xlu0 %v435, 70
        %v543 = vpop.permute.xlu0 %542
        %v544 = vrot.slane %v543, 1
        %vm545 = vcmask 572416
        %v546 = vsel %vm545, %v543, %v544
        %s548 = scalar_lea.vmem [#allocation2], 60
        %549 = vst.msk [vmem:[%s548] ss:$8 sm:$0xf] %vm439, %v546
        %550 = vst.msk [vmem:[%s548] ss:$8 sm:$0x70] %vm439, %v546
        %551 = vrot.lane.b32.xlu0 %v435, 69
        %v552 = vpop.permute.xlu0 %551
        %v553 = vrot.slane %v552, 1
        %vm554 = vcmask 564224
        %v555 = vsel %vm554, %v552, %v553
        %s557 = scalar_lea.vmem [#allocation2], 61
        %558 = vst.msk [vmem:[%s557] ss:$8 sm:$0xf] %vm439, %v555
        %559 = vst.msk [vmem:[%s557] ss:$8 sm:$0x70] %vm439, %v555
        %560 = vrot.lane.b32.xlu0 %v435, 68
        %v561 = vpop.permute.xlu0 %560
        %v562 = vrot.slane %v561, 1
        %vm563 = vcmask 556032
        %v564 = vsel %vm563, %v561, %v562
        %s566 = scalar_lea.vmem [#allocation2], 62
        %567 = vst.msk [vmem:[%s566] ss:$8 sm:$0xf] %vm439, %v564
        %568 = vst.msk [vmem:[%s566] ss:$8 sm:$0x70] %vm439, %v564
        %569 = vrot.lane.b32.xlu0 %v435, 44
        %v570 = vpop.permute.xlu0 %569
        %v571 = vrot.slane %v570, 1
        %vm572 = vcmask 359424
        %v573 = vsel %vm572, %v570, %v571
        %s575 = scalar_lea.vmem [#allocation2], 63
        %576 = vst.msk [vmem:[%s575] ss:$8 sm:$0xf] %vm439, %v573
        %577 = vst.msk [vmem:[%s575] ss:$8 sm:$0x70] %vm439, %v573
        %578 = vrot.lane.b32.xlu0 %v435, 43
        %v579 = vpop.permute.xlu0 %578
        %v580 = vrot.slane %v579, 1
        %vm581 = vcmask 351232
        %v582 = vsel %vm581, %v579, %v580
        %s584 = scalar_lea.vmem [#allocation2], 112
        %585 = vst.msk [vmem:[%s584] ss:$8 sm:$0xf] %vm439, %v582
        %586 = vst.msk [vmem:[%s584] ss:$8 sm:$0x70] %vm439, %v582
        %587 = vrot.lane.b32.xlu0 %v435, 42
        %v588 = vpop.permute.xlu0 %587
        %v589 = vrot.slane %v588, 1
        %vm590 = vcmask 343040
        %v591 = vsel %vm590, %v588, %v589
        %s593 = scalar_lea.vmem [#allocation2], 113
        %594 = vst.msk [vmem:[%s593] ss:$8 sm:$0xf] %vm439, %v591
        %595 = vst.msk [vmem:[%s593] ss:$8 sm:$0x70] %vm439, %v591
        %596 = vrot.lane.b32.xlu0 %v435, 41
        %v597 = vpop.permute.xlu0 %596
        %v598 = vrot.slane %v597, 1
        %vm599 = vcmask 334848
        %v600 = vsel %vm599, %v597, %v598
        %s602 = scalar_lea.vmem [#allocation2], 114
        %603 = vst.msk [vmem:[%s602] ss:$8 sm:$0xf] %vm439, %v600
        %604 = vst.msk [vmem:[%s602] ss:$8 sm:$0x70] %vm439, %v600
        %605 = vrot.lane.b32.xlu0 %v435, 40
        %v606 = vpop.permute.xlu0 %605
        %v607 = vrot.slane %v606, 1
        %vm608 = vcmask 326656
        %v609 = vsel %vm608, %v606, %v607
        %s611 = scalar_lea.vmem [#allocation2], 115
        %612 = vst.msk [vmem:[%s611] ss:$8 sm:$0xf] %vm439, %v609
        %613 = vst.msk [vmem:[%s611] ss:$8 sm:$0x70] %vm439, %v609
        %614 = vrot.lane.b32.xlu0 %v435, 16
        %v615 = vpop.permute.xlu0 %614
        %v616 = vrot.slane %v615, 1
        %vm617 = vcmask 130048
        %v618 = vsel %vm617, %v615, %v616
        %s620 = scalar_lea.vmem [#allocation2], 116
        %621 = vst.msk [vmem:[%s620] ss:$8 sm:$0xf] %vm439, %v618
        %622 = vst.msk [vmem:[%s620] ss:$8 sm:$0x70] %vm439, %v618
        %623 = vrot.lane.b32.xlu0 %v435, 15
        %v624 = vpop.permute.xlu0 %623
        %v625 = vrot.slane %v624, 1
        %vm626 = vcmask 121856
        %v627 = vsel %vm626, %v624, %v625
        %s629 = scalar_lea.vmem [#allocation2], 117
        %630 = vst.msk [vmem:[%s629] ss:$8 sm:$0xf] %vm439, %v627
        %631 = vst.msk [vmem:[%s629] ss:$8 sm:$0x70] %vm439, %v627
        %632 = vrot.lane.b32.xlu0 %v435, 14
        %v633 = vpop.permute.xlu0 %632
        %v634 = vrot.slane %v633, 1
        %vm635 = vcmask 113664
        %v636 = vsel %vm635, %v633, %v634
        %s638 = scalar_lea.vmem [#allocation2], 118
        %639 = vst.msk [vmem:[%s638] ss:$8 sm:$0xf] %vm439, %v636
        %640 = vst.msk [vmem:[%s638] ss:$8 sm:$0x70] %vm439, %v636
        %641 = vrot.lane.b32.xlu0 %v435, 13
        %v642 = vpop.permute.xlu0 %641
        %v643 = vrot.slane %v642, 1
        %vm644 = vcmask 105472
        %v645 = vsel %vm644, %v642, %v643
        %s647 = scalar_lea.vmem [#allocation2], 119
        %648 = vst.msk [vmem:[%s647] ss:$8 sm:$0xf] %vm439, %v645
        %649 = vst.msk [vmem:[%s647] ss:$8 sm:$0x70] %vm439, %v645
        %650 = vrot.lane.b32.xlu0 %v435, 12
        %v651 = vpop.permute.xlu0 %650
        %v652 = vrot.slane %v651, 1
        %vm653 = vcmask 97280
        %v654 = vsel %vm653, %v651, %v652
        %s656 = scalar_lea.vmem [#allocation2], 168
        %657 = vst.msk [vmem:[%s656] ss:$8 sm:$0xf] %vm439, %v654
        %658 = vst.msk [vmem:[%s656] ss:$8 sm:$0x70] %vm439, %v654
        %v659 = vld [vmem:[%s1] sm:$0x3f]
        %v660 = vld [vmem:[#allocation2] sm:$0xff]
        %v661 = vld [vmem:[#allocation2 + $0x8] sm:$0xff]
        %v662 = vld [vmem:[#allocation2 + $0x10] sm:$0xff]
        %v663 = vld [vmem:[#allocation2 + $0x18] sm:$0xff]
        %v664 = vld [vmem:[#allocation2 + $0x20] sm:$0xff]
        %v665 = vld [vmem:[#allocation2 + $0x28] sm:$0xff]
        %v666 = vld [vmem:[#allocation2 + $0x30] sm:$0xff]
        %v667 = vld [vmem:[#allocation2 + $0x38] sm:$0xff]
        %v668 = vld [vmem:[#allocation2 + $0x40] sm:$0xff]
        %v669 = vld [vmem:[#allocation2 + $0x48] sm:$0xff]
        %v670 = vld [vmem:[#allocation2 + $0x50] sm:$0xff]
        %v671 = vld [vmem:[#allocation2 + $0x58] sm:$0xff]
        %v672 = vld [vmem:[#allocation2 + $0x60] sm:$0xff]
        %v673 = vld [vmem:[#allocation2 + $0x68] sm:$0xff]
        %v674 = vld [vmem:[#allocation2 + $0x70] sm:$0xff]
        %v675 = vld [vmem:[#allocation2 + $0x78] sm:$0xff]
        %v676 = vld [vmem:[#allocation2 + $0x80] sm:$0xff]
        %v677 = vld [vmem:[#allocation2 + $0x88] sm:$0xff]
        %v678 = vld [vmem:[#allocation2 + $0x90] sm:$0xff]
        %v679 = vld [vmem:[#allocation2 + $0x98] sm:$0xff]
        %v680 = vld [vmem:[#allocation2 + $0xa0] sm:$0xff]
        %v681 = vld [vmem:[#allocation2 + $0xa8] sm:$0x1]
        %v682 = vld [vmem:[#allocation2 + $0xb0] sm:$0x1]
        %v683 = vld [vmem:[#allocation2 + $0xb8] sm:$0x1]
        %v684 = vld [vmem:[#allocation2 + $0xc0] sm:$0x1]
        %v685 = vld [vmem:[#allocation2 + $0xc8] sm:$0x1]
        %v686 = vld [vmem:[#allocation2 + $0xd0] sm:$0x1]
        %v687 = vld [vmem:[#allocation2 + $0xd8] sm:$0x1]
        %v688 = vld [vmem:[%s2] sm:$0x3f]
        %690 = vset.pattern.permute.xlu0 0
        %691 = vperm.xlu0 %690, %v688
        %v692 = vpop.permute.xlu0 %691
        %vm694 = vcmask 203776
        %v696 = vsel %vm694, %v659, 0
        %vm698 = vcmask 1040384
        %v700 = vsel %vm698, %v681, 0
        %v703 = vsel %vm698, %v682, 0
        %v706 = vsel %vm698, %v683, 0
        %v709 = vsel %vm698, %v684, 0
        %v712 = vsel %vm698, %v685, 0
        %v715 = vsel %vm698, %v686, 0
        %v718 = vsel %vm698, %v687, 0
        %720 = vmatpush.msra.mxu0 0.0
        %721 = vmatpush.msra.mxu0 0.0
        %722 = vmatpush.msra.mxu0 0.0
        %723 = vmatpush.msra.mxu0 0.0
        %724 = vmatpush.msra.mxu0 0.0
        %725 = vmatpush.msra.mxu0 0.0
        %726 = vmatpush.msra.mxu0 0.0
        %727 = vmatpush.msra.mxu0 0.0
        %728 = vmatpush.msra.mxu0 0.0
        %729 = vmatpush.msra.mxu0 0.0
        %730 = vmatpush.msra.mxu0 0.0
        %731 = vmatpush.msra.mxu0 0.0
        %732 = vmatpush.msra.mxu0 %v700
        %733 = vmatpush.msra.mxu0 %v674
        %734 = vmatpush.msra.mxu0 %v667
        %735 = vmatpush.msra.mxu0 %v660
        %736 = vmatmul.f32.gmra.mxu0 %v696
        %v737 = vpop.f32.mrf.mxu0
        %v738 = vadd.f32 %v692, %v737
        %739 = vdwg.mxu0
        %740 = vmatpush.msra.mxu0 0.0
        %741 = vmatpush.msra.mxu0 0.0
        %742 = vmatpush.msra.mxu0 0.0
        %743 = vmatpush.msra.mxu0 0.0
        %744 = vmatpush.msra.mxu0 0.0
        %745 = vmatpush.msra.mxu0 0.0
        %746 = vmatpush.msra.mxu0 0.0
        %747 = vmatpush.msra.mxu0 0.0
        %748 = vmatpush.msra.mxu0 0.0
        %749 = vmatpush.msra.mxu0 0.0
        %750 = vmatpush.msra.mxu0 0.0
        %751 = vmatpush.msra.mxu0 0.0
        %752 = vmatpush.msra.mxu0 %v703
        %753 = vmatpush.msra.mxu0 %v675
        %754 = vmatpush.msra.mxu0 %v668
        %755 = vmatpush.msra.mxu0 %v661
        %756 = vmatmul.f32.gmra.mxu0 %v696
        %v757 = vpop.f32.mrf.mxu0
        %v758 = vadd.f32 %v692, %v757
        %759 = vdwg.mxu0
        %760 = vmatpush.msra.mxu0 0.0
        %761 = vmatpush.msra.mxu0 0.0
        %762 = vmatpush.msra.mxu0 0.0
        %763 = vmatpush.msra.mxu0 0.0
        %764 = vmatpush.msra.mxu0 0.0
        %765 = vmatpush.msra.mxu0 0.0
        %766 = vmatpush.msra.mxu0 0.0
        %767 = vmatpush.msra.mxu0 0.0
        %768 = vmatpush.msra.mxu0 0.0
        %769 = vmatpush.msra.mxu0 0.0
        %770 = vmatpush.msra.mxu0 0.0
        %771 = vmatpush.msra.mxu0 0.0
        %772 = vmatpush.msra.mxu0 %v706
        %773 = vmatpush.msra.mxu0 %v676
        %774 = vmatpush.msra.mxu0 %v669
        %775 = vmatpush.msra.mxu0 %v662
        %776 = vmatmul.f32.gmra.mxu0 %v696
        %v777 = vpop.f32.mrf.mxu0
        %v778 = vadd.f32 %v692, %v777
        %779 = vdwg.mxu0
        %780 = vmatpush.msra.mxu0 0.0
        %781 = vmatpush.msra.mxu0 0.0
        %782 = vmatpush.msra.mxu0 0.0
        %783 = vmatpush.msra.mxu0 0.0
        %784 = vmatpush.msra.mxu0 0.0
        %785 = vmatpush.msra.mxu0 0.0
        %786 = vmatpush.msra.mxu0 0.0
        %787 = vmatpush.msra.mxu0 0.0
        %788 = vmatpush.msra.mxu0 0.0
        %789 = vmatpush.msra.mxu0 0.0
        %790 = vmatpush.msra.mxu0 0.0
        %791 = vmatpush.msra.mxu0 0.0
        %792 = vmatpush.msra.mxu0 %v709
        %793 = vmatpush.msra.mxu0 %v677
        %794 = vmatpush.msra.mxu0 %v670
        %795 = vmatpush.msra.mxu0 %v663
        %796 = vmatmul.f32.gmra.mxu0 %v696
        %v797 = vpop.f32.mrf.mxu0
        %v798 = vadd.f32 %v692, %v797
        %799 = vdwg.mxu0
        %800 = vmatpush.msra.mxu0 0.0
        %801 = vmatpush.msra.mxu0 0.0
        %802 = vmatpush.msra.mxu0 0.0
        %803 = vmatpush.msra.mxu0 0.0
        %804 = vmatpush.msra.mxu0 0.0
        %805 = vmatpush.msra.mxu0 0.0
        %806 = vmatpush.msra.mxu0 0.0
        %807 = vmatpush.msra.mxu0 0.0
        %808 = vmatpush.msra.mxu0 0.0
        %809 = vmatpush.msra.mxu0 0.0
        %810 = vmatpush.msra.mxu0 0.0
        %811 = vmatpush.msra.mxu0 0.0
        %812 = vmatpush.msra.mxu0 %v712
        %813 = vmatpush.msra.mxu0 %v678
        %814 = vmatpush.msra.mxu0 %v671
        %815 = vmatpush.msra.mxu0 %v664
        %816 = vmatmul.f32.gmra.mxu0 %v696
        %v817 = vpop.f32.mrf.mxu0
        %v818 = vadd.f32 %v692, %v817
        %819 = vdwg.mxu0
        %820 = vmatpush.msra.mxu0 0.0
        %821 = vmatpush.msra.mxu0 0.0
        %822 = vmatpush.msra.mxu0 0.0
        %823 = vmatpush.msra.mxu0 0.0
        %824 = vmatpush.msra.mxu0 0.0
        %825 = vmatpush.msra.mxu0 0.0
        %826 = vmatpush.msra.mxu0 0.0
        %827 = vmatpush.msra.mxu0 0.0
        %828 = vmatpush.msra.mxu0 0.0
        %829 = vmatpush.msra.mxu0 0.0
        %830 = vmatpush.msra.mxu0 0.0
        %831 = vmatpush.msra.mxu0 0.0
        %832 = vmatpush.msra.mxu0 %v715
        %833 = vmatpush.msra.mxu0 %v679
        %834 = vmatpush.msra.mxu0 %v672
        %835 = vmatpush.msra.mxu0 %v665
        %836 = vmatmul.f32.gmra.mxu0 %v696
        %v837 = vpop.f32.mrf.mxu0
        %v838 = vadd.f32 %v692, %v837
        %839 = vdwg.mxu0
        %840 = vmatpush.msra.mxu0 0.0
        %841 = vmatpush.msra.mxu0 0.0
        %842 = vmatpush.msra.mxu0 0.0
        %843 = vmatpush.msra.mxu0 0.0
        %844 = vmatpush.msra.mxu0 0.0
        %845 = vmatpush.msra.mxu0 0.0
        %846 = vmatpush.msra.mxu0 0.0
        %847 = vmatpush.msra.mxu0 0.0
        %848 = vmatpush.msra.mxu0 0.0
        %849 = vmatpush.msra.mxu0 0.0
        %850 = vmatpush.msra.mxu0 0.0
        %851 = vmatpush.msra.mxu0 0.0
        %852 = vmatpush.msra.mxu0 %v718
        %853 = vmatpush.msra.mxu0 %v680
        %854 = vmatpush.msra.mxu0 %v673
        %855 = vmatpush.msra.mxu0 %v666
        %856 = vmatmul.f32.gmra.mxu0 %v696
        %v857 = vpop.f32.mrf.mxu0
        %v858 = vadd.f32 %v692, %v857
        %859 = vdwg.mxu0
        %v860 = vmax.f32 %v738, 0.0
        %v861 = vmax.f32 %v758, 0.0
        %v862 = vmax.f32 %v778, 0.0
        %v863 = vmax.f32 %v798, 0.0
        %v864 = vmax.f32 %v818, 0.0
        %v865 = vmax.f32 %v838, 0.0
        %v866 = vmax.f32 %v858, 0.0
        %v867 = vld [vmem:[%s3] sm:$0xff]
        %v868 = vld [vmem:[%s3 + $0x8] sm:$0xff]
        %v869 = vld [vmem:[%s3 + $0x10] sm:$0xff]
        %v870 = vld [vmem:[%s3 + $0x18] sm:$0xff]
        %v871 = vld [vmem:[%s3 + $0x20] sm:$0xff]
        %v872 = vld [vmem:[%s3 + $0x28] sm:$0xff]
        %v873 = vld [vmem:[%s3 + $0x30] sm:$0xff]
        %v874 = vld [vmem:[%s3 + $0x38] sm:$0xff]
        %v875 = vld [vmem:[%s3 + $0x40] sm:$0xff]
        %v876 = vld [vmem:[%s3 + $0x48] sm:$0xff]
        %v877 = vld [vmem:[%s3 + $0x50] sm:$0xff]
        %v878 = vld [vmem:[%s3 + $0x58] sm:$0xff]
        %v879 = vld [vmem:[%s3 + $0x60] sm:$0xff]
        %v880 = vld [vmem:[%s3 + $0x68] sm:$0xff]
        %v881 = vld [vmem:[%s3 + $0x70] sm:$0xff]
        %v882 = vld [vmem:[%s3 + $0x78] sm:$0xff]
        %v883 = vld [vmem:[%s3 + $0x80] sm:$0xff]
        %v884 = vld [vmem:[%s3 + $0x88] sm:$0xff]
        %v885 = vld [vmem:[%s3 + $0x90] sm:$0xff]
        %v886 = vld [vmem:[%s3 + $0x98] sm:$0xff]
        %v887 = vld [vmem:[%s3 + $0xa0] sm:$0xff]
        %v888 = vld [vmem:[%s3 + $0xa8] sm:$0xff]
        %v889 = vld [vmem:[%s3 + $0xb0] sm:$0xff]
        %v890 = vld [vmem:[%s3 + $0xb8] sm:$0xff]
        %v891 = vld [vmem:[%s3 + $0xc0] sm:$0xff]
        %v892 = vld [vmem:[%s3 + $0xc8] sm:$0xff]
        %v893 = vld [vmem:[%s3 + $0xd0] sm:$0xff]
        %v894 = vld [vmem:[%s3 + $0xd8] sm:$0xff]
        %v895 = vld [vmem:[%s3 + $0xe0] sm:$0xff]
        %v896 = vld [vmem:[%s3 + $0xe8] sm:$0xff]
        %v897 = vld [vmem:[%s3 + $0xf0] sm:$0xff]
        %v898 = vld [vmem:[%s3 + $0xf8] sm:$0xff]
        %v899 = vld [vmem:[%s3 + $0x100] sm:$0xff]
        %v900 = vld [vmem:[%s3 + $0x108] sm:$0xff]
        %v901 = vld [vmem:[%s3 + $0x110] sm:$0xff]
        %v902 = vld [vmem:[%s3 + $0x118] sm:$0xff]
        %v903 = vld [vmem:[%s3 + $0x120] sm:$0xff]
        %v904 = vld [vmem:[%s3 + $0x128] sm:$0xff]
        %v905 = vld [vmem:[%s3 + $0x130] sm:$0xff]
        %v906 = vld [vmem:[%s3 + $0x138] sm:$0xff]
        %v907 = vld [vmem:[%s3 + $0x140] sm:$0xff]
        %v908 = vld [vmem:[%s3 + $0x148] sm:$0xff]
        %v909 = vld [vmem:[%s3 + $0x150] sm:$0xff]
        %v910 = vld [vmem:[%s3 + $0x158] sm:$0xff]
        %v911 = vld [vmem:[%s3 + $0x160] sm:$0xff]
        %v912 = vld [vmem:[%s3 + $0x168] sm:$0xff]
        %v913 = vld [vmem:[%s3 + $0x170] sm:$0xff]
        %v914 = vld [vmem:[%s3 + $0x178] sm:$0xff]
        %v915 = vld [vmem:[%s3 + $0x180] sm:$0xff]
        %v916 = vld [vmem:[%s3 + $0x188] sm:$0xff]
        %v917 = vld [vmem:[%s3 + $0x190] sm:$0xff]
        %v918 = vld [vmem:[%s3 + $0x198] sm:$0xff]
        %v919 = vld [vmem:[%s3 + $0x1a0] sm:$0xff]
        %v920 = vld [vmem:[%s3 + $0x1a8] sm:$0xff]
        %v921 = vld [vmem:[%s3 + $0x1b0] sm:$0xff]
        %v922 = vld [vmem:[%s3 + $0x1b8] sm:$0xff]
        %v923 = vld [vmem:[%s3 + $0x1c0] sm:$0xff]
        %v924 = vld [vmem:[%s3 + $0x1c8] sm:$0xff]
        %v925 = vld [vmem:[%s3 + $0x1d0] sm:$0xff]
        %v926 = vld [vmem:[%s3 + $0x1d8] sm:$0xff]
        %v927 = vld [vmem:[%s3 + $0x1e0] sm:$0xff]
        %v928 = vld [vmem:[%s3 + $0x1e8] sm:$0xff]
        %v929 = vld [vmem:[%s3 + $0x1f0] sm:$0xff]
        %v930 = vld [vmem:[%s3 + $0x1f8] sm:$0xff]
        %v931 = vld [vmem:[%s3 + $0x200] sm:$0xff]
        %v932 = vld [vmem:[%s3 + $0x208] sm:$0xff]
        %v933 = vld [vmem:[%s3 + $0x210] sm:$0xff]
        %v934 = vld [vmem:[%s3 + $0x218] sm:$0xff]
        %v935 = vld [vmem:[%s3 + $0x220] sm:$0xff]
        %v936 = vld [vmem:[%s3 + $0x228] sm:$0xff]
        %v937 = vld [vmem:[%s3 + $0x230] sm:$0xff]
        %v938 = vld [vmem:[%s3 + $0x238] sm:$0xff]
        %v939 = vld [vmem:[%s3 + $0x240] sm:$0xff]
        %v940 = vld [vmem:[%s3 + $0x248] sm:$0xff]
        %v941 = vld [vmem:[%s3 + $0x250] sm:$0xff]
        %v942 = vld [vmem:[%s3 + $0x258] sm:$0xff]
        %v943 = vld [vmem:[%s3 + $0x260] sm:$0xff]
        %v944 = vld [vmem:[%s3 + $0x268] sm:$0xff]
        %v945 = vld [vmem:[%s3 + $0x270] sm:$0xff]
        %v946 = vld [vmem:[%s3 + $0x278] sm:$0xff]
        %v947 = vld [vmem:[%s3 + $0x280] sm:$0xff]
        %v948 = vld [vmem:[%s3 + $0x288] sm:$0xff]
        %v949 = vld [vmem:[%s3 + $0x290] sm:$0xff]
        %v950 = vld [vmem:[%s3 + $0x298] sm:$0xff]
        %v951 = vld [vmem:[%s3 + $0x2a0] sm:$0xff]
        %v952 = vld [vmem:[%s3 + $0x2a8] sm:$0xff]
        %v953 = vld [vmem:[%s3 + $0x2b0] sm:$0xff]
        %v954 = vld [vmem:[%s3 + $0x2b8] sm:$0xff]
        %v955 = vld [vmem:[%s3 + $0x2c0] sm:$0xff]
        %v956 = vld [vmem:[%s3 + $0x2c8] sm:$0xff]
        %v957 = vld [vmem:[%s3 + $0x2d0] sm:$0xff]
        %v958 = vld [vmem:[%s3 + $0x2d8] sm:$0xff]
        %v959 = vld [vmem:[%s3 + $0x2e0] sm:$0xff]
        %v960 = vld [vmem:[%s3 + $0x2e8] sm:$0xff]
        %v961 = vld [vmem:[%s3 + $0x2f0] sm:$0xff]
        %v962 = vld [vmem:[%s3 + $0x2f8] sm:$0xff]
        %v963 = vld [vmem:[%s3 + $0x300] sm:$0xff]
        %v964 = vld [vmem:[%s3 + $0x308] sm:$0xff]
        %v965 = vld [vmem:[%s3 + $0x310] sm:$0xff]
        %v966 = vld [vmem:[%s3 + $0x318] sm:$0xff]
        %v967 = vld [vmem:[%s3 + $0x320] sm:$0xff]
        %v968 = vld [vmem:[%s3 + $0x328] sm:$0xff]
        %v969 = vld [vmem:[%s3 + $0x330] sm:$0xff]
        %v970 = vld [vmem:[%s3 + $0x338] sm:$0xff]
        %v971 = vld [vmem:[%s3 + $0x340] sm:$0xff]
        %v972 = vld [vmem:[%s3 + $0x348] sm:$0xff]
        %v973 = vld [vmem:[%s3 + $0x350] sm:$0xff]
        %v974 = vld [vmem:[%s3 + $0x358] sm:$0xff]
        %v975 = vld [vmem:[%s3 + $0x360] sm:$0xff]
        %v976 = vld [vmem:[%s3 + $0x368] sm:$0xff]
        %v977 = vld [vmem:[%s3 + $0x370] sm:$0xff]
        %v978 = vld [vmem:[%s3 + $0x378] sm:$0xff]
        %v979 = vld [vmem:[%s3 + $0x380] sm:$0xff]
        %v980 = vld [vmem:[%s3 + $0x388] sm:$0xff]
        %v981 = vld [vmem:[%s3 + $0x390] sm:$0xff]
        %v982 = vld [vmem:[%s3 + $0x398] sm:$0xff]
        %v983 = vld [vmem:[%s3 + $0x3a0] sm:$0xff]
        %v984 = vld [vmem:[%s3 + $0x3a8] sm:$0xff]
        %v985 = vld [vmem:[%s3 + $0x3b0] sm:$0xff]
        %v986 = vld [vmem:[%s3 + $0x3b8] sm:$0xff]
        %v987 = vld [vmem:[%s3 + $0x3c0] sm:$0xff]
        %v988 = vld [vmem:[%s3 + $0x3c8] sm:$0xff]
        %v989 = vld [vmem:[%s3 + $0x3d0] sm:$0xff]
        %v990 = vld [vmem:[%s3 + $0x3d8] sm:$0xff]
        %v991 = vld [vmem:[%s3 + $0x3e0] sm:$0xff]
        %v992 = vld [vmem:[%s3 + $0x3e8] sm:$0xff]
        %v993 = vld [vmem:[%s3 + $0x3f0] sm:$0xff]
        %v994 = vld [vmem:[%s3 + $0x3f8] sm:$0xff]
        %v995 = vld [vmem:[%s3 + $0x400] sm:$0xff]
        %v996 = vld [vmem:[%s3 + $0x408] sm:$0xff]
        %v997 = vld [vmem:[%s3 + $0x410] sm:$0xff]
        %v998 = vld [vmem:[%s3 + $0x418] sm:$0xff]
        %v999 = vld [vmem:[%s3 + $0x420] sm:$0xff]
        %v1000 = vld [vmem:[%s3 + $0x428] sm:$0xff]
        %v1001 = vld [vmem:[%s3 + $0x430] sm:$0xff]
        %v1002 = vld [vmem:[%s3 + $0x438] sm:$0xff]
        %v1003 = vld [vmem:[%s3 + $0x440] sm:$0xff]
        %v1004 = vld [vmem:[%s3 + $0x448] sm:$0xff]
        %v1005 = vld [vmem:[%s3 + $0x450] sm:$0xff]
        %v1006 = vld [vmem:[%s3 + $0x458] sm:$0xff]
        %v1007 = vld [vmem:[%s3 + $0x460] sm:$0xff]
        %v1008 = vld [vmem:[%s3 + $0x468] sm:$0xff]
        %v1009 = vld [vmem:[%s3 + $0x470] sm:$0xff]
        %v1010 = vld [vmem:[%s3 + $0x478] sm:$0xff]
        %v1011 = vld [vmem:[%s3 + $0x480] sm:$0xff]
        %v1012 = vld [vmem:[%s3 + $0x488] sm:$0xff]
        %v1013 = vld [vmem:[%s3 + $0x490] sm:$0xff]
        %v1014 = vld [vmem:[%s3 + $0x498] sm:$0xff]
        %v1015 = vld [vmem:[%s3 + $0x4a0] sm:$0xff]
        %v1016 = vld [vmem:[%s3 + $0x4a8] sm:$0xff]
        %v1017 = vld [vmem:[%s3 + $0x4b0] sm:$0xff]
        %v1018 = vld [vmem:[%s3 + $0x4b8] sm:$0xff]
        %v1019 = vld [vmem:[%s3 + $0x4c0] sm:$0xff]
        %v1020 = vld [vmem:[%s3 + $0x4c8] sm:$0xff]
        %v1021 = vld [vmem:[%s3 + $0x4d0] sm:$0xff]
        %v1022 = vld [vmem:[%s3 + $0x4d8] sm:$0xff]
        %v1023 = vld [vmem:[%s3 + $0x4e0] sm:$0xff]
        %v1024 = vld [vmem:[%s3 + $0x4e8] sm:$0xff]
        %v1025 = vld [vmem:[%s3 + $0x4f0] sm:$0xff]
        %v1026 = vld [vmem:[%s3 + $0x4f8] sm:$0xff]
        %v1027 = vld [vmem:[%s3 + $0x500] sm:$0xff]
        %v1028 = vld [vmem:[%s3 + $0x508] sm:$0xff]
        %v1029 = vld [vmem:[%s3 + $0x510] sm:$0xff]
        %v1030 = vld [vmem:[%s3 + $0x518] sm:$0xff]
        %v1031 = vld [vmem:[%s3 + $0x520] sm:$0xff]
        %v1032 = vld [vmem:[%s3 + $0x528] sm:$0xff]
        %v1033 = vld [vmem:[%s3 + $0x530] sm:$0xff]
        %v1034 = vld [vmem:[%s3 + $0x538] sm:$0xff]
        %v1035 = vld [vmem:[%s3 + $0x540] sm:$0xff]
        %v1036 = vld [vmem:[%s3 + $0x548] sm:$0xff]
        %v1037 = vld [vmem:[%s3 + $0x550] sm:$0xff]
        %v1038 = vld [vmem:[%s3 + $0x558] sm:$0xff]
        %v1039 = vld [vmem:[%s3 + $0x560] sm:$0xff]
        %v1040 = vld [vmem:[%s3 + $0x568] sm:$0xff]
        %v1041 = vld [vmem:[%s3 + $0x570] sm:$0xff]
        %v1042 = vld [vmem:[%s3 + $0x578] sm:$0xff]
        %v1043 = vld [vmem:[%s3 + $0x580] sm:$0xff]
        %v1044 = vld [vmem:[%s3 + $0x588] sm:$0xff]
        %v1045 = vld [vmem:[%s3 + $0x590] sm:$0xff]
        %v1046 = vld [vmem:[%s3 + $0x598] sm:$0xff]
        %v1047 = vld [vmem:[%s3 + $0x5a0] sm:$0xff]
        %v1048 = vld [vmem:[%s3 + $0x5a8] sm:$0xff]
        %v1049 = vld [vmem:[%s3 + $0x5b0] sm:$0xff]
        %v1050 = vld [vmem:[%s3 + $0x5b8] sm:$0xff]
        %v1051 = vld [vmem:[%s3 + $0x5c0] sm:$0xff]
        %v1052 = vld [vmem:[%s3 + $0x5c8] sm:$0xff]
        %v1053 = vld [vmem:[%s3 + $0x5d0] sm:$0xff]
        %v1054 = vld [vmem:[%s3 + $0x5d8] sm:$0xff]
        %v1055 = vld [vmem:[%s3 + $0x5e0] sm:$0xff]
        %v1056 = vld [vmem:[%s3 + $0x5e8] sm:$0xff]
        %v1057 = vld [vmem:[%s3 + $0x5f0] sm:$0xff]
        %v1058 = vld [vmem:[%s3 + $0x5f8] sm:$0xff]
        %v1059 = vld [vmem:[%s3 + $0x600] sm:$0xff]
        %v1060 = vld [vmem:[%s3 + $0x608] sm:$0xff]
        %v1061 = vld [vmem:[%s3 + $0x610] sm:$0xff]
        %v1062 = vld [vmem:[%s3 + $0x618] sm:$0xff]
        %v1064 = vsel %vm617, %v866, 0
        %1066 = vmatpush.msra.mxu0 %v897
        %1067 = vmatpush.msra.mxu0 %v895
        %1068 = vmatpush.msra.mxu0 %v893
        %1069 = vmatpush.msra.mxu0 %v891
        %1070 = vmatpush.msra.mxu0 %v889
        %1071 = vmatpush.msra.mxu0 %v887
        %1072 = vmatpush.msra.mxu0 %v885
        %1073 = vmatpush.msra.mxu0 %v883
        %1074 = vmatpush.msra.mxu0 %v881
        %1075 = vmatpush.msra.mxu0 %v879
        %1076 = vmatpush.msra.mxu0 %v877
        %1077 = vmatpush.msra.mxu0 %v875
        %1078 = vmatpush.msra.mxu0 %v873
        %1079 = vmatpush.msra.mxu0 %v871
        %1080 = vmatpush.msra.mxu0 %v869
        %1081 = vmatpush.msra.mxu0 %v867
        %1082 = vmatmul.f32.gmra.mxu0 %v860
        %v1083 = vpop.f32.mrf.mxu0
        %v1084 = vadd.f32 0.0, %v1083
        %1085 = vdwg.mxu0
        %1086 = vmatpush.msra.mxu0 %v929
        %1087 = vmatpush.msra.mxu0 %v927
        %1088 = vmatpush.msra.mxu0 %v925
        %1089 = vmatpush.msra.mxu0 %v923
        %1090 = vmatpush.msra.mxu0 %v921
        %1091 = vmatpush.msra.mxu0 %v919
        %1092 = vmatpush.msra.mxu0 %v917
        %1093 = vmatpush.msra.mxu0 %v915
        %1094 = vmatpush.msra.mxu0 %v913
        %1095 = vmatpush.msra.mxu0 %v911
        %1096 = vmatpush.msra.mxu0 %v909
        %1097 = vmatpush.msra.mxu0 %v907
        %1098 = vmatpush.msra.mxu0 %v905
        %1099 = vmatpush.msra.mxu0 %v903
        %1100 = vmatpush.msra.mxu0 %v901
        %1101 = vmatpush.msra.mxu0 %v899
        %1102 = vmatmul.f32.gmra.mxu0 %v861
        %v1103 = vpop.f32.mrf.mxu0
        %v1104 = vadd.f32 %v1084, %v1103
        %1105 = vdwg.mxu0
        %1106 = vmatpush.msra.mxu0 %v961
        %1107 = vmatpush.msra.mxu0 %v959
        %1108 = vmatpush.msra.mxu0 %v957
        %1109 = vmatpush.msra.mxu0 %v955
        %1110 = vmatpush.msra.mxu0 %v953
        %1111 = vmatpush.msra.mxu0 %v951
        %1112 = vmatpush.msra.mxu0 %v949
        %1113 = vmatpush.msra.mxu0 %v947
        %1114 = vmatpush.msra.mxu0 %v945
        %1115 = vmatpush.msra.mxu0 %v943
        %1116 = vmatpush.msra.mxu0 %v941
        %1117 = vmatpush.msra.mxu0 %v939
        %1118 = vmatpush.msra.mxu0 %v937
        %1119 = vmatpush.msra.mxu0 %v935
        %1120 = vmatpush.msra.mxu0 %v933
        %1121 = vmatpush.msra.mxu0 %v931
        %1122 = vmatmul.f32.gmra.mxu0 %v862
        %v1123 = vpop.f32.mrf.mxu0
        %v1124 = vadd.f32 %v1104, %v1123
        %1125 = vdwg.mxu0
        %1126 = vmatpush.msra.mxu0 %v993
        %1127 = vmatpush.msra.mxu0 %v991
        %1128 = vmatpush.msra.mxu0 %v989
        %1129 = vmatpush.msra.mxu0 %v987
        %1130 = vmatpush.msra.mxu0 %v985
        %1131 = vmatpush.msra.mxu0 %v983
        %1132 = vmatpush.msra.mxu0 %v981
        %1133 = vmatpush.msra.mxu0 %v979
        %1134 = vmatpush.msra.mxu0 %v977
        %1135 = vmatpush.msra.mxu0 %v975
        %1136 = vmatpush.msra.mxu0 %v973
        %1137 = vmatpush.msra.mxu0 %v971
        %1138 = vmatpush.msra.mxu0 %v969
        %1139 = vmatpush.msra.mxu0 %v967
        %1140 = vmatpush.msra.mxu0 %v965
        %1141 = vmatpush.msra.mxu0 %v963
        %1142 = vmatmul.f32.gmra.mxu0 %v863
        %v1143 = vpop.f32.mrf.mxu0
        %v1144 = vadd.f32 %v1124, %v1143
        %1145 = vdwg.mxu0
        %1146 = vmatpush.msra.mxu0 %v1025
        %1147 = vmatpush.msra.mxu0 %v1023
        %1148 = vmatpush.msra.mxu0 %v1021
        %1149 = vmatpush.msra.mxu0 %v1019
        %1150 = vmatpush.msra.mxu0 %v1017
        %1151 = vmatpush.msra.mxu0 %v1015
        %1152 = vmatpush.msra.mxu0 %v1013
        %1153 = vmatpush.msra.mxu0 %v1011
        %1154 = vmatpush.msra.mxu0 %v1009
        %1155 = vmatpush.msra.mxu0 %v1007
        %1156 = vmatpush.msra.mxu0 %v1005
        %1157 = vmatpush.msra.mxu0 %v1003
        %1158 = vmatpush.msra.mxu0 %v1001
        %1159 = vmatpush.msra.mxu0 %v999
        %1160 = vmatpush.msra.mxu0 %v997
        %1161 = vmatpush.msra.mxu0 %v995
        %1162 = vmatmul.f32.gmra.mxu0 %v864
        %v1163 = vpop.f32.mrf.mxu0
        %v1164 = vadd.f32 %v1144, %v1163
        %1165 = vdwg.mxu0
        %1166 = vmatpush.msra.mxu0 %v1057
        %1167 = vmatpush.msra.mxu0 %v1055
        %1168 = vmatpush.msra.mxu0 %v1053
        %1169 = vmatpush.msra.mxu0 %v1051
        %1170 = vmatpush.msra.mxu0 %v1049
        %1171 = vmatpush.msra.mxu0 %v1047
        %1172 = vmatpush.msra.mxu0 %v1045
        %1173 = vmatpush.msra.mxu0 %v1043
        %1174 = vmatpush.msra.mxu0 %v1041
        %1175 = vmatpush.msra.mxu0 %v1039
        %1176 = vmatpush.msra.mxu0 %v1037
        %1177 = vmatpush.msra.mxu0 %v1035
        %1178 = vmatpush.msra.mxu0 %v1033
        %1179 = vmatpush.msra.mxu0 %v1031
        %1180 = vmatpush.msra.mxu0 %v1029
        %1181 = vmatpush.msra.mxu0 %v1027
        %1182 = vmatmul.f32.gmra.mxu0 %v865
        %v1183 = vpop.f32.mrf.mxu0
        %v1184 = vadd.f32 %v1164, %v1183
        %1185 = vdwg.mxu0
        %1186 = vmatpush.msra.mxu0 0.0
        %1187 = vmatpush.msra.mxu0 0.0
        %1188 = vmatpush.msra.mxu0 0.0
        %1189 = vmatpush.msra.mxu0 0.0
        %1190 = vmatpush.msra.mxu0 0.0
        %1191 = vmatpush.msra.mxu0 0.0
        %1192 = vmatpush.msra.mxu0 0.0
        %1193 = vmatpush.msra.mxu0 0.0
        %1194 = vmatpush.msra.mxu0 0.0
        %1195 = vmatpush.msra.mxu0 0.0
        %1196 = vmatpush.msra.mxu0 0.0
        %1197 = vmatpush.msra.mxu0 0.0
        %1198 = vmatpush.msra.mxu0 0.0
        %1199 = vmatpush.msra.mxu0 0.0
        %1200 = vmatpush.msra.mxu0 %v1061
        %1201 = vmatpush.msra.mxu0 %v1059
        %1202 = vmatmul.f32.gmra.mxu0 %v1064
        %v1203 = vpop.f32.mrf.mxu0
        %v1204 = vadd.f32 %v1184, %v1203
        %1205 = vdwg.mxu0
        %1206 = vmatpush.msra.mxu0 %v898
        %1207 = vmatpush.msra.mxu0 %v896
        %1208 = vmatpush.msra.mxu0 %v894
        %1209 = vmatpush.msra.mxu0 %v892
        %1210 = vmatpush.msra.mxu0 %v890
        %1211 = vmatpush.msra.mxu0 %v888
        %1212 = vmatpush.msra.mxu0 %v886
        %1213 = vmatpush.msra.mxu0 %v884
        %1214 = vmatpush.msra.mxu0 %v882
        %1215 = vmatpush.msra.mxu0 %v880
        %1216 = vmatpush.msra.mxu0 %v878
        %1217 = vmatpush.msra.mxu0 %v876
        %1218 = vmatpush.msra.mxu0 %v874
        %1219 = vmatpush.msra.mxu0 %v872
        %1220 = vmatpush.msra.mxu0 %v870
        %1221 = vmatpush.msra.mxu0 %v868
        %1222 = vmatmul.f32.gmra.mxu0 %v860
        %v1223 = vpop.f32.mrf.mxu0
        %v1224 = vadd.f32 0.0, %v1223
        %1225 = vdwg.mxu0
        %1226 = vmatpush.msra.mxu0 %v930
        %1227 = vmatpush.msra.mxu0 %v928
        %1228 = vmatpush.msra.mxu0 %v926
        %1229 = vmatpush.msra.mxu0 %v924
        %1230 = vmatpush.msra.mxu0 %v922
        %1231 = vmatpush.msra.mxu0 %v920
        %1232 = vmatpush.msra.mxu0 %v918
        %1233 = vmatpush.msra.mxu0 %v916
        %1234 = vmatpush.msra.mxu0 %v914
        %1235 = vmatpush.msra.mxu0 %v912
        %1236 = vmatpush.msra.mxu0 %v910
        %1237 = vmatpush.msra.mxu0 %v908
        %1238 = vmatpush.msra.mxu0 %v906
        %1239 = vmatpush.msra.mxu0 %v904
        %1240 = vmatpush.msra.mxu0 %v902
        %1241 = vmatpush.msra.mxu0 %v900
        %1242 = vmatmul.f32.gmra.mxu0 %v861
        %v1243 = vpop.f32.mrf.mxu0
        %v1244 = vadd.f32 %v1224, %v1243
        %1245 = vdwg.mxu0
        %1246 = vmatpush.msra.mxu0 %v962
        %1247 = vmatpush.msra.mxu0 %v960
        %1248 = vmatpush.msra.mxu0 %v958
        %1249 = vmatpush.msra.mxu0 %v956
        %1250 = vmatpush.msra.mxu0 %v954
        %1251 = vmatpush.msra.mxu0 %v952
        %1252 = vmatpush.msra.mxu0 %v950
        %1253 = vmatpush.msra.mxu0 %v948
        %1254 = vmatpush.msra.mxu0 %v946
        %1255 = vmatpush.msra.mxu0 %v944
        %1256 = vmatpush.msra.mxu0 %v942
        %1257 = vmatpush.msra.mxu0 %v940
        %1258 = vmatpush.msra.mxu0 %v938
        %1259 = vmatpush.msra.mxu0 %v936
        %1260 = vmatpush.msra.mxu0 %v934
        %1261 = vmatpush.msra.mxu0 %v932
        %1262 = vmatmul.f32.gmra.mxu0 %v862
        %v1263 = vpop.f32.mrf.mxu0
        %v1264 = vadd.f32 %v1244, %v1263
        %1265 = vdwg.mxu0
        %1266 = vmatpush.msra.mxu0 %v994
        %1267 = vmatpush.msra.mxu0 %v992
        %1268 = vmatpush.msra.mxu0 %v990
        %1269 = vmatpush.msra.mxu0 %v988
        %1270 = vmatpush.msra.mxu0 %v986
        %1271 = vmatpush.msra.mxu0 %v984
        %1272 = vmatpush.msra.mxu0 %v982
        %1273 = vmatpush.msra.mxu0 %v980
        %1274 = vmatpush.msra.mxu0 %v978
        %1275 = vmatpush.msra.mxu0 %v976
        %1276 = vmatpush.msra.mxu0 %v974
        %1277 = vmatpush.msra.mxu0 %v972
        %1278 = vmatpush.msra.mxu0 %v970
        %1279 = vmatpush.msra.mxu0 %v968
        %1280 = vmatpush.msra.mxu0 %v966
        %1281 = vmatpush.msra.mxu0 %v964
        %1282 = vmatmul.f32.gmra.mxu0 %v863
        %v1283 = vpop.f32.mrf.mxu0
        %v1284 = vadd.f32 %v1264, %v1283
        %1285 = vdwg.mxu0
        %1286 = vmatpush.msra.mxu0 %v1026
        %1287 = vmatpush.msra.mxu0 %v1024
        %1288 = vmatpush.msra.mxu0 %v1022
        %1289 = vmatpush.msra.mxu0 %v1020
        %1290 = vmatpush.msra.mxu0 %v1018
        %1291 = vmatpush.msra.mxu0 %v1016
        %1292 = vmatpush.msra.mxu0 %v1014
        %1293 = vmatpush.msra.mxu0 %v1012
        %1294 = vmatpush.msra.mxu0 %v1010
        %1295 = vmatpush.msra.mxu0 %v1008
        %1296 = vmatpush.msra.mxu0 %v1006
        %1297 = vmatpush.msra.mxu0 %v1004
        %1298 = vmatpush.msra.mxu0 %v1002
        %1299 = vmatpush.msra.mxu0 %v1000
        %1300 = vmatpush.msra.mxu0 %v998
        %1301 = vmatpush.msra.mxu0 %v996
        %1302 = vmatmul.f32.gmra.mxu0 %v864
        %v1303 = vpop.f32.mrf.mxu0
        %v1304 = vadd.f32 %v1284, %v1303
        %1305 = vdwg.mxu0
        %1306 = vmatpush.msra.mxu0 %v1058
        %1307 = vmatpush.msra.mxu0 %v1056
        %1308 = vmatpush.msra.mxu0 %v1054
        %1309 = vmatpush.msra.mxu0 %v1052
        %1310 = vmatpush.msra.mxu0 %v1050
        %1311 = vmatpush.msra.mxu0 %v1048
        %1312 = vmatpush.msra.mxu0 %v1046
        %1313 = vmatpush.msra.mxu0 %v1044
        %1314 = vmatpush.msra.mxu0 %v1042
        %1315 = vmatpush.msra.mxu0 %v1040
        %1316 = vmatpush.msra.mxu0 %v1038
        %1317 = vmatpush.msra.mxu0 %v1036
        %1318 = vmatpush.msra.mxu0 %v1034
        %1319 = vmatpush.msra.mxu0 %v1032
        %1320 = vmatpush.msra.mxu0 %v1030
        %1321 = vmatpush.msra.mxu0 %v1028
        %1322 = vmatmul.f32.gmra.mxu0 %v865
        %v1323 = vpop.f32.mrf.mxu0
        %v1324 = vadd.f32 %v1304, %v1323
        %1325 = vdwg.mxu0
        %1326 = vmatpush.msra.mxu0 0.0
        %1327 = vmatpush.msra.mxu0 0.0
        %1328 = vmatpush.msra.mxu0 0.0
        %1329 = vmatpush.msra.mxu0 0.0
        %1330 = vmatpush.msra.mxu0 0.0
        %1331 = vmatpush.msra.mxu0 0.0
        %1332 = vmatpush.msra.mxu0 0.0
        %1333 = vmatpush.msra.mxu0 0.0
        %1334 = vmatpush.msra.mxu0 0.0
        %1335 = vmatpush.msra.mxu0 0.0
        %1336 = vmatpush.msra.mxu0 0.0
        %1337 = vmatpush.msra.mxu0 0.0
        %1338 = vmatpush.msra.mxu0 0.0
        %1339 = vmatpush.msra.mxu0 0.0
        %1340 = vmatpush.msra.mxu0 %v1062
        %1341 = vmatpush.msra.mxu0 %v1060
        %1342 = vmatmul.f32.gmra.mxu0 %v1064
        %v1343 = vpop.f32.mrf.mxu0
        %v1344 = vadd.f32 %v1324, %v1343
        %1345 = vdwg.mxu0
        %s1346 = scalar_lea.vmem %s3, 1568
        %v1347 = vld [vmem:[%s1346] sm:$0xff]
        %v1348 = vld [vmem:[%s1346 + $0x8] sm:$0xff]
        %v1349 = vld [vmem:[%s1346 + $0x10] sm:$0xff]
        %v1350 = vld [vmem:[%s1346 + $0x18] sm:$0xff]
        %v1351 = vld [vmem:[%s1346 + $0x20] sm:$0xff]
        %v1352 = vld [vmem:[%s1346 + $0x28] sm:$0xff]
        %v1353 = vld [vmem:[%s1346 + $0x30] sm:$0xff]
        %v1354 = vld [vmem:[%s1346 + $0x38] sm:$0xff]
        %v1355 = vld [vmem:[%s1346 + $0x40] sm:$0xff]
        %v1356 = vld [vmem:[%s1346 + $0x48] sm:$0xff]
        %v1357 = vld [vmem:[%s1346 + $0x50] sm:$0xff]
        %v1358 = vld [vmem:[%s1346 + $0x58] sm:$0xff]
        %v1359 = vld [vmem:[%s1346 + $0x60] sm:$0xff]
        %v1360 = vld [vmem:[%s1346 + $0x68] sm:$0xff]
        %v1361 = vld [vmem:[%s1346 + $0x70] sm:$0xff]
        %v1362 = vld [vmem:[%s1346 + $0x78] sm:$0xff]
        %v1363 = vld [vmem:[%s1346 + $0x80] sm:$0xff]
        %v1364 = vld [vmem:[%s1346 + $0x88] sm:$0xff]
        %v1365 = vld [vmem:[%s1346 + $0x90] sm:$0xff]
        %v1366 = vld [vmem:[%s1346 + $0x98] sm:$0xff]
        %v1367 = vld [vmem:[%s1346 + $0xa0] sm:$0xff]
        %v1368 = vld [vmem:[%s1346 + $0xa8] sm:$0xff]
        %v1369 = vld [vmem:[%s1346 + $0xb0] sm:$0xff]
        %v1370 = vld [vmem:[%s1346 + $0xb8] sm:$0xff]
        %v1371 = vld [vmem:[%s1346 + $0xc0] sm:$0xff]
        %v1372 = vld [vmem:[%s1346 + $0xc8] sm:$0xff]
        %v1373 = vld [vmem:[%s1346 + $0xd0] sm:$0xff]
        %v1374 = vld [vmem:[%s1346 + $0xd8] sm:$0xff]
        %v1375 = vld [vmem:[%s1346 + $0xe0] sm:$0xff]
        %v1376 = vld [vmem:[%s1346 + $0xe8] sm:$0xff]
        %v1377 = vld [vmem:[%s1346 + $0xf0] sm:$0xff]
        %v1378 = vld [vmem:[%s1346 + $0xf8] sm:$0xff]
        %v1379 = vld [vmem:[%s1346 + $0x100] sm:$0xff]
        %v1380 = vld [vmem:[%s1346 + $0x108] sm:$0xff]
        %v1381 = vld [vmem:[%s1346 + $0x110] sm:$0xff]
        %v1382 = vld [vmem:[%s1346 + $0x118] sm:$0xff]
        %v1383 = vld [vmem:[%s1346 + $0x120] sm:$0xff]
        %v1384 = vld [vmem:[%s1346 + $0x128] sm:$0xff]
        %v1385 = vld [vmem:[%s1346 + $0x130] sm:$0xff]
        %v1386 = vld [vmem:[%s1346 + $0x138] sm:$0xff]
        %v1387 = vld [vmem:[%s1346 + $0x140] sm:$0xff]
        %v1388 = vld [vmem:[%s1346 + $0x148] sm:$0xff]
        %v1389 = vld [vmem:[%s1346 + $0x150] sm:$0xff]
        %v1390 = vld [vmem:[%s1346 + $0x158] sm:$0xff]
        %v1391 = vld [vmem:[%s1346 + $0x160] sm:$0xff]
        %v1392 = vld [vmem:[%s1346 + $0x168] sm:$0xff]
        %v1393 = vld [vmem:[%s1346 + $0x170] sm:$0xff]
        %v1394 = vld [vmem:[%s1346 + $0x178] sm:$0xff]
        %v1395 = vld [vmem:[%s1346 + $0x180] sm:$0xff]
        %v1396 = vld [vmem:[%s1346 + $0x188] sm:$0xff]
        %v1397 = vld [vmem:[%s1346 + $0x190] sm:$0xff]
        %v1398 = vld [vmem:[%s1346 + $0x198] sm:$0xff]
        %v1399 = vld [vmem:[%s1346 + $0x1a0] sm:$0xff]
        %v1400 = vld [vmem:[%s1346 + $0x1a8] sm:$0xff]
        %v1401 = vld [vmem:[%s1346 + $0x1b0] sm:$0xff]
        %v1402 = vld [vmem:[%s1346 + $0x1b8] sm:$0xff]
        %v1403 = vld [vmem:[%s1346 + $0x1c0] sm:$0xff]
        %v1404 = vld [vmem:[%s1346 + $0x1c8] sm:$0xff]
        %v1405 = vld [vmem:[%s1346 + $0x1d0] sm:$0xff]
        %v1406 = vld [vmem:[%s1346 + $0x1d8] sm:$0xff]
        %v1407 = vld [vmem:[%s1346 + $0x1e0] sm:$0xff]
        %v1408 = vld [vmem:[%s1346 + $0x1e8] sm:$0xff]
        %v1409 = vld [vmem:[%s1346 + $0x1f0] sm:$0xff]
        %v1410 = vld [vmem:[%s1346 + $0x1f8] sm:$0xff]
        %v1411 = vld [vmem:[%s1346 + $0x200] sm:$0xff]
        %v1412 = vld [vmem:[%s1346 + $0x208] sm:$0xff]
        %v1413 = vld [vmem:[%s1346 + $0x210] sm:$0xff]
        %v1414 = vld [vmem:[%s1346 + $0x218] sm:$0xff]
        %v1415 = vld [vmem:[%s1346 + $0x220] sm:$0xff]
        %v1416 = vld [vmem:[%s1346 + $0x228] sm:$0xff]
        %v1417 = vld [vmem:[%s1346 + $0x230] sm:$0xff]
        %v1418 = vld [vmem:[%s1346 + $0x238] sm:$0xff]
        %v1419 = vld [vmem:[%s1346 + $0x240] sm:$0xff]
        %v1420 = vld [vmem:[%s1346 + $0x248] sm:$0xff]
        %v1421 = vld [vmem:[%s1346 + $0x250] sm:$0xff]
        %v1422 = vld [vmem:[%s1346 + $0x258] sm:$0xff]
        %v1423 = vld [vmem:[%s1346 + $0x260] sm:$0xff]
        %v1424 = vld [vmem:[%s1346 + $0x268] sm:$0xff]
        %v1425 = vld [vmem:[%s1346 + $0x270] sm:$0xff]
        %v1426 = vld [vmem:[%s1346 + $0x278] sm:$0xff]
        %v1427 = vld [vmem:[%s1346 + $0x280] sm:$0xff]
        %v1428 = vld [vmem:[%s1346 + $0x288] sm:$0xff]
        %v1429 = vld [vmem:[%s1346 + $0x290] sm:$0xff]
        %v1430 = vld [vmem:[%s1346 + $0x298] sm:$0xff]
        %v1431 = vld [vmem:[%s1346 + $0x2a0] sm:$0xff]
        %v1432 = vld [vmem:[%s1346 + $0x2a8] sm:$0xff]
        %v1433 = vld [vmem:[%s1346 + $0x2b0] sm:$0xff]
        %v1434 = vld [vmem:[%s1346 + $0x2b8] sm:$0xff]
        %v1435 = vld [vmem:[%s1346 + $0x2c0] sm:$0xff]
        %v1436 = vld [vmem:[%s1346 + $0x2c8] sm:$0xff]
        %v1437 = vld [vmem:[%s1346 + $0x2d0] sm:$0xff]
        %v1438 = vld [vmem:[%s1346 + $0x2d8] sm:$0xff]
        %v1439 = vld [vmem:[%s1346 + $0x2e0] sm:$0xff]
        %v1440 = vld [vmem:[%s1346 + $0x2e8] sm:$0xff]
        %v1441 = vld [vmem:[%s1346 + $0x2f0] sm:$0xff]
        %v1442 = vld [vmem:[%s1346 + $0x2f8] sm:$0xff]
        %v1443 = vld [vmem:[%s1346 + $0x300] sm:$0xff]
        %v1444 = vld [vmem:[%s1346 + $0x308] sm:$0xff]
        %v1445 = vld [vmem:[%s1346 + $0x310] sm:$0xff]
        %v1446 = vld [vmem:[%s1346 + $0x318] sm:$0xff]
        %v1447 = vld [vmem:[%s1346 + $0x320] sm:$0xff]
        %v1448 = vld [vmem:[%s1346 + $0x328] sm:$0xff]
        %v1449 = vld [vmem:[%s1346 + $0x330] sm:$0xff]
        %v1450 = vld [vmem:[%s1346 + $0x338] sm:$0xff]
        %v1451 = vld [vmem:[%s1346 + $0x340] sm:$0xff]
        %v1452 = vld [vmem:[%s1346 + $0x348] sm:$0xff]
        %v1453 = vld [vmem:[%s1346 + $0x350] sm:$0xff]
        %v1454 = vld [vmem:[%s1346 + $0x358] sm:$0xff]
        %v1455 = vld [vmem:[%s1346 + $0x360] sm:$0xff]
        %v1456 = vld [vmem:[%s1346 + $0x368] sm:$0xff]
        %v1457 = vld [vmem:[%s1346 + $0x370] sm:$0xff]
        %v1458 = vld [vmem:[%s1346 + $0x378] sm:$0xff]
        %v1459 = vld [vmem:[%s1346 + $0x380] sm:$0xff]
        %v1460 = vld [vmem:[%s1346 + $0x388] sm:$0xff]
        %v1461 = vld [vmem:[%s1346 + $0x390] sm:$0xff]
        %v1462 = vld [vmem:[%s1346 + $0x398] sm:$0xff]
        %v1463 = vld [vmem:[%s1346 + $0x3a0] sm:$0xff]
        %v1464 = vld [vmem:[%s1346 + $0x3a8] sm:$0xff]
        %v1465 = vld [vmem:[%s1346 + $0x3b0] sm:$0xff]
        %v1466 = vld [vmem:[%s1346 + $0x3b8] sm:$0xff]
        %v1467 = vld [vmem:[%s1346 + $0x3c0] sm:$0xff]
        %v1468 = vld [vmem:[%s1346 + $0x3c8] sm:$0xff]
        %v1469 = vld [vmem:[%s1346 + $0x3d0] sm:$0xff]
        %v1470 = vld [vmem:[%s1346 + $0x3d8] sm:$0xff]
        %v1471 = vld [vmem:[%s1346 + $0x3e0] sm:$0xff]
        %v1472 = vld [vmem:[%s1346 + $0x3e8] sm:$0xff]
        %v1473 = vld [vmem:[%s1346 + $0x3f0] sm:$0xff]
        %v1474 = vld [vmem:[%s1346 + $0x3f8] sm:$0xff]
        %v1475 = vld [vmem:[%s1346 + $0x400] sm:$0xff]
        %v1476 = vld [vmem:[%s1346 + $0x408] sm:$0xff]
        %v1477 = vld [vmem:[%s1346 + $0x410] sm:$0xff]
        %v1478 = vld [vmem:[%s1346 + $0x418] sm:$0xff]
        %v1479 = vld [vmem:[%s1346 + $0x420] sm:$0xff]
        %v1480 = vld [vmem:[%s1346 + $0x428] sm:$0xff]
        %v1481 = vld [vmem:[%s1346 + $0x430] sm:$0xff]
        %v1482 = vld [vmem:[%s1346 + $0x438] sm:$0xff]
        %v1483 = vld [vmem:[%s1346 + $0x440] sm:$0xff]
        %v1484 = vld [vmem:[%s1346 + $0x448] sm:$0xff]
        %v1485 = vld [vmem:[%s1346 + $0x450] sm:$0xff]
        %v1486 = vld [vmem:[%s1346 + $0x458] sm:$0xff]
        %v1487 = vld [vmem:[%s1346 + $0x460] sm:$0xff]
        %v1488 = vld [vmem:[%s1346 + $0x468] sm:$0xff]
        %v1489 = vld [vmem:[%s1346 + $0x470] sm:$0xff]
        %v1490 = vld [vmem:[%s1346 + $0x478] sm:$0xff]
        %v1491 = vld [vmem:[%s1346 + $0x480] sm:$0xff]
        %v1492 = vld [vmem:[%s1346 + $0x488] sm:$0xff]
        %v1493 = vld [vmem:[%s1346 + $0x490] sm:$0xff]
        %v1494 = vld [vmem:[%s1346 + $0x498] sm:$0xff]
        %v1495 = vld [vmem:[%s1346 + $0x4a0] sm:$0xff]
        %v1496 = vld [vmem:[%s1346 + $0x4a8] sm:$0xff]
        %v1497 = vld [vmem:[%s1346 + $0x4b0] sm:$0xff]
        %v1498 = vld [vmem:[%s1346 + $0x4b8] sm:$0xff]
        %v1499 = vld [vmem:[%s1346 + $0x4c0] sm:$0xff]
        %v1500 = vld [vmem:[%s1346 + $0x4c8] sm:$0xff]
        %v1501 = vld [vmem:[%s1346 + $0x4d0] sm:$0xff]
        %v1502 = vld [vmem:[%s1346 + $0x4d8] sm:$0xff]
        %v1503 = vld [vmem:[%s1346 + $0x4e0] sm:$0xff]
        %v1504 = vld [vmem:[%s1346 + $0x4e8] sm:$0xff]
        %v1505 = vld [vmem:[%s1346 + $0x4f0] sm:$0xff]
        %v1506 = vld [vmem:[%s1346 + $0x4f8] sm:$0xff]
        %v1507 = vld [vmem:[%s1346 + $0x500] sm:$0xff]
        %v1508 = vld [vmem:[%s1346 + $0x508] sm:$0xff]
        %v1509 = vld [vmem:[%s1346 + $0x510] sm:$0xff]
        %v1510 = vld [vmem:[%s1346 + $0x518] sm:$0xff]
        %v1511 = vld [vmem:[%s1346 + $0x520] sm:$0xff]
        %v1512 = vld [vmem:[%s1346 + $0x528] sm:$0xff]
        %v1513 = vld [vmem:[%s1346 + $0x530] sm:$0xff]
        %v1514 = vld [vmem:[%s1346 + $0x538] sm:$0xff]
        %v1515 = vld [vmem:[%s1346 + $0x540] sm:$0xff]
        %v1516 = vld [vmem:[%s1346 + $0x548] sm:$0xff]
        %v1517 = vld [vmem:[%s1346 + $0x550] sm:$0xff]
        %v1518 = vld [vmem:[%s1346 + $0x558] sm:$0xff]
        %v1519 = vld [vmem:[%s1346 + $0x560] sm:$0xff]
        %v1520 = vld [vmem:[%s1346 + $0x568] sm:$0xff]
        %v1521 = vld [vmem:[%s1346 + $0x570] sm:$0xff]
        %v1522 = vld [vmem:[%s1346 + $0x578] sm:$0xff]
        %v1523 = vld [vmem:[%s1346 + $0x580] sm:$0xff]
        %v1524 = vld [vmem:[%s1346 + $0x588] sm:$0xff]
        %v1525 = vld [vmem:[%s1346 + $0x590] sm:$0xff]
        %v1526 = vld [vmem:[%s1346 + $0x598] sm:$0xff]
        %v1527 = vld [vmem:[%s1346 + $0x5a0] sm:$0xff]
        %v1528 = vld [vmem:[%s1346 + $0x5a8] sm:$0xff]
        %v1529 = vld [vmem:[%s1346 + $0x5b0] sm:$0xff]
        %v1530 = vld [vmem:[%s1346 + $0x5b8] sm:$0xff]
        %v1531 = vld [vmem:[%s1346 + $0x5c0] sm:$0xff]
        %v1532 = vld [vmem:[%s1346 + $0x5c8] sm:$0xff]
        %v1533 = vld [vmem:[%s1346 + $0x5d0] sm:$0xff]
        %v1534 = vld [vmem:[%s1346 + $0x5d8] sm:$0xff]
        %v1535 = vld [vmem:[%s1346 + $0x5e0] sm:$0xff]
        %v1536 = vld [vmem:[%s1346 + $0x5e8] sm:$0xff]
        %v1537 = vld [vmem:[%s1346 + $0x5f0] sm:$0xff]
        %v1538 = vld [vmem:[%s1346 + $0x5f8] sm:$0xff]
        %v1539 = vld [vmem:[%s1346 + $0x600] sm:$0xff]
        %v1540 = vld [vmem:[%s1346 + $0x608] sm:$0xff]
        %v1541 = vld [vmem:[%s1346 + $0x610] sm:$0xff]
        %v1542 = vld [vmem:[%s1346 + $0x618] sm:$0xff]
        %1543 = vmatpush.msra.mxu0 %v1377
        %1544 = vmatpush.msra.mxu0 %v1375
        %1545 = vmatpush.msra.mxu0 %v1373
        %1546 = vmatpush.msra.mxu0 %v1371
        %1547 = vmatpush.msra.mxu0 %v1369
        %1548 = vmatpush.msra.mxu0 %v1367
        %1549 = vmatpush.msra.mxu0 %v1365
        %1550 = vmatpush.msra.mxu0 %v1363
        %1551 = vmatpush.msra.mxu0 %v1361
        %1552 = vmatpush.msra.mxu0 %v1359
        %1553 = vmatpush.msra.mxu0 %v1357
        %1554 = vmatpush.msra.mxu0 %v1355
        %1555 = vmatpush.msra.mxu0 %v1353
        %1556 = vmatpush.msra.mxu0 %v1351
        %1557 = vmatpush.msra.mxu0 %v1349
        %1558 = vmatpush.msra.mxu0 %v1347
        %1559 = vmatmul.f32.gmra.mxu0 %v860
        %v1560 = vpop.f32.mrf.mxu0
        %v1561 = vadd.f32 0.0, %v1560
        %1562 = vdwg.mxu0
        %1563 = vmatpush.msra.mxu0 %v1409
        %1564 = vmatpush.msra.mxu0 %v1407
        %1565 = vmatpush.msra.mxu0 %v1405
        %1566 = vmatpush.msra.mxu0 %v1403
        %1567 = vmatpush.msra.mxu0 %v1401
        %1568 = vmatpush.msra.mxu0 %v1399
        %1569 = vmatpush.msra.mxu0 %v1397
        %1570 = vmatpush.msra.mxu0 %v1395
        %1571 = vmatpush.msra.mxu0 %v1393
        %1572 = vmatpush.msra.mxu0 %v1391
        %1573 = vmatpush.msra.mxu0 %v1389
        %1574 = vmatpush.msra.mxu0 %v1387
        %1575 = vmatpush.msra.mxu0 %v1385
        %1576 = vmatpush.msra.mxu0 %v1383
        %1577 = vmatpush.msra.mxu0 %v1381
        %1578 = vmatpush.msra.mxu0 %v1379
        %1579 = vmatmul.f32.gmra.mxu0 %v861
        %v1580 = vpop.f32.mrf.mxu0
        %v1581 = vadd.f32 %v1561, %v1580
        %1582 = vdwg.mxu0
        %1583 = vmatpush.msra.mxu0 %v1441
        %1584 = vmatpush.msra.mxu0 %v1439
        %1585 = vmatpush.msra.mxu0 %v1437
        %1586 = vmatpush.msra.mxu0 %v1435
        %1587 = vmatpush.msra.mxu0 %v1433
        %1588 = vmatpush.msra.mxu0 %v1431
        %1589 = vmatpush.msra.mxu0 %v1429
        %1590 = vmatpush.msra.mxu0 %v1427
        %1591 = vmatpush.msra.mxu0 %v1425
        %1592 = vmatpush.msra.mxu0 %v1423
        %1593 = vmatpush.msra.mxu0 %v1421
        %1594 = vmatpush.msra.mxu0 %v1419
        %1595 = vmatpush.msra.mxu0 %v1417
        %1596 = vmatpush.msra.mxu0 %v1415
        %1597 = vmatpush.msra.mxu0 %v1413
        %1598 = vmatpush.msra.mxu0 %v1411
        %1599 = vmatmul.f32.gmra.mxu0 %v862
        %v1600 = vpop.f32.mrf.mxu0
        %v1601 = vadd.f32 %v1581, %v1600
        %1602 = vdwg.mxu0
        %1603 = vmatpush.msra.mxu0 %v1473
        %1604 = vmatpush.msra.mxu0 %v1471
        %1605 = vmatpush.msra.mxu0 %v1469
        %1606 = vmatpush.msra.mxu0 %v1467
        %1607 = vmatpush.msra.mxu0 %v1465
        %1608 = vmatpush.msra.mxu0 %v1463
        %1609 = vmatpush.msra.mxu0 %v1461
        %1610 = vmatpush.msra.mxu0 %v1459
        %1611 = vmatpush.msra.mxu0 %v1457
        %1612 = vmatpush.msra.mxu0 %v1455
        %1613 = vmatpush.msra.mxu0 %v1453
        %1614 = vmatpush.msra.mxu0 %v1451
        %1615 = vmatpush.msra.mxu0 %v1449
        %1616 = vmatpush.msra.mxu0 %v1447
        %1617 = vmatpush.msra.mxu0 %v1445
        %1618 = vmatpush.msra.mxu0 %v1443
        %1619 = vmatmul.f32.gmra.mxu0 %v863
        %v1620 = vpop.f32.mrf.mxu0
        %v1621 = vadd.f32 %v1601, %v1620
        %1622 = vdwg.mxu0
        %1623 = vmatpush.msra.mxu0 %v1505
        %1624 = vmatpush.msra.mxu0 %v1503
        %1625 = vmatpush.msra.mxu0 %v1501
        %1626 = vmatpush.msra.mxu0 %v1499
        %1627 = vmatpush.msra.mxu0 %v1497
        %1628 = vmatpush.msra.mxu0 %v1495
        %1629 = vmatpush.msra.mxu0 %v1493
        %1630 = vmatpush.msra.mxu0 %v1491
        %1631 = vmatpush.msra.mxu0 %v1489
        %1632 = vmatpush.msra.mxu0 %v1487
        %1633 = vmatpush.msra.mxu0 %v1485
        %1634 = vmatpush.msra.mxu0 %v1483
        %1635 = vmatpush.msra.mxu0 %v1481
        %1636 = vmatpush.msra.mxu0 %v1479
        %1637 = vmatpush.msra.mxu0 %v1477
        %1638 = vmatpush.msra.mxu0 %v1475
        %1639 = vmatmul.f32.gmra.mxu0 %v864
        %v1640 = vpop.f32.mrf.mxu0
        %v1641 = vadd.f32 %v1621, %v1640
        %1642 = vdwg.mxu0
        %1643 = vmatpush.msra.mxu0 %v1537
        %1644 = vmatpush.msra.mxu0 %v1535
        %1645 = vmatpush.msra.mxu0 %v1533
        %1646 = vmatpush.msra.mxu0 %v1531
        %1647 = vmatpush.msra.mxu0 %v1529
        %1648 = vmatpush.msra.mxu0 %v1527
        %1649 = vmatpush.msra.mxu0 %v1525
        %1650 = vmatpush.msra.mxu0 %v1523
        %1651 = vmatpush.msra.mxu0 %v1521
        %1652 = vmatpush.msra.mxu0 %v1519
        %1653 = vmatpush.msra.mxu0 %v1517
        %1654 = vmatpush.msra.mxu0 %v1515
        %1655 = vmatpush.msra.mxu0 %v1513
        %1656 = vmatpush.msra.mxu0 %v1511
        %1657 = vmatpush.msra.mxu0 %v1509
        %1658 = vmatpush.msra.mxu0 %v1507
        %1659 = vmatmul.f32.gmra.mxu0 %v865
        %v1660 = vpop.f32.mrf.mxu0
        %v1661 = vadd.f32 %v1641, %v1660
        %1662 = vdwg.mxu0
        %1663 = vmatpush.msra.mxu0 0.0
        %1664 = vmatpush.msra.mxu0 0.0
        %1665 = vmatpush.msra.mxu0 0.0
        %1666 = vmatpush.msra.mxu0 0.0
        %1667 = vmatpush.msra.mxu0 0.0
        %1668 = vmatpush.msra.mxu0 0.0
        %1669 = vmatpush.msra.mxu0 0.0
        %1670 = vmatpush.msra.mxu0 0.0
        %1671 = vmatpush.msra.mxu0 0.0
        %1672 = vmatpush.msra.mxu0 0.0
        %1673 = vmatpush.msra.mxu0 0.0
        %1674 = vmatpush.msra.mxu0 0.0
        %1675 = vmatpush.msra.mxu0 0.0
        %1676 = vmatpush.msra.mxu0 0.0
        %1677 = vmatpush.msra.mxu0 %v1541
        %1678 = vmatpush.msra.mxu0 %v1539
        %1679 = vmatmul.f32.gmra.mxu0 %v1064
        %v1680 = vpop.f32.mrf.mxu0
        %v1681 = vadd.f32 %v1661, %v1680
        %1682 = vdwg.mxu0
        %1683 = vmatpush.msra.mxu0 %v1378
        %1684 = vmatpush.msra.mxu0 %v1376
        %1685 = vmatpush.msra.mxu0 %v1374
        %1686 = vmatpush.msra.mxu0 %v1372
        %1687 = vmatpush.msra.mxu0 %v1370
        %1688 = vmatpush.msra.mxu0 %v1368
        %1689 = vmatpush.msra.mxu0 %v1366
        %1690 = vmatpush.msra.mxu0 %v1364
        %1691 = vmatpush.msra.mxu0 %v1362
        %1692 = vmatpush.msra.mxu0 %v1360
        %1693 = vmatpush.msra.mxu0 %v1358
        %1694 = vmatpush.msra.mxu0 %v1356
        %1695 = vmatpush.msra.mxu0 %v1354
        %1696 = vmatpush.msra.mxu0 %v1352
        %1697 = vmatpush.msra.mxu0 %v1350
        %1698 = vmatpush.msra.mxu0 %v1348
        %1699 = vmatmul.f32.gmra.mxu0 %v860
        %v1700 = vpop.f32.mrf.mxu0
        %v1701 = vadd.f32 0.0, %v1700
        %1702 = vdwg.mxu0
        %1703 = vmatpush.msra.mxu0 %v1410
        %1704 = vmatpush.msra.mxu0 %v1408
        %1705 = vmatpush.msra.mxu0 %v1406
        %1706 = vmatpush.msra.mxu0 %v1404
        %1707 = vmatpush.msra.mxu0 %v1402
        %1708 = vmatpush.msra.mxu0 %v1400
        %1709 = vmatpush.msra.mxu0 %v1398
        %1710 = vmatpush.msra.mxu0 %v1396
        %1711 = vmatpush.msra.mxu0 %v1394
        %1712 = vmatpush.msra.mxu0 %v1392
        %1713 = vmatpush.msra.mxu0 %v1390
        %1714 = vmatpush.msra.mxu0 %v1388
        %1715 = vmatpush.msra.mxu0 %v1386
        %1716 = vmatpush.msra.mxu0 %v1384
        %1717 = vmatpush.msra.mxu0 %v1382
        %1718 = vmatpush.msra.mxu0 %v1380
        %1719 = vmatmul.f32.gmra.mxu0 %v861
        %v1720 = vpop.f32.mrf.mxu0
        %v1721 = vadd.f32 %v1701, %v1720
        %1722 = vdwg.mxu0
        %1723 = vmatpush.msra.mxu0 %v1442
        %1724 = vmatpush.msra.mxu0 %v1440
        %1725 = vmatpush.msra.mxu0 %v1438
        %1726 = vmatpush.msra.mxu0 %v1436
        %1727 = vmatpush.msra.mxu0 %v1434
        %1728 = vmatpush.msra.mxu0 %v1432
        %1729 = vmatpush.msra.mxu0 %v1430
        %1730 = vmatpush.msra.mxu0 %v1428
        %1731 = vmatpush.msra.mxu0 %v1426
        %1732 = vmatpush.msra.mxu0 %v1424
        %1733 = vmatpush.msra.mxu0 %v1422
        %1734 = vmatpush.msra.mxu0 %v1420
        %1735 = vmatpush.msra.mxu0 %v1418
        %1736 = vmatpush.msra.mxu0 %v1416
        %1737 = vmatpush.msra.mxu0 %v1414
        %1738 = vmatpush.msra.mxu0 %v1412
        %1739 = vmatmul.f32.gmra.mxu0 %v862
        %v1740 = vpop.f32.mrf.mxu0
        %v1741 = vadd.f32 %v1721, %v1740
        %1742 = vdwg.mxu0
        %1743 = vmatpush.msra.mxu0 %v1474
        %1744 = vmatpush.msra.mxu0 %v1472
        %1745 = vmatpush.msra.mxu0 %v1470
        %1746 = vmatpush.msra.mxu0 %v1468
        %1747 = vmatpush.msra.mxu0 %v1466
        %1748 = vmatpush.msra.mxu0 %v1464
        %1749 = vmatpush.msra.mxu0 %v1462
        %1750 = vmatpush.msra.mxu0 %v1460
        %1751 = vmatpush.msra.mxu0 %v1458
        %1752 = vmatpush.msra.mxu0 %v1456
        %1753 = vmatpush.msra.mxu0 %v1454
        %1754 = vmatpush.msra.mxu0 %v1452
        %1755 = vmatpush.msra.mxu0 %v1450
        %1756 = vmatpush.msra.mxu0 %v1448
        %1757 = vmatpush.msra.mxu0 %v1446
        %1758 = vmatpush.msra.mxu0 %v1444
        %1759 = vmatmul.f32.gmra.mxu0 %v863
        %v1760 = vpop.f32.mrf.mxu0
        %v1761 = vadd.f32 %v1741, %v1760
        %1762 = vdwg.mxu0
        %1763 = vmatpush.msra.mxu0 %v1506
        %1764 = vmatpush.msra.mxu0 %v1504
        %1765 = vmatpush.msra.mxu0 %v1502
        %1766 = vmatpush.msra.mxu0 %v1500
        %1767 = vmatpush.msra.mxu0 %v1498
        %1768 = vmatpush.msra.mxu0 %v1496
        %1769 = vmatpush.msra.mxu0 %v1494
        %1770 = vmatpush.msra.mxu0 %v1492
        %1771 = vmatpush.msra.mxu0 %v1490
        %1772 = vmatpush.msra.mxu0 %v1488
        %1773 = vmatpush.msra.mxu0 %v1486
        %1774 = vmatpush.msra.mxu0 %v1484
        %1775 = vmatpush.msra.mxu0 %v1482
        %1776 = vmatpush.msra.mxu0 %v1480
        %1777 = vmatpush.msra.mxu0 %v1478
        %1778 = vmatpush.msra.mxu0 %v1476
        %1779 = vmatmul.f32.gmra.mxu0 %v864
        %v1780 = vpop.f32.mrf.mxu0
        %v1781 = vadd.f32 %v1761, %v1780
        %1782 = vdwg.mxu0
        %1783 = vmatpush.msra.mxu0 %v1538
        %1784 = vmatpush.msra.mxu0 %v1536
        %1785 = vmatpush.msra.mxu0 %v1534
        %1786 = vmatpush.msra.mxu0 %v1532
        %1787 = vmatpush.msra.mxu0 %v1530
        %1788 = vmatpush.msra.mxu0 %v1528
        %1789 = vmatpush.msra.mxu0 %v1526
        %1790 = vmatpush.msra.mxu0 %v1524
        %1791 = vmatpush.msra.mxu0 %v1522
        %1792 = vmatpush.msra.mxu0 %v1520
        %1793 = vmatpush.msra.mxu0 %v1518
        %1794 = vmatpush.msra.mxu0 %v1516
        %1795 = vmatpush.msra.mxu0 %v1514
        %1796 = vmatpush.msra.mxu0 %v1512
        %1797 = vmatpush.msra.mxu0 %v1510
        %1798 = vmatpush.msra.mxu0 %v1508
        %1799 = vmatmul.f32.gmra.mxu0 %v865
        %v1800 = vpop.f32.mrf.mxu0
        %v1801 = vadd.f32 %v1781, %v1800
        %1802 = vdwg.mxu0
        %1803 = vmatpush.msra.mxu0 0.0
        %1804 = vmatpush.msra.mxu0 0.0
        %1805 = vmatpush.msra.mxu0 0.0
        %1806 = vmatpush.msra.mxu0 0.0
        %1807 = vmatpush.msra.mxu0 0.0
        %1808 = vmatpush.msra.mxu0 0.0
        %1809 = vmatpush.msra.mxu0 0.0
        %1810 = vmatpush.msra.mxu0 0.0
        %1811 = vmatpush.msra.mxu0 0.0
        %1812 = vmatpush.msra.mxu0 0.0
        %1813 = vmatpush.msra.mxu0 0.0
        %1814 = vmatpush.msra.mxu0 0.0
        %1815 = vmatpush.msra.mxu0 0.0
        %1816 = vmatpush.msra.mxu0 0.0
        %1817 = vmatpush.msra.mxu0 %v1542
        %1818 = vmatpush.msra.mxu0 %v1540
        %1819 = vmatmul.f32.gmra.mxu0 %v1064
        %v1820 = vpop.f32.mrf.mxu0
        %v1821 = vadd.f32 %v1801, %v1820
        %1822 = vdwg.mxu0
        %v1823 = vmax.f32 %v1204, %v1681
        %v1824 = vmax.f32 %v1344, %v1821
        %s1825 = scalar_lea.vmem %s3, 3136
        %v1826 = vld [vmem:[%s1825] sm:$0xff]
        %v1827 = vld [vmem:[%s1825 + $0x8] sm:$0xff]
        %v1828 = vld [vmem:[%s1825 + $0x10] sm:$0xff]
        %v1829 = vld [vmem:[%s1825 + $0x18] sm:$0xff]
        %v1830 = vld [vmem:[%s1825 + $0x20] sm:$0xff]
        %v1831 = vld [vmem:[%s1825 + $0x28] sm:$0xff]
        %v1832 = vld [vmem:[%s1825 + $0x30] sm:$0xff]
        %v1833 = vld [vmem:[%s1825 + $0x38] sm:$0xff]
        %v1834 = vld [vmem:[%s1825 + $0x40] sm:$0xff]
        %v1835 = vld [vmem:[%s1825 + $0x48] sm:$0xff]
        %v1836 = vld [vmem:[%s1825 + $0x50] sm:$0xff]
        %v1837 = vld [vmem:[%s1825 + $0x58] sm:$0xff]
        %v1838 = vld [vmem:[%s1825 + $0x60] sm:$0xff]
        %v1839 = vld [vmem:[%s1825 + $0x68] sm:$0xff]
        %v1840 = vld [vmem:[%s1825 + $0x70] sm:$0xff]
        %v1841 = vld [vmem:[%s1825 + $0x78] sm:$0xff]
        %v1842 = vld [vmem:[%s1825 + $0x80] sm:$0xff]
        %v1843 = vld [vmem:[%s1825 + $0x88] sm:$0xff]
        %v1844 = vld [vmem:[%s1825 + $0x90] sm:$0xff]
        %v1845 = vld [vmem:[%s1825 + $0x98] sm:$0xff]
        %v1846 = vld [vmem:[%s1825 + $0xa0] sm:$0xff]
        %v1847 = vld [vmem:[%s1825 + $0xa8] sm:$0xff]
        %v1848 = vld [vmem:[%s1825 + $0xb0] sm:$0xff]
        %v1849 = vld [vmem:[%s1825 + $0xb8] sm:$0xff]
        %v1850 = vld [vmem:[%s1825 + $0xc0] sm:$0xff]
        %v1851 = vld [vmem:[%s1825 + $0xc8] sm:$0xff]
        %v1852 = vld [vmem:[%s1825 + $0xd0] sm:$0xff]
        %v1853 = vld [vmem:[%s1825 + $0xd8] sm:$0xff]
        %v1854 = vld [vmem:[%s1825 + $0xe0] sm:$0xff]
        %v1855 = vld [vmem:[%s1825 + $0xe8] sm:$0xff]
        %v1856 = vld [vmem:[%s1825 + $0xf0] sm:$0xff]
        %v1857 = vld [vmem:[%s1825 + $0xf8] sm:$0xff]
        %v1858 = vld [vmem:[%s1825 + $0x100] sm:$0xff]
        %v1859 = vld [vmem:[%s1825 + $0x108] sm:$0xff]
        %v1860 = vld [vmem:[%s1825 + $0x110] sm:$0xff]
        %v1861 = vld [vmem:[%s1825 + $0x118] sm:$0xff]
        %v1862 = vld [vmem:[%s1825 + $0x120] sm:$0xff]
        %v1863 = vld [vmem:[%s1825 + $0x128] sm:$0xff]
        %v1864 = vld [vmem:[%s1825 + $0x130] sm:$0xff]
        %v1865 = vld [vmem:[%s1825 + $0x138] sm:$0xff]
        %v1866 = vld [vmem:[%s1825 + $0x140] sm:$0xff]
        %v1867 = vld [vmem:[%s1825 + $0x148] sm:$0xff]
        %v1868 = vld [vmem:[%s1825 + $0x150] sm:$0xff]
        %v1869 = vld [vmem:[%s1825 + $0x158] sm:$0xff]
        %v1870 = vld [vmem:[%s1825 + $0x160] sm:$0xff]
        %v1871 = vld [vmem:[%s1825 + $0x168] sm:$0xff]
        %v1872 = vld [vmem:[%s1825 + $0x170] sm:$0xff]
        %v1873 = vld [vmem:[%s1825 + $0x178] sm:$0xff]
        %v1874 = vld [vmem:[%s1825 + $0x180] sm:$0xff]
        %v1875 = vld [vmem:[%s1825 + $0x188] sm:$0xff]
        %v1876 = vld [vmem:[%s1825 + $0x190] sm:$0xff]
        %v1877 = vld [vmem:[%s1825 + $0x198] sm:$0xff]
        %v1878 = vld [vmem:[%s1825 + $0x1a0] sm:$0xff]
        %v1879 = vld [vmem:[%s1825 + $0x1a8] sm:$0xff]
        %v1880 = vld [vmem:[%s1825 + $0x1b0] sm:$0xff]
        %v1881 = vld [vmem:[%s1825 + $0x1b8] sm:$0xff]
        %v1882 = vld [vmem:[%s1825 + $0x1c0] sm:$0xff]
        %v1883 = vld [vmem:[%s1825 + $0x1c8] sm:$0xff]
        %v1884 = vld [vmem:[%s1825 + $0x1d0] sm:$0xff]
        %v1885 = vld [vmem:[%s1825 + $0x1d8] sm:$0xff]
        %v1886 = vld [vmem:[%s1825 + $0x1e0] sm:$0xff]
        %v1887 = vld [vmem:[%s1825 + $0x1e8] sm:$0xff]
        %v1888 = vld [vmem:[%s1825 + $0x1f0] sm:$0xff]
        %v1889 = vld [vmem:[%s1825 + $0x1f8] sm:$0xff]
        %v1890 = vld [vmem:[%s1825 + $0x200] sm:$0xff]
        %v1891 = vld [vmem:[%s1825 + $0x208] sm:$0xff]
        %v1892 = vld [vmem:[%s1825 + $0x210] sm:$0xff]
        %v1893 = vld [vmem:[%s1825 + $0x218] sm:$0xff]
        %v1894 = vld [vmem:[%s1825 + $0x220] sm:$0xff]
        %v1895 = vld [vmem:[%s1825 + $0x228] sm:$0xff]
        %v1896 = vld [vmem:[%s1825 + $0x230] sm:$0xff]
        %v1897 = vld [vmem:[%s1825 + $0x238] sm:$0xff]
        %v1898 = vld [vmem:[%s1825 + $0x240] sm:$0xff]
        %v1899 = vld [vmem:[%s1825 + $0x248] sm:$0xff]
        %v1900 = vld [vmem:[%s1825 + $0x250] sm:$0xff]
        %v1901 = vld [vmem:[%s1825 + $0x258] sm:$0xff]
        %v1902 = vld [vmem:[%s1825 + $0x260] sm:$0xff]
        %v1903 = vld [vmem:[%s1825 + $0x268] sm:$0xff]
        %v1904 = vld [vmem:[%s1825 + $0x270] sm:$0xff]
        %v1905 = vld [vmem:[%s1825 + $0x278] sm:$0xff]
        %v1906 = vld [vmem:[%s1825 + $0x280] sm:$0xff]
        %v1907 = vld [vmem:[%s1825 + $0x288] sm:$0xff]
        %v1908 = vld [vmem:[%s1825 + $0x290] sm:$0xff]
        %v1909 = vld [vmem:[%s1825 + $0x298] sm:$0xff]
        %v1910 = vld [vmem:[%s1825 + $0x2a0] sm:$0xff]
        %v1911 = vld [vmem:[%s1825 + $0x2a8] sm:$0xff]
        %v1912 = vld [vmem:[%s1825 + $0x2b0] sm:$0xff]
        %v1913 = vld [vmem:[%s1825 + $0x2b8] sm:$0xff]
        %v1914 = vld [vmem:[%s1825 + $0x2c0] sm:$0xff]
        %v1915 = vld [vmem:[%s1825 + $0x2c8] sm:$0xff]
        %v1916 = vld [vmem:[%s1825 + $0x2d0] sm:$0xff]
        %v1917 = vld [vmem:[%s1825 + $0x2d8] sm:$0xff]
        %v1918 = vld [vmem:[%s1825 + $0x2e0] sm:$0xff]
        %v1919 = vld [vmem:[%s1825 + $0x2e8] sm:$0xff]
        %v1920 = vld [vmem:[%s1825 + $0x2f0] sm:$0xff]
        %v1921 = vld [vmem:[%s1825 + $0x2f8] sm:$0xff]
        %v1922 = vld [vmem:[%s1825 + $0x300] sm:$0xff]
        %v1923 = vld [vmem:[%s1825 + $0x308] sm:$0xff]
        %v1924 = vld [vmem:[%s1825 + $0x310] sm:$0xff]
        %v1925 = vld [vmem:[%s1825 + $0x318] sm:$0xff]
        %v1926 = vld [vmem:[%s1825 + $0x320] sm:$0xff]
        %v1927 = vld [vmem:[%s1825 + $0x328] sm:$0xff]
        %v1928 = vld [vmem:[%s1825 + $0x330] sm:$0xff]
        %v1929 = vld [vmem:[%s1825 + $0x338] sm:$0xff]
        %v1930 = vld [vmem:[%s1825 + $0x340] sm:$0xff]
        %v1931 = vld [vmem:[%s1825 + $0x348] sm:$0xff]
        %v1932 = vld [vmem:[%s1825 + $0x350] sm:$0xff]
        %v1933 = vld [vmem:[%s1825 + $0x358] sm:$0xff]
        %v1934 = vld [vmem:[%s1825 + $0x360] sm:$0xff]
        %v1935 = vld [vmem:[%s1825 + $0x368] sm:$0xff]
        %v1936 = vld [vmem:[%s1825 + $0x370] sm:$0xff]
        %v1937 = vld [vmem:[%s1825 + $0x378] sm:$0xff]
        %v1938 = vld [vmem:[%s1825 + $0x380] sm:$0xff]
        %v1939 = vld [vmem:[%s1825 + $0x388] sm:$0xff]
        %v1940 = vld [vmem:[%s1825 + $0x390] sm:$0xff]
        %v1941 = vld [vmem:[%s1825 + $0x398] sm:$0xff]
        %v1942 = vld [vmem:[%s1825 + $0x3a0] sm:$0xff]
        %v1943 = vld [vmem:[%s1825 + $0x3a8] sm:$0xff]
        %v1944 = vld [vmem:[%s1825 + $0x3b0] sm:$0xff]
        %v1945 = vld [vmem:[%s1825 + $0x3b8] sm:$0xff]
        %v1946 = vld [vmem:[%s1825 + $0x3c0] sm:$0xff]
        %v1947 = vld [vmem:[%s1825 + $0x3c8] sm:$0xff]
        %v1948 = vld [vmem:[%s1825 + $0x3d0] sm:$0xff]
        %v1949 = vld [vmem:[%s1825 + $0x3d8] sm:$0xff]
        %v1950 = vld [vmem:[%s1825 + $0x3e0] sm:$0xff]
        %v1951 = vld [vmem:[%s1825 + $0x3e8] sm:$0xff]
        %v1952 = vld [vmem:[%s1825 + $0x3f0] sm:$0xff]
        %v1953 = vld [vmem:[%s1825 + $0x3f8] sm:$0xff]
        %v1954 = vld [vmem:[%s1825 + $0x400] sm:$0xff]
        %v1955 = vld [vmem:[%s1825 + $0x408] sm:$0xff]
        %v1956 = vld [vmem:[%s1825 + $0x410] sm:$0xff]
        %v1957 = vld [vmem:[%s1825 + $0x418] sm:$0xff]
        %v1958 = vld [vmem:[%s1825 + $0x420] sm:$0xff]
        %v1959 = vld [vmem:[%s1825 + $0x428] sm:$0xff]
        %v1960 = vld [vmem:[%s1825 + $0x430] sm:$0xff]
        %v1961 = vld [vmem:[%s1825 + $0x438] sm:$0xff]
        %v1962 = vld [vmem:[%s1825 + $0x440] sm:$0xff]
        %v1963 = vld [vmem:[%s1825 + $0x448] sm:$0xff]
        %v1964 = vld [vmem:[%s1825 + $0x450] sm:$0xff]
        %v1965 = vld [vmem:[%s1825 + $0x458] sm:$0xff]
        %v1966 = vld [vmem:[%s1825 + $0x460] sm:$0xff]
        %v1967 = vld [vmem:[%s1825 + $0x468] sm:$0xff]
        %v1968 = vld [vmem:[%s1825 + $0x470] sm:$0xff]
        %v1969 = vld [vmem:[%s1825 + $0x478] sm:$0xff]
        %v1970 = vld [vmem:[%s1825 + $0x480] sm:$0xff]
        %v1971 = vld [vmem:[%s1825 + $0x488] sm:$0xff]
        %v1972 = vld [vmem:[%s1825 + $0x490] sm:$0xff]
        %v1973 = vld [vmem:[%s1825 + $0x498] sm:$0xff]
        %v1974 = vld [vmem:[%s1825 + $0x4a0] sm:$0xff]
        %v1975 = vld [vmem:[%s1825 + $0x4a8] sm:$0xff]
        %v1976 = vld [vmem:[%s1825 + $0x4b0] sm:$0xff]
        %v1977 = vld [vmem:[%s1825 + $0x4b8] sm:$0xff]
        %v1978 = vld [vmem:[%s1825 + $0x4c0] sm:$0xff]
        %v1979 = vld [vmem:[%s1825 + $0x4c8] sm:$0xff]
        %v1980 = vld [vmem:[%s1825 + $0x4d0] sm:$0xff]
        %v1981 = vld [vmem:[%s1825 + $0x4d8] sm:$0xff]
        %v1982 = vld [vmem:[%s1825 + $0x4e0] sm:$0xff]
        %v1983 = vld [vmem:[%s1825 + $0x4e8] sm:$0xff]
        %v1984 = vld [vmem:[%s1825 + $0x4f0] sm:$0xff]
        %v1985 = vld [vmem:[%s1825 + $0x4f8] sm:$0xff]
        %v1986 = vld [vmem:[%s1825 + $0x500] sm:$0xff]
        %v1987 = vld [vmem:[%s1825 + $0x508] sm:$0xff]
        %v1988 = vld [vmem:[%s1825 + $0x510] sm:$0xff]
        %v1989 = vld [vmem:[%s1825 + $0x518] sm:$0xff]
        %v1990 = vld [vmem:[%s1825 + $0x520] sm:$0xff]
        %v1991 = vld [vmem:[%s1825 + $0x528] sm:$0xff]
        %v1992 = vld [vmem:[%s1825 + $0x530] sm:$0xff]
        %v1993 = vld [vmem:[%s1825 + $0x538] sm:$0xff]
        %v1994 = vld [vmem:[%s1825 + $0x540] sm:$0xff]
        %v1995 = vld [vmem:[%s1825 + $0x548] sm:$0xff]
        %v1996 = vld [vmem:[%s1825 + $0x550] sm:$0xff]
        %v1997 = vld [vmem:[%s1825 + $0x558] sm:$0xff]
        %v1998 = vld [vmem:[%s1825 + $0x560] sm:$0xff]
        %v1999 = vld [vmem:[%s1825 + $0x568] sm:$0xff]
        %v2000 = vld [vmem:[%s1825 + $0x570] sm:$0xff]
        %v2001 = vld [vmem:[%s1825 + $0x578] sm:$0xff]
        %v2002 = vld [vmem:[%s1825 + $0x580] sm:$0xff]
        %v2003 = vld [vmem:[%s1825 + $0x588] sm:$0xff]
        %v2004 = vld [vmem:[%s1825 + $0x590] sm:$0xff]
        %v2005 = vld [vmem:[%s1825 + $0x598] sm:$0xff]
        %v2006 = vld [vmem:[%s1825 + $0x5a0] sm:$0xff]
        %v2007 = vld [vmem:[%s1825 + $0x5a8] sm:$0xff]
        %v2008 = vld [vmem:[%s1825 + $0x5b0] sm:$0xff]
        %v2009 = vld [vmem:[%s1825 + $0x5b8] sm:$0xff]
        %v2010 = vld [vmem:[%s1825 + $0x5c0] sm:$0xff]
        %v2011 = vld [vmem:[%s1825 + $0x5c8] sm:$0xff]
        %v2012 = vld [vmem:[%s1825 + $0x5d0] sm:$0xff]
        %v2013 = vld [vmem:[%s1825 + $0x5d8] sm:$0xff]
        %v2014 = vld [vmem:[%s1825 + $0x5e0] sm:$0xff]
        %v2015 = vld [vmem:[%s1825 + $0x5e8] sm:$0xff]
        %v2016 = vld [vmem:[%s1825 + $0x5f0] sm:$0xff]
        %v2017 = vld [vmem:[%s1825 + $0x5f8] sm:$0xff]
        %v2018 = vld [vmem:[%s1825 + $0x600] sm:$0xff]
        %v2019 = vld [vmem:[%s1825 + $0x608] sm:$0xff]
        %v2020 = vld [vmem:[%s1825 + $0x610] sm:$0xff]
        %v2021 = vld [vmem:[%s1825 + $0x618] sm:$0xff]
        %2022 = vmatpush.msra.mxu0 %v1856
        %2023 = vmatpush.msra.mxu0 %v1854
        %2024 = vmatpush.msra.mxu0 %v1852
        %2025 = vmatpush.msra.mxu0 %v1850
        %2026 = vmatpush.msra.mxu0 %v1848
        %2027 = vmatpush.msra.mxu0 %v1846
        %2028 = vmatpush.msra.mxu0 %v1844
        %2029 = vmatpush.msra.mxu0 %v1842
        %2030 = vmatpush.msra.mxu0 %v1840
        %2031 = vmatpush.msra.mxu0 %v1838
        %2032 = vmatpush.msra.mxu0 %v1836
        %2033 = vmatpush.msra.mxu0 %v1834
        %2034 = vmatpush.msra.mxu0 %v1832
        %2035 = vmatpush.msra.mxu0 %v1830
        %2036 = vmatpush.msra.mxu0 %v1828
        %2037 = vmatpush.msra.mxu0 %v1826
        %2038 = vmatmul.f32.gmra.mxu0 %v860
        %v2039 = vpop.f32.mrf.mxu0
        %v2040 = vadd.f32 0.0, %v2039
        %2041 = vdwg.mxu0
        %2042 = vmatpush.msra.mxu0 %v1888
        %2043 = vmatpush.msra.mxu0 %v1886
        %2044 = vmatpush.msra.mxu0 %v1884
        %2045 = vmatpush.msra.mxu0 %v1882
        %2046 = vmatpush.msra.mxu0 %v1880
        %2047 = vmatpush.msra.mxu0 %v1878
        %2048 = vmatpush.msra.mxu0 %v1876
        %2049 = vmatpush.msra.mxu0 %v1874
        %2050 = vmatpush.msra.mxu0 %v1872
        %2051 = vmatpush.msra.mxu0 %v1870
        %2052 = vmatpush.msra.mxu0 %v1868
        %2053 = vmatpush.msra.mxu0 %v1866
        %2054 = vmatpush.msra.mxu0 %v1864
        %2055 = vmatpush.msra.mxu0 %v1862
        %2056 = vmatpush.msra.mxu0 %v1860
        %2057 = vmatpush.msra.mxu0 %v1858
        %2058 = vmatmul.f32.gmra.mxu0 %v861
        %v2059 = vpop.f32.mrf.mxu0
        %v2060 = vadd.f32 %v2040, %v2059
        %2061 = vdwg.mxu0
        %2062 = vmatpush.msra.mxu0 %v1920
        %2063 = vmatpush.msra.mxu0 %v1918
        %2064 = vmatpush.msra.mxu0 %v1916
        %2065 = vmatpush.msra.mxu0 %v1914
        %2066 = vmatpush.msra.mxu0 %v1912
        %2067 = vmatpush.msra.mxu0 %v1910
        %2068 = vmatpush.msra.mxu0 %v1908
        %2069 = vmatpush.msra.mxu0 %v1906
        %2070 = vmatpush.msra.mxu0 %v1904
        %2071 = vmatpush.msra.mxu0 %v1902
        %2072 = vmatpush.msra.mxu0 %v1900
        %2073 = vmatpush.msra.mxu0 %v1898
        %2074 = vmatpush.msra.mxu0 %v1896
        %2075 = vmatpush.msra.mxu0 %v1894
        %2076 = vmatpush.msra.mxu0 %v1892
        %2077 = vmatpush.msra.mxu0 %v1890
        %2078 = vmatmul.f32.gmra.mxu0 %v862
        %v2079 = vpop.f32.mrf.mxu0
        %v2080 = vadd.f32 %v2060, %v2079
        %2081 = vdwg.mxu0
        %2082 = vmatpush.msra.mxu0 %v1952
        %2083 = vmatpush.msra.mxu0 %v1950
        %2084 = vmatpush.msra.mxu0 %v1948
        %2085 = vmatpush.msra.mxu0 %v1946
        %2086 = vmatpush.msra.mxu0 %v1944
        %2087 = vmatpush.msra.mxu0 %v1942
        %2088 = vmatpush.msra.mxu0 %v1940
        %2089 = vmatpush.msra.mxu0 %v1938
        %2090 = vmatpush.msra.mxu0 %v1936
        %2091 = vmatpush.msra.mxu0 %v1934
        %2092 = vmatpush.msra.mxu0 %v1932
        %2093 = vmatpush.msra.mxu0 %v1930
        %2094 = vmatpush.msra.mxu0 %v1928
        %2095 = vmatpush.msra.mxu0 %v1926
        %2096 = vmatpush.msra.mxu0 %v1924
        %2097 = vmatpush.msra.mxu0 %v1922
        %2098 = vmatmul.f32.gmra.mxu0 %v863
        %v2099 = vpop.f32.mrf.mxu0
        %v2100 = vadd.f32 %v2080, %v2099
        %2101 = vdwg.mxu0
        %2102 = vmatpush.msra.mxu0 %v1984
        %2103 = vmatpush.msra.mxu0 %v1982
        %2104 = vmatpush.msra.mxu0 %v1980
        %2105 = vmatpush.msra.mxu0 %v1978
        %2106 = vmatpush.msra.mxu0 %v1976
        %2107 = vmatpush.msra.mxu0 %v1974
        %2108 = vmatpush.msra.mxu0 %v1972
        %2109 = vmatpush.msra.mxu0 %v1970
        %2110 = vmatpush.msra.mxu0 %v1968
        %2111 = vmatpush.msra.mxu0 %v1966
        %2112 = vmatpush.msra.mxu0 %v1964
        %2113 = vmatpush.msra.mxu0 %v1962
        %2114 = vmatpush.msra.mxu0 %v1960
        %2115 = vmatpush.msra.mxu0 %v1958
        %2116 = vmatpush.msra.mxu0 %v1956
        %2117 = vmatpush.msra.mxu0 %v1954
        %2118 = vmatmul.f32.gmra.mxu0 %v864
        %v2119 = vpop.f32.mrf.mxu0
        %v2120 = vadd.f32 %v2100, %v2119
        %2121 = vdwg.mxu0
        %2122 = vmatpush.msra.mxu0 %v2016
        %2123 = vmatpush.msra.mxu0 %v2014
        %2124 = vmatpush.msra.mxu0 %v2012
        %2125 = vmatpush.msra.mxu0 %v2010
        %2126 = vmatpush.msra.mxu0 %v2008
        %2127 = vmatpush.msra.mxu0 %v2006
        %2128 = vmatpush.msra.mxu0 %v2004
        %2129 = vmatpush.msra.mxu0 %v2002
        %2130 = vmatpush.msra.mxu0 %v2000
        %2131 = vmatpush.msra.mxu0 %v1998
        %2132 = vmatpush.msra.mxu0 %v1996
        %2133 = vmatpush.msra.mxu0 %v1994
        %2134 = vmatpush.msra.mxu0 %v1992
        %2135 = vmatpush.msra.mxu0 %v1990
        %2136 = vmatpush.msra.mxu0 %v1988
        %2137 = vmatpush.msra.mxu0 %v1986
        %2138 = vmatmul.f32.gmra.mxu0 %v865
        %v2139 = vpop.f32.mrf.mxu0
        %v2140 = vadd.f32 %v2120, %v2139
        %2141 = vdwg.mxu0
        %2142 = vmatpush.msra.mxu0 0.0
        %2143 = vmatpush.msra.mxu0 0.0
        %2144 = vmatpush.msra.mxu0 0.0
        %2145 = vmatpush.msra.mxu0 0.0
        %2146 = vmatpush.msra.mxu0 0.0
        %2147 = vmatpush.msra.mxu0 0.0
        %2148 = vmatpush.msra.mxu0 0.0
        %2149 = vmatpush.msra.mxu0 0.0
        %2150 = vmatpush.msra.mxu0 0.0
        %2151 = vmatpush.msra.mxu0 0.0
        %2152 = vmatpush.msra.mxu0 0.0
        %2153 = vmatpush.msra.mxu0 0.0
        %2154 = vmatpush.msra.mxu0 0.0
        %2155 = vmatpush.msra.mxu0 0.0
        %2156 = vmatpush.msra.mxu0 %v2020
        %2157 = vmatpush.msra.mxu0 %v2018
        %2158 = vmatmul.f32.gmra.mxu0 %v1064
        %v2159 = vpop.f32.mrf.mxu0
        %v2160 = vadd.f32 %v2140, %v2159
        %2161 = vdwg.mxu0
        %2162 = vmatpush.msra.mxu0 %v1857
        %2163 = vmatpush.msra.mxu0 %v1855
        %2164 = vmatpush.msra.mxu0 %v1853
        %2165 = vmatpush.msra.mxu0 %v1851
        %2166 = vmatpush.msra.mxu0 %v1849
        %2167 = vmatpush.msra.mxu0 %v1847
        %2168 = vmatpush.msra.mxu0 %v1845
        %2169 = vmatpush.msra.mxu0 %v1843
        %2170 = vmatpush.msra.mxu0 %v1841
        %2171 = vmatpush.msra.mxu0 %v1839
        %2172 = vmatpush.msra.mxu0 %v1837
        %2173 = vmatpush.msra.mxu0 %v1835
        %2174 = vmatpush.msra.mxu0 %v1833
        %2175 = vmatpush.msra.mxu0 %v1831
        %2176 = vmatpush.msra.mxu0 %v1829
        %2177 = vmatpush.msra.mxu0 %v1827
        %2178 = vmatmul.f32.gmra.mxu0 %v860
        %v2179 = vpop.f32.mrf.mxu0
        %v2180 = vadd.f32 0.0, %v2179
        %2181 = vdwg.mxu0
        %2182 = vmatpush.msra.mxu0 %v1889
        %2183 = vmatpush.msra.mxu0 %v1887
        %2184 = vmatpush.msra.mxu0 %v1885
        %2185 = vmatpush.msra.mxu0 %v1883
        %2186 = vmatpush.msra.mxu0 %v1881
        %2187 = vmatpush.msra.mxu0 %v1879
        %2188 = vmatpush.msra.mxu0 %v1877
        %2189 = vmatpush.msra.mxu0 %v1875
        %2190 = vmatpush.msra.mxu0 %v1873
        %2191 = vmatpush.msra.mxu0 %v1871
        %2192 = vmatpush.msra.mxu0 %v1869
        %2193 = vmatpush.msra.mxu0 %v1867
        %2194 = vmatpush.msra.mxu0 %v1865
        %2195 = vmatpush.msra.mxu0 %v1863
        %2196 = vmatpush.msra.mxu0 %v1861
        %2197 = vmatpush.msra.mxu0 %v1859
        %2198 = vmatmul.f32.gmra.mxu0 %v861
        %v2199 = vpop.f32.mrf.mxu0
        %v2200 = vadd.f32 %v2180, %v2199
        %2201 = vdwg.mxu0
        %2202 = vmatpush.msra.mxu0 %v1921
        %2203 = vmatpush.msra.mxu0 %v1919
        %2204 = vmatpush.msra.mxu0 %v1917
        %2205 = vmatpush.msra.mxu0 %v1915
        %2206 = vmatpush.msra.mxu0 %v1913
        %2207 = vmatpush.msra.mxu0 %v1911
        %2208 = vmatpush.msra.mxu0 %v1909
        %2209 = vmatpush.msra.mxu0 %v1907
        %2210 = vmatpush.msra.mxu0 %v1905
        %2211 = vmatpush.msra.mxu0 %v1903
        %2212 = vmatpush.msra.mxu0 %v1901
        %2213 = vmatpush.msra.mxu0 %v1899
        %2214 = vmatpush.msra.mxu0 %v1897
        %2215 = vmatpush.msra.mxu0 %v1895
        %2216 = vmatpush.msra.mxu0 %v1893
        %2217 = vmatpush.msra.mxu0 %v1891
        %2218 = vmatmul.f32.gmra.mxu0 %v862
        %v2219 = vpop.f32.mrf.mxu0
        %v2220 = vadd.f32 %v2200, %v2219
        %2221 = vdwg.mxu0
        %2222 = vmatpush.msra.mxu0 %v1953
        %2223 = vmatpush.msra.mxu0 %v1951
        %2224 = vmatpush.msra.mxu0 %v1949
        %2225 = vmatpush.msra.mxu0 %v1947
        %2226 = vmatpush.msra.mxu0 %v1945
        %2227 = vmatpush.msra.mxu0 %v1943
        %2228 = vmatpush.msra.mxu0 %v1941
        %2229 = vmatpush.msra.mxu0 %v1939
        %2230 = vmatpush.msra.mxu0 %v1937
        %2231 = vmatpush.msra.mxu0 %v1935
        %2232 = vmatpush.msra.mxu0 %v1933
        %2233 = vmatpush.msra.mxu0 %v1931
        %2234 = vmatpush.msra.mxu0 %v1929
        %2235 = vmatpush.msra.mxu0 %v1927
        %2236 = vmatpush.msra.mxu0 %v1925
        %2237 = vmatpush.msra.mxu0 %v1923
        %2238 = vmatmul.f32.gmra.mxu0 %v863
        %v2239 = vpop.f32.mrf.mxu0
        %v2240 = vadd.f32 %v2220, %v2239
        %2241 = vdwg.mxu0
        %2242 = vmatpush.msra.mxu0 %v1985
        %2243 = vmatpush.msra.mxu0 %v1983
        %2244 = vmatpush.msra.mxu0 %v1981
        %2245 = vmatpush.msra.mxu0 %v1979
        %2246 = vmatpush.msra.mxu0 %v1977
        %2247 = vmatpush.msra.mxu0 %v1975
        %2248 = vmatpush.msra.mxu0 %v1973
        %2249 = vmatpush.msra.mxu0 %v1971
        %2250 = vmatpush.msra.mxu0 %v1969
        %2251 = vmatpush.msra.mxu0 %v1967
        %2252 = vmatpush.msra.mxu0 %v1965
        %2253 = vmatpush.msra.mxu0 %v1963
        %2254 = vmatpush.msra.mxu0 %v1961
        %2255 = vmatpush.msra.mxu0 %v1959
        %2256 = vmatpush.msra.mxu0 %v1957
        %2257 = vmatpush.msra.mxu0 %v1955
        %2258 = vmatmul.f32.gmra.mxu0 %v864
        %v2259 = vpop.f32.mrf.mxu0
        %v2260 = vadd.f32 %v2240, %v2259
        %2261 = vdwg.mxu0
        %2262 = vmatpush.msra.mxu0 %v2017
        %2263 = vmatpush.msra.mxu0 %v2015
        %2264 = vmatpush.msra.mxu0 %v2013
        %2265 = vmatpush.msra.mxu0 %v2011
        %2266 = vmatpush.msra.mxu0 %v2009
        %2267 = vmatpush.msra.mxu0 %v2007
        %2268 = vmatpush.msra.mxu0 %v2005
        %2269 = vmatpush.msra.mxu0 %v2003
        %2270 = vmatpush.msra.mxu0 %v2001
        %2271 = vmatpush.msra.mxu0 %v1999
        %2272 = vmatpush.msra.mxu0 %v1997
        %2273 = vmatpush.msra.mxu0 %v1995
        %2274 = vmatpush.msra.mxu0 %v1993
        %2275 = vmatpush.msra.mxu0 %v1991
        %2276 = vmatpush.msra.mxu0 %v1989
        %2277 = vmatpush.msra.mxu0 %v1987
        %2278 = vmatmul.f32.gmra.mxu0 %v865
        %v2279 = vpop.f32.mrf.mxu0
        %v2280 = vadd.f32 %v2260, %v2279
        %2281 = vdwg.mxu0
        %2282 = vmatpush.msra.mxu0 0.0
        %2283 = vmatpush.msra.mxu0 0.0
        %2284 = vmatpush.msra.mxu0 0.0
        %2285 = vmatpush.msra.mxu0 0.0
        %2286 = vmatpush.msra.mxu0 0.0
        %2287 = vmatpush.msra.mxu0 0.0
        %2288 = vmatpush.msra.mxu0 0.0
        %2289 = vmatpush.msra.mxu0 0.0
        %2290 = vmatpush.msra.mxu0 0.0
        %2291 = vmatpush.msra.mxu0 0.0
        %2292 = vmatpush.msra.mxu0 0.0
        %2293 = vmatpush.msra.mxu0 0.0
        %2294 = vmatpush.msra.mxu0 0.0
        %2295 = vmatpush.msra.mxu0 0.0
        %2296 = vmatpush.msra.mxu0 %v2021
        %2297 = vmatpush.msra.mxu0 %v2019
        %2298 = vmatmul.f32.gmra.mxu0 %v1064
        %v2299 = vpop.f32.mrf.mxu0
        %v2300 = vadd.f32 %v2280, %v2299
        %2301 = vdwg.mxu0
        %s2302 = scalar_lea.vmem %s3, 4704
        %v2303 = vld [vmem:[%s2302] sm:$0xff]
        %v2304 = vld [vmem:[%s2302 + $0x8] sm:$0xff]
        %v2305 = vld [vmem:[%s2302 + $0x10] sm:$0xff]
        %v2306 = vld [vmem:[%s2302 + $0x18] sm:$0xff]
        %v2307 = vld [vmem:[%s2302 + $0x20] sm:$0xff]
        %v2308 = vld [vmem:[%s2302 + $0x28] sm:$0xff]
        %v2309 = vld [vmem:[%s2302 + $0x30] sm:$0xff]
        %v2310 = vld [vmem:[%s2302 + $0x38] sm:$0xff]
        %v2311 = vld [vmem:[%s2302 + $0x40] sm:$0xff]
        %v2312 = vld [vmem:[%s2302 + $0x48] sm:$0xff]
        %v2313 = vld [vmem:[%s2302 + $0x50] sm:$0xff]
        %v2314 = vld [vmem:[%s2302 + $0x58] sm:$0xff]
        %v2315 = vld [vmem:[%s2302 + $0x60] sm:$0xff]
        %v2316 = vld [vmem:[%s2302 + $0x68] sm:$0xff]
        %v2317 = vld [vmem:[%s2302 + $0x70] sm:$0xff]
        %v2318 = vld [vmem:[%s2302 + $0x78] sm:$0xff]
        %v2319 = vld [vmem:[%s2302 + $0x80] sm:$0xff]
        %v2320 = vld [vmem:[%s2302 + $0x88] sm:$0xff]
        %v2321 = vld [vmem:[%s2302 + $0x90] sm:$0xff]
        %v2322 = vld [vmem:[%s2302 + $0x98] sm:$0xff]
        %v2323 = vld [vmem:[%s2302 + $0xa0] sm:$0xff]
        %v2324 = vld [vmem:[%s2302 + $0xa8] sm:$0xff]
        %v2325 = vld [vmem:[%s2302 + $0xb0] sm:$0xff]
        %v2326 = vld [vmem:[%s2302 + $0xb8] sm:$0xff]
        %v2327 = vld [vmem:[%s2302 + $0xc0] sm:$0xff]
        %v2328 = vld [vmem:[%s2302 + $0xc8] sm:$0xff]
        %v2329 = vld [vmem:[%s2302 + $0xd0] sm:$0xff]
        %v2330 = vld [vmem:[%s2302 + $0xd8] sm:$0xff]
        %v2331 = vld [vmem:[%s2302 + $0xe0] sm:$0xff]
        %v2332 = vld [vmem:[%s2302 + $0xe8] sm:$0xff]
        %v2333 = vld [vmem:[%s2302 + $0xf0] sm:$0xff]
        %v2334 = vld [vmem:[%s2302 + $0xf8] sm:$0xff]
        %v2335 = vld [vmem:[%s2302 + $0x100] sm:$0xff]
        %v2336 = vld [vmem:[%s2302 + $0x108] sm:$0xff]
        %v2337 = vld [vmem:[%s2302 + $0x110] sm:$0xff]
        %v2338 = vld [vmem:[%s2302 + $0x118] sm:$0xff]
        %v2339 = vld [vmem:[%s2302 + $0x120] sm:$0xff]
        %v2340 = vld [vmem:[%s2302 + $0x128] sm:$0xff]
        %v2341 = vld [vmem:[%s2302 + $0x130] sm:$0xff]
        %v2342 = vld [vmem:[%s2302 + $0x138] sm:$0xff]
        %v2343 = vld [vmem:[%s2302 + $0x140] sm:$0xff]
        %v2344 = vld [vmem:[%s2302 + $0x148] sm:$0xff]
        %v2345 = vld [vmem:[%s2302 + $0x150] sm:$0xff]
        %v2346 = vld [vmem:[%s2302 + $0x158] sm:$0xff]
        %v2347 = vld [vmem:[%s2302 + $0x160] sm:$0xff]
        %v2348 = vld [vmem:[%s2302 + $0x168] sm:$0xff]
        %v2349 = vld [vmem:[%s2302 + $0x170] sm:$0xff]
        %v2350 = vld [vmem:[%s2302 + $0x178] sm:$0xff]
        %v2351 = vld [vmem:[%s2302 + $0x180] sm:$0xff]
        %v2352 = vld [vmem:[%s2302 + $0x188] sm:$0xff]
        %v2353 = vld [vmem:[%s2302 + $0x190] sm:$0xff]
        %v2354 = vld [vmem:[%s2302 + $0x198] sm:$0xff]
        %v2355 = vld [vmem:[%s2302 + $0x1a0] sm:$0xff]
        %v2356 = vld [vmem:[%s2302 + $0x1a8] sm:$0xff]
        %v2357 = vld [vmem:[%s2302 + $0x1b0] sm:$0xff]
        %v2358 = vld [vmem:[%s2302 + $0x1b8] sm:$0xff]
        %v2359 = vld [vmem:[%s2302 + $0x1c0] sm:$0xff]
        %v2360 = vld [vmem:[%s2302 + $0x1c8] sm:$0xff]
        %v2361 = vld [vmem:[%s2302 + $0x1d0] sm:$0xff]
        %v2362 = vld [vmem:[%s2302 + $0x1d8] sm:$0xff]
        %v2363 = vld [vmem:[%s2302 + $0x1e0] sm:$0xff]
        %v2364 = vld [vmem:[%s2302 + $0x1e8] sm:$0xff]
        %v2365 = vld [vmem:[%s2302 + $0x1f0] sm:$0xff]
        %v2366 = vld [vmem:[%s2302 + $0x1f8] sm:$0xff]
        %v2367 = vld [vmem:[%s2302 + $0x200] sm:$0xff]
        %v2368 = vld [vmem:[%s2302 + $0x208] sm:$0xff]
        %v2369 = vld [vmem:[%s2302 + $0x210] sm:$0xff]
        %v2370 = vld [vmem:[%s2302 + $0x218] sm:$0xff]
        %v2371 = vld [vmem:[%s2302 + $0x220] sm:$0xff]
        %v2372 = vld [vmem:[%s2302 + $0x228] sm:$0xff]
        %v2373 = vld [vmem:[%s2302 + $0x230] sm:$0xff]
        %v2374 = vld [vmem:[%s2302 + $0x238] sm:$0xff]
        %v2375 = vld [vmem:[%s2302 + $0x240] sm:$0xff]
        %v2376 = vld [vmem:[%s2302 + $0x248] sm:$0xff]
        %v2377 = vld [vmem:[%s2302 + $0x250] sm:$0xff]
        %v2378 = vld [vmem:[%s2302 + $0x258] sm:$0xff]
        %v2379 = vld [vmem:[%s2302 + $0x260] sm:$0xff]
        %v2380 = vld [vmem:[%s2302 + $0x268] sm:$0xff]
        %v2381 = vld [vmem:[%s2302 + $0x270] sm:$0xff]
        %v2382 = vld [vmem:[%s2302 + $0x278] sm:$0xff]
        %v2383 = vld [vmem:[%s2302 + $0x280] sm:$0xff]
        %v2384 = vld [vmem:[%s2302 + $0x288] sm:$0xff]
        %v2385 = vld [vmem:[%s2302 + $0x290] sm:$0xff]
        %v2386 = vld [vmem:[%s2302 + $0x298] sm:$0xff]
        %v2387 = vld [vmem:[%s2302 + $0x2a0] sm:$0xff]
        %v2388 = vld [vmem:[%s2302 + $0x2a8] sm:$0xff]
        %v2389 = vld [vmem:[%s2302 + $0x2b0] sm:$0xff]
        %v2390 = vld [vmem:[%s2302 + $0x2b8] sm:$0xff]
        %v2391 = vld [vmem:[%s2302 + $0x2c0] sm:$0xff]
        %v2392 = vld [vmem:[%s2302 + $0x2c8] sm:$0xff]
        %v2393 = vld [vmem:[%s2302 + $0x2d0] sm:$0xff]
        %v2394 = vld [vmem:[%s2302 + $0x2d8] sm:$0xff]
        %v2395 = vld [vmem:[%s2302 + $0x2e0] sm:$0xff]
        %v2396 = vld [vmem:[%s2302 + $0x2e8] sm:$0xff]
        %v2397 = vld [vmem:[%s2302 + $0x2f0] sm:$0xff]
        %v2398 = vld [vmem:[%s2302 + $0x2f8] sm:$0xff]
        %v2399 = vld [vmem:[%s2302 + $0x300] sm:$0xff]
        %v2400 = vld [vmem:[%s2302 + $0x308] sm:$0xff]
        %v2401 = vld [vmem:[%s2302 + $0x310] sm:$0xff]
        %v2402 = vld [vmem:[%s2302 + $0x318] sm:$0xff]
        %v2403 = vld [vmem:[%s2302 + $0x320] sm:$0xff]
        %v2404 = vld [vmem:[%s2302 + $0x328] sm:$0xff]
        %v2405 = vld [vmem:[%s2302 + $0x330] sm:$0xff]
        %v2406 = vld [vmem:[%s2302 + $0x338] sm:$0xff]
        %v2407 = vld [vmem:[%s2302 + $0x340] sm:$0xff]
        %v2408 = vld [vmem:[%s2302 + $0x348] sm:$0xff]
        %v2409 = vld [vmem:[%s2302 + $0x350] sm:$0xff]
        %v2410 = vld [vmem:[%s2302 + $0x358] sm:$0xff]
        %v2411 = vld [vmem:[%s2302 + $0x360] sm:$0xff]
        %v2412 = vld [vmem:[%s2302 + $0x368] sm:$0xff]
        %v2413 = vld [vmem:[%s2302 + $0x370] sm:$0xff]
        %v2414 = vld [vmem:[%s2302 + $0x378] sm:$0xff]
        %v2415 = vld [vmem:[%s2302 + $0x380] sm:$0xff]
        %v2416 = vld [vmem:[%s2302 + $0x388] sm:$0xff]
        %v2417 = vld [vmem:[%s2302 + $0x390] sm:$0xff]
        %v2418 = vld [vmem:[%s2302 + $0x398] sm:$0xff]
        %v2419 = vld [vmem:[%s2302 + $0x3a0] sm:$0xff]
        %v2420 = vld [vmem:[%s2302 + $0x3a8] sm:$0xff]
        %v2421 = vld [vmem:[%s2302 + $0x3b0] sm:$0xff]
        %v2422 = vld [vmem:[%s2302 + $0x3b8] sm:$0xff]
        %v2423 = vld [vmem:[%s2302 + $0x3c0] sm:$0xff]
        %v2424 = vld [vmem:[%s2302 + $0x3c8] sm:$0xff]
        %v2425 = vld [vmem:[%s2302 + $0x3d0] sm:$0xff]
        %v2426 = vld [vmem:[%s2302 + $0x3d8] sm:$0xff]
        %v2427 = vld [vmem:[%s2302 + $0x3e0] sm:$0xff]
        %v2428 = vld [vmem:[%s2302 + $0x3e8] sm:$0xff]
        %v2429 = vld [vmem:[%s2302 + $0x3f0] sm:$0xff]
        %v2430 = vld [vmem:[%s2302 + $0x3f8] sm:$0xff]
        %v2431 = vld [vmem:[%s2302 + $0x400] sm:$0xff]
        %v2432 = vld [vmem:[%s2302 + $0x408] sm:$0xff]
        %v2433 = vld [vmem:[%s2302 + $0x410] sm:$0xff]
        %v2434 = vld [vmem:[%s2302 + $0x418] sm:$0xff]
        %v2435 = vld [vmem:[%s2302 + $0x420] sm:$0xff]
        %v2436 = vld [vmem:[%s2302 + $0x428] sm:$0xff]
        %v2437 = vld [vmem:[%s2302 + $0x430] sm:$0xff]
        %v2438 = vld [vmem:[%s2302 + $0x438] sm:$0xff]
        %v2439 = vld [vmem:[%s2302 + $0x440] sm:$0xff]
        %v2440 = vld [vmem:[%s2302 + $0x448] sm:$0xff]
        %v2441 = vld [vmem:[%s2302 + $0x450] sm:$0xff]
        %v2442 = vld [vmem:[%s2302 + $0x458] sm:$0xff]
        %v2443 = vld [vmem:[%s2302 + $0x460] sm:$0xff]
        %v2444 = vld [vmem:[%s2302 + $0x468] sm:$0xff]
        %v2445 = vld [vmem:[%s2302 + $0x470] sm:$0xff]
        %v2446 = vld [vmem:[%s2302 + $0x478] sm:$0xff]
        %v2447 = vld [vmem:[%s2302 + $0x480] sm:$0xff]
        %v2448 = vld [vmem:[%s2302 + $0x488] sm:$0xff]
        %v2449 = vld [vmem:[%s2302 + $0x490] sm:$0xff]
        %v2450 = vld [vmem:[%s2302 + $0x498] sm:$0xff]
        %v2451 = vld [vmem:[%s2302 + $0x4a0] sm:$0xff]
        %v2452 = vld [vmem:[%s2302 + $0x4a8] sm:$0xff]
        %v2453 = vld [vmem:[%s2302 + $0x4b0] sm:$0xff]
        %v2454 = vld [vmem:[%s2302 + $0x4b8] sm:$0xff]
        %v2455 = vld [vmem:[%s2302 + $0x4c0] sm:$0xff]
        %v2456 = vld [vmem:[%s2302 + $0x4c8] sm:$0xff]
        %v2457 = vld [vmem:[%s2302 + $0x4d0] sm:$0xff]
        %v2458 = vld [vmem:[%s2302 + $0x4d8] sm:$0xff]
        %v2459 = vld [vmem:[%s2302 + $0x4e0] sm:$0xff]
        %v2460 = vld [vmem:[%s2302 + $0x4e8] sm:$0xff]
        %v2461 = vld [vmem:[%s2302 + $0x4f0] sm:$0xff]
        %v2462 = vld [vmem:[%s2302 + $0x4f8] sm:$0xff]
        %v2463 = vld [vmem:[%s2302 + $0x500] sm:$0xff]
        %v2464 = vld [vmem:[%s2302 + $0x508] sm:$0xff]
        %v2465 = vld [vmem:[%s2302 + $0x510] sm:$0xff]
        %v2466 = vld [vmem:[%s2302 + $0x518] sm:$0xff]
        %v2467 = vld [vmem:[%s2302 + $0x520] sm:$0xff]
        %v2468 = vld [vmem:[%s2302 + $0x528] sm:$0xff]
        %v2469 = vld [vmem:[%s2302 + $0x530] sm:$0xff]
        %v2470 = vld [vmem:[%s2302 + $0x538] sm:$0xff]
        %v2471 = vld [vmem:[%s2302 + $0x540] sm:$0xff]
        %v2472 = vld [vmem:[%s2302 + $0x548] sm:$0xff]
        %v2473 = vld [vmem:[%s2302 + $0x550] sm:$0xff]
        %v2474 = vld [vmem:[%s2302 + $0x558] sm:$0xff]
        %v2475 = vld [vmem:[%s2302 + $0x560] sm:$0xff]
        %v2476 = vld [vmem:[%s2302 + $0x568] sm:$0xff]
        %v2477 = vld [vmem:[%s2302 + $0x570] sm:$0xff]
        %v2478 = vld [vmem:[%s2302 + $0x578] sm:$0xff]
        %v2479 = vld [vmem:[%s2302 + $0x580] sm:$0xff]
        %v2480 = vld [vmem:[%s2302 + $0x588] sm:$0xff]
        %v2481 = vld [vmem:[%s2302 + $0x590] sm:$0xff]
        %v2482 = vld [vmem:[%s2302 + $0x598] sm:$0xff]
        %v2483 = vld [vmem:[%s2302 + $0x5a0] sm:$0xff]
        %v2484 = vld [vmem:[%s2302 + $0x5a8] sm:$0xff]
        %v2485 = vld [vmem:[%s2302 + $0x5b0] sm:$0xff]
        %v2486 = vld [vmem:[%s2302 + $0x5b8] sm:$0xff]
        %v2487 = vld [vmem:[%s2302 + $0x5c0] sm:$0xff]
        %v2488 = vld [vmem:[%s2302 + $0x5c8] sm:$0xff]
        %v2489 = vld [vmem:[%s2302 + $0x5d0] sm:$0xff]
        %v2490 = vld [vmem:[%s2302 + $0x5d8] sm:$0xff]
        %v2491 = vld [vmem:[%s2302 + $0x5e0] sm:$0xff]
        %v2492 = vld [vmem:[%s2302 + $0x5e8] sm:$0xff]
        %v2493 = vld [vmem:[%s2302 + $0x5f0] sm:$0xff]
        %v2494 = vld [vmem:[%s2302 + $0x5f8] sm:$0xff]
        %v2495 = vld [vmem:[%s2302 + $0x600] sm:$0xff]
        %v2496 = vld [vmem:[%s2302 + $0x608] sm:$0xff]
        %v2497 = vld [vmem:[%s2302 + $0x610] sm:$0xff]
        %v2498 = vld [vmem:[%s2302 + $0x618] sm:$0xff]
        %2499 = vmatpush.msra.mxu0 %v2333
        %2500 = vmatpush.msra.mxu0 %v2331
        %2501 = vmatpush.msra.mxu0 %v2329
        %2502 = vmatpush.msra.mxu0 %v2327
        %2503 = vmatpush.msra.mxu0 %v2325
        %2504 = vmatpush.msra.mxu0 %v2323
        %2505 = vmatpush.msra.mxu0 %v2321
        %2506 = vmatpush.msra.mxu0 %v2319
        %2507 = vmatpush.msra.mxu0 %v2317
        %2508 = vmatpush.msra.mxu0 %v2315
        %2509 = vmatpush.msra.mxu0 %v2313
        %2510 = vmatpush.msra.mxu0 %v2311
        %2511 = vmatpush.msra.mxu0 %v2309
        %2512 = vmatpush.msra.mxu0 %v2307
        %2513 = vmatpush.msra.mxu0 %v2305
        %2514 = vmatpush.msra.mxu0 %v2303
        %2515 = vmatmul.f32.gmra.mxu0 %v860
        %v2516 = vpop.f32.mrf.mxu0
        %v2517 = vadd.f32 0.0, %v2516
        %2518 = vdwg.mxu0
        %2519 = vmatpush.msra.mxu0 %v2365
        %2520 = vmatpush.msra.mxu0 %v2363
        %2521 = vmatpush.msra.mxu0 %v2361
        %2522 = vmatpush.msra.mxu0 %v2359
        %2523 = vmatpush.msra.mxu0 %v2357
        %2524 = vmatpush.msra.mxu0 %v2355
        %2525 = vmatpush.msra.mxu0 %v2353
        %2526 = vmatpush.msra.mxu0 %v2351
        %2527 = vmatpush.msra.mxu0 %v2349
        %2528 = vmatpush.msra.mxu0 %v2347
        %2529 = vmatpush.msra.mxu0 %v2345
        %2530 = vmatpush.msra.mxu0 %v2343
        %2531 = vmatpush.msra.mxu0 %v2341
        %2532 = vmatpush.msra.mxu0 %v2339
        %2533 = vmatpush.msra.mxu0 %v2337
        %2534 = vmatpush.msra.mxu0 %v2335
        %2535 = vmatmul.f32.gmra.mxu0 %v861
        %v2536 = vpop.f32.mrf.mxu0
        %v2537 = vadd.f32 %v2517, %v2536
        %2538 = vdwg.mxu0
        %2539 = vmatpush.msra.mxu0 %v2397
        %2540 = vmatpush.msra.mxu0 %v2395
        %2541 = vmatpush.msra.mxu0 %v2393
        %2542 = vmatpush.msra.mxu0 %v2391
        %2543 = vmatpush.msra.mxu0 %v2389
        %2544 = vmatpush.msra.mxu0 %v2387
        %2545 = vmatpush.msra.mxu0 %v2385
        %2546 = vmatpush.msra.mxu0 %v2383
        %2547 = vmatpush.msra.mxu0 %v2381
        %2548 = vmatpush.msra.mxu0 %v2379
        %2549 = vmatpush.msra.mxu0 %v2377
        %2550 = vmatpush.msra.mxu0 %v2375
        %2551 = vmatpush.msra.mxu0 %v2373
        %2552 = vmatpush.msra.mxu0 %v2371
        %2553 = vmatpush.msra.mxu0 %v2369
        %2554 = vmatpush.msra.mxu0 %v2367
        %2555 = vmatmul.f32.gmra.mxu0 %v862
        %v2556 = vpop.f32.mrf.mxu0
        %v2557 = vadd.f32 %v2537, %v2556
        %2558 = vdwg.mxu0
        %2559 = vmatpush.msra.mxu0 %v2429
        %2560 = vmatpush.msra.mxu0 %v2427
        %2561 = vmatpush.msra.mxu0 %v2425
        %2562 = vmatpush.msra.mxu0 %v2423
        %2563 = vmatpush.msra.mxu0 %v2421
        %2564 = vmatpush.msra.mxu0 %v2419
        %2565 = vmatpush.msra.mxu0 %v2417
        %2566 = vmatpush.msra.mxu0 %v2415
        %2567 = vmatpush.msra.mxu0 %v2413
        %2568 = vmatpush.msra.mxu0 %v2411
        %2569 = vmatpush.msra.mxu0 %v2409
        %2570 = vmatpush.msra.mxu0 %v2407
        %2571 = vmatpush.msra.mxu0 %v2405
        %2572 = vmatpush.msra.mxu0 %v2403
        %2573 = vmatpush.msra.mxu0 %v2401
        %2574 = vmatpush.msra.mxu0 %v2399
        %2575 = vmatmul.f32.gmra.mxu0 %v863
        %v2576 = vpop.f32.mrf.mxu0
        %v2577 = vadd.f32 %v2557, %v2576
        %2578 = vdwg.mxu0
        %2579 = vmatpush.msra.mxu0 %v2461
        %2580 = vmatpush.msra.mxu0 %v2459
        %2581 = vmatpush.msra.mxu0 %v2457
        %2582 = vmatpush.msra.mxu0 %v2455
        %2583 = vmatpush.msra.mxu0 %v2453
        %2584 = vmatpush.msra.mxu0 %v2451
        %2585 = vmatpush.msra.mxu0 %v2449
        %2586 = vmatpush.msra.mxu0 %v2447
        %2587 = vmatpush.msra.mxu0 %v2445
        %2588 = vmatpush.msra.mxu0 %v2443
        %2589 = vmatpush.msra.mxu0 %v2441
        %2590 = vmatpush.msra.mxu0 %v2439
        %2591 = vmatpush.msra.mxu0 %v2437
        %2592 = vmatpush.msra.mxu0 %v2435
        %2593 = vmatpush.msra.mxu0 %v2433
        %2594 = vmatpush.msra.mxu0 %v2431
        %2595 = vmatmul.f32.gmra.mxu0 %v864
        %v2596 = vpop.f32.mrf.mxu0
        %v2597 = vadd.f32 %v2577, %v2596
        %2598 = vdwg.mxu0
        %2599 = vmatpush.msra.mxu0 %v2493
        %2600 = vmatpush.msra.mxu0 %v2491
        %2601 = vmatpush.msra.mxu0 %v2489
        %2602 = vmatpush.msra.mxu0 %v2487
        %2603 = vmatpush.msra.mxu0 %v2485
        %2604 = vmatpush.msra.mxu0 %v2483
        %2605 = vmatpush.msra.mxu0 %v2481
        %2606 = vmatpush.msra.mxu0 %v2479
        %2607 = vmatpush.msra.mxu0 %v2477
        %2608 = vmatpush.msra.mxu0 %v2475
        %2609 = vmatpush.msra.mxu0 %v2473
        %2610 = vmatpush.msra.mxu0 %v2471
        %2611 = vmatpush.msra.mxu0 %v2469
        %2612 = vmatpush.msra.mxu0 %v2467
        %2613 = vmatpush.msra.mxu0 %v2465
        %2614 = vmatpush.msra.mxu0 %v2463
        %2615 = vmatmul.f32.gmra.mxu0 %v865
        %v2616 = vpop.f32.mrf.mxu0
        %v2617 = vadd.f32 %v2597, %v2616
        %2618 = vdwg.mxu0
        %2619 = vmatpush.msra.mxu0 0.0
        %2620 = vmatpush.msra.mxu0 0.0
        %2621 = vmatpush.msra.mxu0 0.0
        %2622 = vmatpush.msra.mxu0 0.0
        %2623 = vmatpush.msra.mxu0 0.0
        %2624 = vmatpush.msra.mxu0 0.0
        %2625 = vmatpush.msra.mxu0 0.0
        %2626 = vmatpush.msra.mxu0 0.0
        %2627 = vmatpush.msra.mxu0 0.0
        %2628 = vmatpush.msra.mxu0 0.0
        %2629 = vmatpush.msra.mxu0 0.0
        %2630 = vmatpush.msra.mxu0 0.0
        %2631 = vmatpush.msra.mxu0 0.0
        %2632 = vmatpush.msra.mxu0 0.0
        %2633 = vmatpush.msra.mxu0 %v2497
        %2634 = vmatpush.msra.mxu0 %v2495
        %2635 = vmatmul.f32.gmra.mxu0 %v1064
        %v2636 = vpop.f32.mrf.mxu0
        %v2637 = vadd.f32 %v2617, %v2636
        %2638 = vdwg.mxu0
        %2639 = vmatpush.msra.mxu0 %v2334
        %2640 = vmatpush.msra.mxu0 %v2332
        %2641 = vmatpush.msra.mxu0 %v2330
        %2642 = vmatpush.msra.mxu0 %v2328
        %2643 = vmatpush.msra.mxu0 %v2326
        %2644 = vmatpush.msra.mxu0 %v2324
        %2645 = vmatpush.msra.mxu0 %v2322
        %2646 = vmatpush.msra.mxu0 %v2320
        %2647 = vmatpush.msra.mxu0 %v2318
        %2648 = vmatpush.msra.mxu0 %v2316
        %2649 = vmatpush.msra.mxu0 %v2314
        %2650 = vmatpush.msra.mxu0 %v2312
        %2651 = vmatpush.msra.mxu0 %v2310
        %2652 = vmatpush.msra.mxu0 %v2308
        %2653 = vmatpush.msra.mxu0 %v2306
        %2654 = vmatpush.msra.mxu0 %v2304
        %2655 = vmatmul.f32.gmra.mxu0 %v860
        %v2656 = vpop.f32.mrf.mxu0
        %v2657 = vadd.f32 0.0, %v2656
        %2658 = vdwg.mxu0
        %2659 = vmatpush.msra.mxu0 %v2366
        %2660 = vmatpush.msra.mxu0 %v2364
        %2661 = vmatpush.msra.mxu0 %v2362
        %2662 = vmatpush.msra.mxu0 %v2360
        %2663 = vmatpush.msra.mxu0 %v2358
        %2664 = vmatpush.msra.mxu0 %v2356
        %2665 = vmatpush.msra.mxu0 %v2354
        %2666 = vmatpush.msra.mxu0 %v2352
        %2667 = vmatpush.msra.mxu0 %v2350
        %2668 = vmatpush.msra.mxu0 %v2348
        %2669 = vmatpush.msra.mxu0 %v2346
        %2670 = vmatpush.msra.mxu0 %v2344
        %2671 = vmatpush.msra.mxu0 %v2342
        %2672 = vmatpush.msra.mxu0 %v2340
        %2673 = vmatpush.msra.mxu0 %v2338
        %2674 = vmatpush.msra.mxu0 %v2336
        %2675 = vmatmul.f32.gmra.mxu0 %v861
        %v2676 = vpop.f32.mrf.mxu0
        %v2677 = vadd.f32 %v2657, %v2676
        %2678 = vdwg.mxu0
        %2679 = vmatpush.msra.mxu0 %v2398
        %2680 = vmatpush.msra.mxu0 %v2396
        %2681 = vmatpush.msra.mxu0 %v2394
        %2682 = vmatpush.msra.mxu0 %v2392
        %2683 = vmatpush.msra.mxu0 %v2390
        %2684 = vmatpush.msra.mxu0 %v2388
        %2685 = vmatpush.msra.mxu0 %v2386
        %2686 = vmatpush.msra.mxu0 %v2384
        %2687 = vmatpush.msra.mxu0 %v2382
        %2688 = vmatpush.msra.mxu0 %v2380
        %2689 = vmatpush.msra.mxu0 %v2378
        %2690 = vmatpush.msra.mxu0 %v2376
        %2691 = vmatpush.msra.mxu0 %v2374
        %2692 = vmatpush.msra.mxu0 %v2372
        %2693 = vmatpush.msra.mxu0 %v2370
        %2694 = vmatpush.msra.mxu0 %v2368
        %2695 = vmatmul.f32.gmra.mxu0 %v862
        %v2696 = vpop.f32.mrf.mxu0
        %v2697 = vadd.f32 %v2677, %v2696
        %2698 = vdwg.mxu0
        %2699 = vmatpush.msra.mxu0 %v2430
        %2700 = vmatpush.msra.mxu0 %v2428
        %2701 = vmatpush.msra.mxu0 %v2426
        %2702 = vmatpush.msra.mxu0 %v2424
        %2703 = vmatpush.msra.mxu0 %v2422
        %2704 = vmatpush.msra.mxu0 %v2420
        %2705 = vmatpush.msra.mxu0 %v2418
        %2706 = vmatpush.msra.mxu0 %v2416
        %2707 = vmatpush.msra.mxu0 %v2414
        %2708 = vmatpush.msra.mxu0 %v2412
        %2709 = vmatpush.msra.mxu0 %v2410
        %2710 = vmatpush.msra.mxu0 %v2408
        %2711 = vmatpush.msra.mxu0 %v2406
        %2712 = vmatpush.msra.mxu0 %v2404
        %2713 = vmatpush.msra.mxu0 %v2402
        %2714 = vmatpush.msra.mxu0 %v2400
        %2715 = vmatmul.f32.gmra.mxu0 %v863
        %v2716 = vpop.f32.mrf.mxu0
        %v2717 = vadd.f32 %v2697, %v2716
        %2718 = vdwg.mxu0
        %2719 = vmatpush.msra.mxu0 %v2462
        %2720 = vmatpush.msra.mxu0 %v2460
        %2721 = vmatpush.msra.mxu0 %v2458
        %2722 = vmatpush.msra.mxu0 %v2456
        %2723 = vmatpush.msra.mxu0 %v2454
        %2724 = vmatpush.msra.mxu0 %v2452
        %2725 = vmatpush.msra.mxu0 %v2450
        %2726 = vmatpush.msra.mxu0 %v2448
        %2727 = vmatpush.msra.mxu0 %v2446
        %2728 = vmatpush.msra.mxu0 %v2444
        %2729 = vmatpush.msra.mxu0 %v2442
        %2730 = vmatpush.msra.mxu0 %v2440
        %2731 = vmatpush.msra.mxu0 %v2438
        %2732 = vmatpush.msra.mxu0 %v2436
        %2733 = vmatpush.msra.mxu0 %v2434
        %2734 = vmatpush.msra.mxu0 %v2432
        %2735 = vmatmul.f32.gmra.mxu0 %v864
        %v2736 = vpop.f32.mrf.mxu0
        %v2737 = vadd.f32 %v2717, %v2736
        %2738 = vdwg.mxu0
        %2739 = vmatpush.msra.mxu0 %v2494
        %2740 = vmatpush.msra.mxu0 %v2492
        %2741 = vmatpush.msra.mxu0 %v2490
        %2742 = vmatpush.msra.mxu0 %v2488
        %2743 = vmatpush.msra.mxu0 %v2486
        %2744 = vmatpush.msra.mxu0 %v2484
        %2745 = vmatpush.msra.mxu0 %v2482
        %2746 = vmatpush.msra.mxu0 %v2480
        %2747 = vmatpush.msra.mxu0 %v2478
        %2748 = vmatpush.msra.mxu0 %v2476
        %2749 = vmatpush.msra.mxu0 %v2474
        %2750 = vmatpush.msra.mxu0 %v2472
        %2751 = vmatpush.msra.mxu0 %v2470
        %2752 = vmatpush.msra.mxu0 %v2468
        %2753 = vmatpush.msra.mxu0 %v2466
        %2754 = vmatpush.msra.mxu0 %v2464
        %2755 = vmatmul.f32.gmra.mxu0 %v865
        %v2756 = vpop.f32.mrf.mxu0
        %v2757 = vadd.f32 %v2737, %v2756
        %2758 = vdwg.mxu0
        %2759 = vmatpush.msra.mxu0 0.0
        %2760 = vmatpush.msra.mxu0 0.0
        %2761 = vmatpush.msra.mxu0 0.0
        %2762 = vmatpush.msra.mxu0 0.0
        %2763 = vmatpush.msra.mxu0 0.0
        %2764 = vmatpush.msra.mxu0 0.0
        %2765 = vmatpush.msra.mxu0 0.0
        %2766 = vmatpush.msra.mxu0 0.0
        %2767 = vmatpush.msra.mxu0 0.0
        %2768 = vmatpush.msra.mxu0 0.0
        %2769 = vmatpush.msra.mxu0 0.0
        %2770 = vmatpush.msra.mxu0 0.0
        %2771 = vmatpush.msra.mxu0 0.0
        %2772 = vmatpush.msra.mxu0 0.0
        %2773 = vmatpush.msra.mxu0 %v2498
        %2774 = vmatpush.msra.mxu0 %v2496
        %2775 = vmatmul.f32.gmra.mxu0 %v1064
        %v2776 = vpop.f32.mrf.mxu0
        %v2777 = vadd.f32 %v2757, %v2776
        %2778 = vdwg.mxu0
        %v2779 = vmax.f32 %v2160, %v2637
        %v2780 = vmax.f32 %v2300, %v2777
        %v2781 = vmax.f32 %v1823, %v2779
        %v2782 = vmax.f32 %v1824, %v2780
        %2783 = vst [vmem:[#allocation3] sm:$0x3f] %v2781
        %vm2784 = vcmask 128000
        %2785 = vst.msk [vmem:[#allocation3 + $0x8] sm:$0x3f] %vm2784, %v2782
        %v2788 = vrot.slane %v2781, 2
        %v2789 = vrot.slane %v2782, 2
        %2790 = vrot.lane.b32.xlu0 %v2788, 127
        %v2791 = vpop.permute.xlu0 %2790
        %2792 = vrot.lane.b32.xlu0 %v2789, 127
        %v2793 = vpop.permute.xlu0 %2792
        %v2794 = vsel %vm446, %v2791, %v2793
        %2797 = vst [vmem:[#allocation3] sm:$0xc0] %v2794
        %vm2798 = vcmask 130054
        %2799 = vst.msk [vmem:[#allocation3 + $0x8] sm:$0xc0] %vm2798, %v2793
        %2800 = vst [vmem:[#allocation3 + $0x10] sm:$0xf] %v2794
        %vm2801 = vcmask 125952
        %2802 = vst.msk [vmem:[#allocation3 + $0x18] sm:$0xf] %vm2801, %v2793
        %v2803 = vrot.slane %v2781, 4
        %v2804 = vrot.slane %v2782, 4
        %2805 = vrot.lane.b32.xlu0 %v2803, 126
        %v2806 = vpop.permute.xlu0 %2805
        %2807 = vrot.lane.b32.xlu0 %v2804, 126
        %v2808 = vpop.permute.xlu0 %2807
        %v2809 = vsel %vm455, %v2806, %v2808
        %2812 = vst [vmem:[#allocation3 + $0x10] sm:$0xf0] %v2809
        %vm2813 = vcmask 130052
        %2814 = vst.msk [vmem:[#allocation3 + $0x18] sm:$0xf0] %vm2813, %v2808
        %2815 = vst [vmem:[#allocation3 + $0x20] sm:$0x3] %v2809
        %vm2816 = vcmask 123904
        %2817 = vst.msk [vmem:[#allocation3 + $0x28] sm:$0x3] %vm2816, %v2808
        %v2818 = vrot.slane %v2781, 6
        %v2819 = vrot.slane %v2782, 6
        %2820 = vrot.lane.b32.xlu0 %v2818, 125
        %v2821 = vpop.permute.xlu0 %2820
        %2822 = vrot.lane.b32.xlu0 %v2819, 125
        %v2823 = vpop.permute.xlu0 %2822
        %v2824 = vsel %vm464, %v2821, %v2823
        %2827 = vst [vmem:[#allocation3 + $0x20] sm:$0xfc] %v2824
        %vm2828 = vcmask 130050
        %2829 = vst.msk [vmem:[#allocation3 + $0x28] sm:$0xfc] %vm2828, %v2823
        %2830 = vrot.lane.b32.xlu0 %v2781, 124
        %v2831 = vpop.permute.xlu0 %2830
        %2832 = vrot.lane.b32.xlu0 %v2782, 124
        %v2833 = vpop.permute.xlu0 %2832
        %v2834 = vsel %vm473, %v2831, %v2833
        %2837 = vst [vmem:[#allocation3 + $0x30] sm:$0x3f] %v2834
        %2838 = vst.msk [vmem:[#allocation3 + $0x38] sm:$0x3f] %vm2784, %v2833
        %2839 = vrot.lane.b32.xlu0 %v2788, 116
        %v2840 = vpop.permute.xlu0 %2839
        %2841 = vrot.lane.b32.xlu0 %v2789, 116
        %v2842 = vpop.permute.xlu0 %2841
        %vm2843 = vcmask 949248
        %v2844 = vsel %vm2843, %v2840, %v2842
        %2847 = vst [vmem:[#allocation3 + $0x30] sm:$0xc0] %v2844
        %2848 = vst.msk [vmem:[#allocation3 + $0x38] sm:$0xc0] %vm2798, %v2842
        %2849 = vst [vmem:[#allocation3 + $0x40] sm:$0xf] %v2844
        %2850 = vst.msk [vmem:[#allocation3 + $0x48] sm:$0xf] %vm2801, %v2842
        %2851 = vrot.lane.b32.xlu0 %v2803, 115
        %v2852 = vpop.permute.xlu0 %2851
        %2853 = vrot.lane.b32.xlu0 %v2804, 115
        %v2854 = vpop.permute.xlu0 %2853
        %vm2855 = vcmask 941056
        %v2856 = vsel %vm2855, %v2852, %v2854
        %2859 = vst [vmem:[#allocation3 + $0x40] sm:$0xf0] %v2856
        %2860 = vst.msk [vmem:[#allocation3 + $0x48] sm:$0xf0] %vm2813, %v2854
        %2861 = vst [vmem:[#allocation3 + $0x50] sm:$0x3] %v2856
        %2862 = vst.msk [vmem:[#allocation3 + $0x58] sm:$0x3] %vm2816, %v2854
        %2863 = vrot.lane.b32.xlu0 %v2818, 114
        %v2864 = vpop.permute.xlu0 %2863
        %2865 = vrot.lane.b32.xlu0 %v2819, 114
        %v2866 = vpop.permute.xlu0 %2865
        %vm2867 = vcmask 932864
        %v2868 = vsel %vm2867, %v2864, %v2866
        %2871 = vst [vmem:[#allocation3 + $0x50] sm:$0xfc] %v2868
        %2872 = vst.msk [vmem:[#allocation3 + $0x58] sm:$0xfc] %vm2828, %v2866
        %2873 = vrot.lane.b32.xlu0 %v2781, 113
        %v2874 = vpop.permute.xlu0 %2873
        %2875 = vrot.lane.b32.xlu0 %v2782, 113
        %v2876 = vpop.permute.xlu0 %2875
        %vm2877 = vcmask 924672
        %v2878 = vsel %vm2877, %v2874, %v2876
        %2881 = vst [vmem:[#allocation3 + $0x60] sm:$0x3f] %v2878
        %2882 = vst.msk [vmem:[#allocation3 + $0x68] sm:$0x3f] %vm2784, %v2876
        %2883 = vrot.lane.b32.xlu0 %v2788, 112
        %v2884 = vpop.permute.xlu0 %2883
        %2885 = vrot.lane.b32.xlu0 %v2789, 112
        %v2886 = vpop.permute.xlu0 %2885
        %vm2887 = vcmask 916480
        %v2888 = vsel %vm2887, %v2884, %v2886
        %2891 = vst [vmem:[#allocation3 + $0x60] sm:$0xc0] %v2888
        %2892 = vst.msk [vmem:[#allocation3 + $0x68] sm:$0xc0] %vm2798, %v2886
        %2893 = vst [vmem:[#allocation3 + $0x70] sm:$0xf] %v2888
        %2894 = vst.msk [vmem:[#allocation3 + $0x78] sm:$0xf] %vm2801, %v2886
        %2895 = vrot.lane.b32.xlu0 %v2803, 104
        %v2896 = vpop.permute.xlu0 %2895
        %2897 = vrot.lane.b32.xlu0 %v2804, 104
        %v2898 = vpop.permute.xlu0 %2897
        %vm2899 = vcmask 850944
        %v2900 = vsel %vm2899, %v2896, %v2898
        %2903 = vst [vmem:[#allocation3 + $0x70] sm:$0xf0] %v2900
        %2904 = vst.msk [vmem:[#allocation3 + $0x78] sm:$0xf0] %vm2813, %v2898
        %2905 = vst [vmem:[#allocation3 + $0x80] sm:$0x3] %v2900
        %2906 = vst.msk [vmem:[#allocation3 + $0x88] sm:$0x3] %vm2816, %v2898
        %2907 = vrot.lane.b32.xlu0 %v2818, 103
        %v2908 = vpop.permute.xlu0 %2907
        %2909 = vrot.lane.b32.xlu0 %v2819, 103
        %v2910 = vpop.permute.xlu0 %2909
        %vm2911 = vcmask 842752
        %v2912 = vsel %vm2911, %v2908, %v2910
        %2915 = vst [vmem:[#allocation3 + $0x80] sm:$0xfc] %v2912
        %2916 = vst.msk [vmem:[#allocation3 + $0x88] sm:$0xfc] %vm2828, %v2910
        %2917 = vrot.lane.b32.xlu0 %v2781, 102
        %v2918 = vpop.permute.xlu0 %2917
        %2919 = vrot.lane.b32.xlu0 %v2782, 102
        %v2920 = vpop.permute.xlu0 %2919
        %vm2921 = vcmask 834560
        %v2922 = vsel %vm2921, %v2918, %v2920
        %2925 = vst [vmem:[#allocation3 + $0x90] sm:$0x3f] %v2922
        %2926 = vst.msk [vmem:[#allocation3 + $0x98] sm:$0x3f] %vm2784, %v2920
        %2927 = vrot.lane.b32.xlu0 %v2788, 101
        %v2928 = vpop.permute.xlu0 %2927
        %2929 = vrot.lane.b32.xlu0 %v2789, 101
        %v2930 = vpop.permute.xlu0 %2929
        %vm2931 = vcmask 826368
        %v2932 = vsel %vm2931, %v2928, %v2930
        %2935 = vst [vmem:[#allocation3 + $0x90] sm:$0xc0] %v2932
        %2936 = vst.msk [vmem:[#allocation3 + $0x98] sm:$0xc0] %vm2798, %v2930
        %2937 = vst [vmem:[#allocation3 + $0xa0] sm:$0xf] %v2932
        %2938 = vst.msk [vmem:[#allocation3 + $0xa8] sm:$0xf] %vm2801, %v2930
        %2939 = vrot.lane.b32.xlu0 %v2803, 100
        %v2940 = vpop.permute.xlu0 %2939
        %2941 = vrot.lane.b32.xlu0 %v2804, 100
        %v2942 = vpop.permute.xlu0 %2941
        %v2943 = vsel %vm482, %v2940, %v2942
        %2946 = vst [vmem:[#allocation3 + $0xa0] sm:$0xf0] %v2943
        %2947 = vst.msk [vmem:[#allocation3 + $0xa8] sm:$0xf0] %vm2813, %v2942
        %2948 = vst [vmem:[#allocation3 + $0xb0] sm:$0x3] %v2943
        %2949 = vst.msk [vmem:[#allocation3 + $0xb8] sm:$0x3] %vm2816, %v2942
        %2950 = vrot.lane.b32.xlu0 %v2818, 92
        %v2951 = vpop.permute.xlu0 %2950
        %2952 = vrot.lane.b32.xlu0 %v2819, 92
        %v2953 = vpop.permute.xlu0 %2952
        %vm2954 = vcmask 752640
        %v2955 = vsel %vm2954, %v2951, %v2953
        %2958 = vst [vmem:[#allocation3 + $0xb0] sm:$0xfc] %v2955
        %2959 = vst.msk [vmem:[#allocation3 + $0xb8] sm:$0xfc] %vm2828, %v2953
        %2960 = vrot.lane.b32.xlu0 %v2781, 91
        %v2961 = vpop.permute.xlu0 %2960
        %2962 = vrot.lane.b32.xlu0 %v2782, 91
        %v2963 = vpop.permute.xlu0 %2962
        %vm2964 = vcmask 744448
        %v2965 = vsel %vm2964, %v2961, %v2963
        %2968 = vst [vmem:[#allocation3 + $0xc0] sm:$0x3f] %v2965
        %2969 = vst.msk [vmem:[#allocation3 + $0xc8] sm:$0x3f] %vm2784, %v2963
        %2970 = vrot.lane.b32.xlu0 %v2788, 90
        %v2971 = vpop.permute.xlu0 %2970
        %2972 = vrot.lane.b32.xlu0 %v2789, 90
        %v2973 = vpop.permute.xlu0 %2972
        %vm2974 = vcmask 736256
        %v2975 = vsel %vm2974, %v2971, %v2973
        %2978 = vst [vmem:[#allocation3 + $0xc0] sm:$0xc0] %v2975
        %2979 = vst.msk [vmem:[#allocation3 + $0xc8] sm:$0xc0] %vm2798, %v2973
        %2980 = vst [vmem:[#allocation3 + $0xd0] sm:$0xf] %v2975
        %2981 = vst.msk [vmem:[#allocation3 + $0xd8] sm:$0xf] %vm2801, %v2973
        %2982 = vrot.lane.b32.xlu0 %v2803, 89
        %v2983 = vpop.permute.xlu0 %2982
        %2984 = vrot.lane.b32.xlu0 %v2804, 89
        %v2985 = vpop.permute.xlu0 %2984
        %vm2986 = vcmask 728064
        %v2987 = vsel %vm2986, %v2983, %v2985
        %2990 = vst [vmem:[#allocation3 + $0xd0] sm:$0xf0] %v2987
        %2991 = vst.msk [vmem:[#allocation3 + $0xd8] sm:$0xf0] %vm2813, %v2985
        %2992 = vst [vmem:[#allocation3 + $0xe0] sm:$0x3] %v2987
        %2993 = vst.msk [vmem:[#allocation3 + $0xe8] sm:$0x3] %vm2816, %v2985
        %2994 = vrot.lane.b32.xlu0 %v2818, 88
        %v2995 = vpop.permute.xlu0 %2994
        %2996 = vrot.lane.b32.xlu0 %v2819, 88
        %v2997 = vpop.permute.xlu0 %2996
        %vm2998 = vcmask 719872
        %v2999 = vsel %vm2998, %v2995, %v2997
        %3002 = vst [vmem:[#allocation3 + $0xe0] sm:$0xfc] %v2999
        %3003 = vst.msk [vmem:[#allocation3 + $0xe8] sm:$0xfc] %vm2828, %v2997
        %3004 = vrot.lane.b32.xlu0 %v2781, 80
        %v3005 = vpop.permute.xlu0 %3004
        %3006 = vrot.lane.b32.xlu0 %v2782, 80
        %v3007 = vpop.permute.xlu0 %3006
        %vm3008 = vcmask 654336
        %v3009 = vsel %vm3008, %v3005, %v3007
        %3012 = vst [vmem:[#allocation3 + $0xf0] sm:$0x3f] %v3009
        %3013 = vst.msk [vmem:[#allocation3 + $0xf8] sm:$0x3f] %vm2784, %v3007
        %3014 = vrot.lane.b32.xlu0 %v2788, 79
        %v3015 = vpop.permute.xlu0 %3014
        %3016 = vrot.lane.b32.xlu0 %v2789, 79
        %v3017 = vpop.permute.xlu0 %3016
        %vm3018 = vcmask 646144
        %v3019 = vsel %vm3018, %v3015, %v3017
        %3022 = vst [vmem:[#allocation3 + $0xf0] sm:$0xc0] %v3019
        %3023 = vst.msk [vmem:[#allocation3 + $0xf8] sm:$0xc0] %vm2798, %v3017
        %3024 = vst [vmem:[#allocation3 + $0x100] sm:$0xf] %v3019
        %3025 = vst.msk [vmem:[#allocation3 + $0x108] sm:$0xf] %vm2801, %v3017
        %3026 = vrot.lane.b32.xlu0 %v2803, 78
        %v3027 = vpop.permute.xlu0 %3026
        %3028 = vrot.lane.b32.xlu0 %v2804, 78
        %v3029 = vpop.permute.xlu0 %3028
        %vm3030 = vcmask 637952
        %v3031 = vsel %vm3030, %v3027, %v3029
        %3034 = vst [vmem:[#allocation3 + $0x100] sm:$0xf0] %v3031
        %3035 = vst.msk [vmem:[#allocation3 + $0x108] sm:$0xf0] %vm2813, %v3029
        %3036 = vst [vmem:[#allocation3 + $0x110] sm:$0x3] %v3031
        %3037 = vst.msk [vmem:[#allocation3 + $0x118] sm:$0x3] %vm2816, %v3029
        %3038 = vrot.lane.b32.xlu0 %v2818, 77
        %v3039 = vpop.permute.xlu0 %3038
        %3040 = vrot.lane.b32.xlu0 %v2819, 77
        %v3041 = vpop.permute.xlu0 %3040
        %vm3042 = vcmask 629760
        %v3043 = vsel %vm3042, %v3039, %v3041
        %3046 = vst [vmem:[#allocation3 + $0x110] sm:$0xfc] %v3043
        %3047 = vst.msk [vmem:[#allocation3 + $0x118] sm:$0xfc] %vm2828, %v3041
        %3048 = vrot.lane.b32.xlu0 %v2781, 76
        %v3049 = vpop.permute.xlu0 %3048
        %3050 = vrot.lane.b32.xlu0 %v2782, 76
        %v3051 = vpop.permute.xlu0 %3050
        %vm3052 = vcmask 621568
        %v3053 = vsel %vm3052, %v3049, %v3051
        %3056 = vst [vmem:[#allocation3 + $0x120] sm:$0x3f] %v3053
        %3057 = vst.msk [vmem:[#allocation3 + $0x128] sm:$0x3f] %vm2784, %v3051
        %v3058 = vld [vmem:[%s4] sm:$0xff]
        %v3059 = vld [vmem:[%s4 + $0x8] sm:$0xff]
        %v3060 = vld [vmem:[%s4 + $0x10] sm:$0xff]
        %v3061 = vld [vmem:[%s4 + $0x18] sm:$0xff]
        %v3062 = vld [vmem:[#allocation3] sm:$0xff]
        %v3063 = vld [vmem:[#allocation3 + $0x8] sm:$0xff]
        %v3064 = vld [vmem:[#allocation3 + $0x10] sm:$0xff]
        %v3065 = vld [vmem:[#allocation3 + $0x18] sm:$0xff]
        %v3066 = vld [vmem:[#allocation3 + $0x20] sm:$0xff]
        %v3067 = vld [vmem:[#allocation3 + $0x28] sm:$0xff]
        %v3068 = vld [vmem:[#allocation3 + $0x30] sm:$0xff]
        %v3069 = vld [vmem:[#allocation3 + $0x38] sm:$0xff]
        %v3070 = vld [vmem:[#allocation3 + $0x40] sm:$0xff]
        %v3071 = vld [vmem:[#allocation3 + $0x48] sm:$0xff]
        %v3072 = vld [vmem:[#allocation3 + $0x50] sm:$0xff]
        %v3073 = vld [vmem:[#allocation3 + $0x58] sm:$0xff]
        %v3074 = vld [vmem:[#allocation3 + $0x60] sm:$0xff]
        %v3075 = vld [vmem:[#allocation3 + $0x68] sm:$0xff]
        %v3076 = vld [vmem:[#allocation3 + $0x70] sm:$0xff]
        %v3077 = vld [vmem:[#allocation3 + $0x78] sm:$0xff]
        %v3078 = vld [vmem:[#allocation3 + $0x80] sm:$0xff]
        %v3079 = vld [vmem:[#allocation3 + $0x88] sm:$0xff]
        %v3080 = vld [vmem:[#allocation3 + $0x90] sm:$0xff]
        %v3081 = vld [vmem:[#allocation3 + $0x98] sm:$0xff]
        %v3082 = vld [vmem:[#allocation3 + $0xa0] sm:$0xff]
        %v3083 = vld [vmem:[#allocation3 + $0xa8] sm:$0xff]
        %v3084 = vld [vmem:[#allocation3 + $0xb0] sm:$0xff]
        %v3085 = vld [vmem:[#allocation3 + $0xb8] sm:$0xff]
        %v3086 = vld [vmem:[#allocation3 + $0xc0] sm:$0xff]
        %v3087 = vld [vmem:[#allocation3 + $0xc8] sm:$0xff]
        %v3088 = vld [vmem:[#allocation3 + $0xd0] sm:$0xff]
        %v3089 = vld [vmem:[#allocation3 + $0xd8] sm:$0xff]
        %v3090 = vld [vmem:[#allocation3 + $0xe0] sm:$0xff]
        %v3091 = vld [vmem:[#allocation3 + $0xe8] sm:$0xff]
        %v3092 = vld [vmem:[#allocation3 + $0xf0] sm:$0xff]
        %v3093 = vld [vmem:[#allocation3 + $0xf8] sm:$0xff]
        %v3094 = vld [vmem:[#allocation3 + $0x100] sm:$0xff]
        %v3095 = vld [vmem:[#allocation3 + $0x108] sm:$0xff]
        %v3096 = vld [vmem:[#allocation3 + $0x110] sm:$0xff]
        %v3097 = vld [vmem:[#allocation3 + $0x118] sm:$0xff]
        %v3098 = vld [vmem:[#allocation3 + $0x120] sm:$0x3f]
        %v3099 = vld [vmem:[#allocation3 + $0x128] sm:$0x3f]
        %v3100 = vld [vmem:[%s5] sm:$0xff]
        %v3101 = vld [vmem:[%s5 + $0x8] sm:$0xff]
        %3103 = vset.pattern.permute.xlu0 0
        %3104 = vperm.xlu0 %3103, %v3100
        %v3105 = vpop.permute.xlu0 %3104
        %3108 = vset.pattern.permute.xlu0 0
        %3109 = vperm.xlu0 %3108, %v3101
        %v3110 = vpop.permute.xlu0 %3109
        %vm3112 = vcmask 179200
        %v3114 = vsel %vm3112, %v3059, 0
        %v3117 = vsel %vm3112, %v3061, 0
        %vm3119 = vcmask 1045504
        %v3121 = vsel %vm3119, %v3098, 0
        %v3124 = vsel %vm3119, %v3099, 0
        %3126 = vmatpush.msra.mxu0 %v3092
        %3127 = vmatpush.msra.mxu0 %v3090
        %3128 = vmatpush.msra.mxu0 %v3088
        %3129 = vmatpush.msra.mxu0 %v3086
        %3130 = vmatpush.msra.mxu0 %v3084
        %3131 = vmatpush.msra.mxu0 %v3082
        %3132 = vmatpush.msra.mxu0 %v3080
        %3133 = vmatpush.msra.mxu0 %v3078
        %3134 = vmatpush.msra.mxu0 %v3076
        %3135 = vmatpush.msra.mxu0 %v3074
        %3136 = vmatpush.msra.mxu0 %v3072
        %3137 = vmatpush.msra.mxu0 %v3070
        %3138 = vmatpush.msra.mxu0 %v3068
        %3139 = vmatpush.msra.mxu0 %v3066
        %3140 = vmatpush.msra.mxu0 %v3064
        %3141 = vmatpush.msra.mxu0 %v3062
        %3142 = vmatmul.f32.gmra.mxu0 %v3058
        %v3143 = vpop.f32.mrf.mxu0
        %v3144 = vadd.f32 %v3105, %v3143
        %3145 = vmatmul.f32.gmra.mxu0 %v3060
        %v3146 = vpop.f32.mrf.mxu0
        %v3147 = vadd.f32 %v3110, %v3146
        %3148 = vdwg.mxu0
        %3149 = vmatpush.msra.mxu0 0.0
        %3150 = vmatpush.msra.mxu0 0.0
        %3151 = vmatpush.msra.mxu0 0.0
        %3152 = vmatpush.msra.mxu0 0.0
        %3153 = vmatpush.msra.mxu0 0.0
        %3154 = vmatpush.msra.mxu0 0.0
        %3155 = vmatpush.msra.mxu0 0.0
        %3156 = vmatpush.msra.mxu0 0.0
        %3157 = vmatpush.msra.mxu0 0.0
        %3158 = vmatpush.msra.mxu0 0.0
        %3159 = vmatpush.msra.mxu0 0.0
        %3160 = vmatpush.msra.mxu0 0.0
        %3161 = vmatpush.msra.mxu0 0.0
        %3162 = vmatpush.msra.mxu0 %v3121
        %3163 = vmatpush.msra.mxu0 %v3096
        %3164 = vmatpush.msra.mxu0 %v3094
        %3165 = vmatmul.f32.gmra.mxu0 %v3114
        %v3166 = vpop.f32.mrf.mxu0
        %v3167 = vadd.f32 %v3144, %v3166
        %3168 = vmatmul.f32.gmra.mxu0 %v3117
        %v3169 = vpop.f32.mrf.mxu0
        %v3170 = vadd.f32 %v3147, %v3169
        %3171 = vdwg.mxu0
        %3172 = vmatpush.msra.mxu0 %v3093
        %3173 = vmatpush.msra.mxu0 %v3091
        %3174 = vmatpush.msra.mxu0 %v3089
        %3175 = vmatpush.msra.mxu0 %v3087
        %3176 = vmatpush.msra.mxu0 %v3085
        %3177 = vmatpush.msra.mxu0 %v3083
        %3178 = vmatpush.msra.mxu0 %v3081
        %3179 = vmatpush.msra.mxu0 %v3079
        %3180 = vmatpush.msra.mxu0 %v3077
        %3181 = vmatpush.msra.mxu0 %v3075
        %3182 = vmatpush.msra.mxu0 %v3073
        %3183 = vmatpush.msra.mxu0 %v3071
        %3184 = vmatpush.msra.mxu0 %v3069
        %3185 = vmatpush.msra.mxu0 %v3067
        %3186 = vmatpush.msra.mxu0 %v3065
        %3187 = vmatpush.msra.mxu0 %v3063
        %3188 = vmatmul.f32.gmra.mxu0 %v3058
        %v3189 = vpop.f32.mrf.mxu0
        %v3190 = vadd.f32 %v3105, %v3189
        %3191 = vmatmul.f32.gmra.mxu0 %v3060
        %v3192 = vpop.f32.mrf.mxu0
        %v3193 = vadd.f32 %v3110, %v3192
        %3194 = vdwg.mxu0
        %3195 = vmatpush.msra.mxu0 0.0
        %3196 = vmatpush.msra.mxu0 0.0
        %3197 = vmatpush.msra.mxu0 0.0
        %3198 = vmatpush.msra.mxu0 0.0
        %3199 = vmatpush.msra.mxu0 0.0
        %3200 = vmatpush.msra.mxu0 0.0
        %3201 = vmatpush.msra.mxu0 0.0
        %3202 = vmatpush.msra.mxu0 0.0
        %3203 = vmatpush.msra.mxu0 0.0
        %3204 = vmatpush.msra.mxu0 0.0
        %3205 = vmatpush.msra.mxu0 0.0
        %3206 = vmatpush.msra.mxu0 0.0
        %3207 = vmatpush.msra.mxu0 0.0
        %3208 = vmatpush.msra.mxu0 %v3124
        %3209 = vmatpush.msra.mxu0 %v3097
        %3210 = vmatpush.msra.mxu0 %v3095
        %3211 = vmatmul.f32.gmra.mxu0 %v3114
        %v3212 = vpop.f32.mrf.mxu0
        %v3213 = vadd.f32 %v3190, %v3212
        %3214 = vmatmul.f32.gmra.mxu0 %v3117
        %v3215 = vpop.f32.mrf.mxu0
        %v3216 = vadd.f32 %v3193, %v3215
        %3217 = vdwg.mxu0
        %v3218 = vmax.f32 %v3167, 0.0
        %v3219 = vmax.f32 %v3213, 0.0
        %v3220 = vmax.f32 %v3170, 0.0
        %v3221 = vmax.f32 %v3216, 0.0
        %v3222 = vld [vmem:[%s6] sm:$0xff]
        %v3223 = vld [vmem:[%s6 + $0x8] sm:$0xff]
        %v3224 = vld [vmem:[%s6 + $0x10] sm:$0xff]
        %v3225 = vld [vmem:[%s6 + $0x18] sm:$0xff]
        %v3226 = vld [vmem:[%s6 + $0x20] sm:$0xff]
        %v3227 = vld [vmem:[%s6 + $0x28] sm:$0xff]
        %v3228 = vld [vmem:[%s6 + $0x30] sm:$0xff]
        %v3229 = vld [vmem:[%s6 + $0x38] sm:$0xff]
        %v3230 = vld [vmem:[%s6 + $0x40] sm:$0xff]
        %v3231 = vld [vmem:[%s6 + $0x48] sm:$0xff]
        %v3232 = vld [vmem:[%s6 + $0x50] sm:$0xff]
        %v3233 = vld [vmem:[%s6 + $0x58] sm:$0xff]
        %v3234 = vld [vmem:[%s6 + $0x60] sm:$0xff]
        %v3235 = vld [vmem:[%s6 + $0x68] sm:$0xff]
        %v3236 = vld [vmem:[%s6 + $0x70] sm:$0xff]
        %v3237 = vld [vmem:[%s6 + $0x78] sm:$0xff]
        %v3238 = vld [vmem:[%s6 + $0x80] sm:$0xff]
        %v3239 = vld [vmem:[%s6 + $0x88] sm:$0xff]
        %v3241 = vsel %vm617, %v3219, 0
        %v3244 = vsel %vm617, %v3221, 0
        %3246 = vmatpush.msra.mxu0 %v3237
        %3247 = vmatpush.msra.mxu0 %v3236
        %3248 = vmatpush.msra.mxu0 %v3235
        %3249 = vmatpush.msra.mxu0 %v3234
        %3250 = vmatpush.msra.mxu0 %v3233
        %3251 = vmatpush.msra.mxu0 %v3232
        %3252 = vmatpush.msra.mxu0 %v3231
        %3253 = vmatpush.msra.mxu0 %v3230
        %3254 = vmatpush.msra.mxu0 %v3229
        %3255 = vmatpush.msra.mxu0 %v3228
        %3256 = vmatpush.msra.mxu0 %v3227
        %3257 = vmatpush.msra.mxu0 %v3226
        %3258 = vmatpush.msra.mxu0 %v3225
        %3259 = vmatpush.msra.mxu0 %v3224
        %3260 = vmatpush.msra.mxu0 %v3223
        %3261 = vmatpush.msra.mxu0 %v3222
        %3262 = vmatmul.f32.gmra.mxu0 %v3218
        %v3263 = vpop.f32.mrf.mxu0
        %v3264 = vadd.f32 0.0, %v3263
        %3265 = vmatmul.f32.gmra.mxu0 %v3220
        %v3266 = vpop.f32.mrf.mxu0
        %v3267 = vadd.f32 0.0, %v3266
        %3268 = vdwg.mxu0
        %3269 = vmatpush.msra.mxu0 0.0
        %3270 = vmatpush.msra.mxu0 0.0
        %3271 = vmatpush.msra.mxu0 0.0
        %3272 = vmatpush.msra.mxu0 0.0
        %3273 = vmatpush.msra.mxu0 0.0
        %3274 = vmatpush.msra.mxu0 0.0
        %3275 = vmatpush.msra.mxu0 0.0
        %3276 = vmatpush.msra.mxu0 0.0
        %3277 = vmatpush.msra.mxu0 0.0
        %3278 = vmatpush.msra.mxu0 0.0
        %3279 = vmatpush.msra.mxu0 0.0
        %3280 = vmatpush.msra.mxu0 0.0
        %3281 = vmatpush.msra.mxu0 0.0
        %3282 = vmatpush.msra.mxu0 0.0
        %3283 = vmatpush.msra.mxu0 %v3239
        %3284 = vmatpush.msra.mxu0 %v3238
        %3285 = vmatmul.f32.gmra.mxu0 %v3241
        %v3286 = vpop.f32.mrf.mxu0
        %v3287 = vadd.f32 %v3264, %v3286
        %3288 = vmatmul.f32.gmra.mxu0 %v3244
        %v3289 = vpop.f32.mrf.mxu0
        %v3290 = vadd.f32 %v3267, %v3289
        %3291 = vdwg.mxu0
        %s3292 = scalar_lea.vmem %s6, 144
        %v3293 = vld [vmem:[%s3292] sm:$0xff]
        %v3294 = vld [vmem:[%s3292 + $0x8] sm:$0xff]
        %v3295 = vld [vmem:[%s3292 + $0x10] sm:$0xff]
        %v3296 = vld [vmem:[%s3292 + $0x18] sm:$0xff]
        %v3297 = vld [vmem:[%s3292 + $0x20] sm:$0xff]
        %v3298 = vld [vmem:[%s3292 + $0x28] sm:$0xff]
        %v3299 = vld [vmem:[%s3292 + $0x30] sm:$0xff]
        %v3300 = vld [vmem:[%s3292 + $0x38] sm:$0xff]
        %v3301 = vld [vmem:[%s3292 + $0x40] sm:$0xff]
        %v3302 = vld [vmem:[%s3292 + $0x48] sm:$0xff]
        %v3303 = vld [vmem:[%s3292 + $0x50] sm:$0xff]
        %v3304 = vld [vmem:[%s3292 + $0x58] sm:$0xff]
        %v3305 = vld [vmem:[%s3292 + $0x60] sm:$0xff]
        %v3306 = vld [vmem:[%s3292 + $0x68] sm:$0xff]
        %v3307 = vld [vmem:[%s3292 + $0x70] sm:$0xff]
        %v3308 = vld [vmem:[%s3292 + $0x78] sm:$0xff]
        %v3309 = vld [vmem:[%s3292 + $0x80] sm:$0xff]
        %v3310 = vld [vmem:[%s3292 + $0x88] sm:$0xff]
        %3311 = vmatpush.msra.mxu0 %v3308
        %3312 = vmatpush.msra.mxu0 %v3307
        %3313 = vmatpush.msra.mxu0 %v3306
        %3314 = vmatpush.msra.mxu0 %v3305
        %3315 = vmatpush.msra.mxu0 %v3304
        %3316 = vmatpush.msra.mxu0 %v3303
        %3317 = vmatpush.msra.mxu0 %v3302
        %3318 = vmatpush.msra.mxu0 %v3301
        %3319 = vmatpush.msra.mxu0 %v3300
        %3320 = vmatpush.msra.mxu0 %v3299
        %3321 = vmatpush.msra.mxu0 %v3298
        %3322 = vmatpush.msra.mxu0 %v3297
        %3323 = vmatpush.msra.mxu0 %v3296
        %3324 = vmatpush.msra.mxu0 %v3295
        %3325 = vmatpush.msra.mxu0 %v3294
        %3326 = vmatpush.msra.mxu0 %v3293
        %3327 = vmatmul.f32.gmra.mxu0 %v3218
        %v3328 = vpop.f32.mrf.mxu0
        %v3329 = vadd.f32 0.0, %v3328
        %3330 = vmatmul.f32.gmra.mxu0 %v3220
        %v3331 = vpop.f32.mrf.mxu0
        %v3332 = vadd.f32 0.0, %v3331
        %3333 = vdwg.mxu0
        %3334 = vmatpush.msra.mxu0 0.0
        %3335 = vmatpush.msra.mxu0 0.0
        %3336 = vmatpush.msra.mxu0 0.0
        %3337 = vmatpush.msra.mxu0 0.0
        %3338 = vmatpush.msra.mxu0 0.0
        %3339 = vmatpush.msra.mxu0 0.0
        %3340 = vmatpush.msra.mxu0 0.0
        %3341 = vmatpush.msra.mxu0 0.0
        %3342 = vmatpush.msra.mxu0 0.0
        %3343 = vmatpush.msra.mxu0 0.0
        %3344 = vmatpush.msra.mxu0 0.0
        %3345 = vmatpush.msra.mxu0 0.0
        %3346 = vmatpush.msra.mxu0 0.0
        %3347 = vmatpush.msra.mxu0 0.0
        %3348 = vmatpush.msra.mxu0 %v3310
        %3349 = vmatpush.msra.mxu0 %v3309
        %3350 = vmatmul.f32.gmra.mxu0 %v3241
        %v3351 = vpop.f32.mrf.mxu0
        %v3352 = vadd.f32 %v3329, %v3351
        %3353 = vmatmul.f32.gmra.mxu0 %v3244
        %v3354 = vpop.f32.mrf.mxu0
        %v3355 = vadd.f32 %v3332, %v3354
        %3356 = vdwg.mxu0
        %v3357 = vmax.f32 %v3287, %v3352
        %v3358 = vmax.f32 %v3290, %v3355
        %s3359 = scalar_lea.vmem %s6, 288
        %v3360 = vld [vmem:[%s3359] sm:$0xff]
        %v3361 = vld [vmem:[%s3359 + $0x8] sm:$0xff]
        %v3362 = vld [vmem:[%s3359 + $0x10] sm:$0xff]
        %v3363 = vld [vmem:[%s3359 + $0x18] sm:$0xff]
        %v3364 = vld [vmem:[%s3359 + $0x20] sm:$0xff]
        %v3365 = vld [vmem:[%s3359 + $0x28] sm:$0xff]
        %v3366 = vld [vmem:[%s3359 + $0x30] sm:$0xff]
        %v3367 = vld [vmem:[%s3359 + $0x38] sm:$0xff]
        %v3368 = vld [vmem:[%s3359 + $0x40] sm:$0xff]
        %v3369 = vld [vmem:[%s3359 + $0x48] sm:$0xff]
        %v3370 = vld [vmem:[%s3359 + $0x50] sm:$0xff]
        %v3371 = vld [vmem:[%s3359 + $0x58] sm:$0xff]
        %v3372 = vld [vmem:[%s3359 + $0x60] sm:$0xff]
        %v3373 = vld [vmem:[%s3359 + $0x68] sm:$0xff]
        %v3374 = vld [vmem:[%s3359 + $0x70] sm:$0xff]
        %v3375 = vld [vmem:[%s3359 + $0x78] sm:$0xff]
        %v3376 = vld [vmem:[%s3359 + $0x80] sm:$0xff]
        %v3377 = vld [vmem:[%s3359 + $0x88] sm:$0xff]
        %3378 = vmatpush.msra.mxu0 %v3375
        %3379 = vmatpush.msra.mxu0 %v3374
        %3380 = vmatpush.msra.mxu0 %v3373
        %3381 = vmatpush.msra.mxu0 %v3372
        %3382 = vmatpush.msra.mxu0 %v3371
        %3383 = vmatpush.msra.mxu0 %v3370
        %3384 = vmatpush.msra.mxu0 %v3369
        %3385 = vmatpush.msra.mxu0 %v3368
        %3386 = vmatpush.msra.mxu0 %v3367
        %3387 = vmatpush.msra.mxu0 %v3366
        %3388 = vmatpush.msra.mxu0 %v3365
        %3389 = vmatpush.msra.mxu0 %v3364
        %3390 = vmatpush.msra.mxu0 %v3363
        %3391 = vmatpush.msra.mxu0 %v3362
        %3392 = vmatpush.msra.mxu0 %v3361
        %3393 = vmatpush.msra.mxu0 %v3360
        %3394 = vmatmul.f32.gmra.mxu0 %v3218
        %v3395 = vpop.f32.mrf.mxu0
        %v3396 = vadd.f32 0.0, %v3395
        %3397 = vmatmul.f32.gmra.mxu0 %v3220
        %v3398 = vpop.f32.mrf.mxu0
        %v3399 = vadd.f32 0.0, %v3398
        %3400 = vdwg.mxu0
        %3401 = vmatpush.msra.mxu0 0.0
        %3402 = vmatpush.msra.mxu0 0.0
        %3403 = vmatpush.msra.mxu0 0.0
        %3404 = vmatpush.msra.mxu0 0.0
        %3405 = vmatpush.msra.mxu0 0.0
        %3406 = vmatpush.msra.mxu0 0.0
        %3407 = vmatpush.msra.mxu0 0.0
        %3408 = vmatpush.msra.mxu0 0.0
        %3409 = vmatpush.msra.mxu0 0.0
        %3410 = vmatpush.msra.mxu0 0.0
        %3411 = vmatpush.msra.mxu0 0.0
        %3412 = vmatpush.msra.mxu0 0.0
        %3413 = vmatpush.msra.mxu0 0.0
        %3414 = vmatpush.msra.mxu0 0.0
        %3415 = vmatpush.msra.mxu0 %v3377
        %3416 = vmatpush.msra.mxu0 %v3376
        %3417 = vmatmul.f32.gmra.mxu0 %v3241
        %v3418 = vpop.f32.mrf.mxu0
        %v3419 = vadd.f32 %v3396, %v3418
        %3420 = vmatmul.f32.gmra.mxu0 %v3244
        %v3421 = vpop.f32.mrf.mxu0
        %v3422 = vadd.f32 %v3399, %v3421
        %3423 = vdwg.mxu0
        %s3424 = scalar_lea.vmem %s6, 432
        %v3425 = vld [vmem:[%s3424] sm:$0xff]
        %v3426 = vld [vmem:[%s3424 + $0x8] sm:$0xff]
        %v3427 = vld [vmem:[%s3424 + $0x10] sm:$0xff]
        %v3428 = vld [vmem:[%s3424 + $0x18] sm:$0xff]
        %v3429 = vld [vmem:[%s3424 + $0x20] sm:$0xff]
        %v3430 = vld [vmem:[%s3424 + $0x28] sm:$0xff]
        %v3431 = vld [vmem:[%s3424 + $0x30] sm:$0xff]
        %v3432 = vld [vmem:[%s3424 + $0x38] sm:$0xff]
        %v3433 = vld [vmem:[%s3424 + $0x40] sm:$0xff]
        %v3434 = vld [vmem:[%s3424 + $0x48] sm:$0xff]
        %v3435 = vld [vmem:[%s3424 + $0x50] sm:$0xff]
        %v3436 = vld [vmem:[%s3424 + $0x58] sm:$0xff]
        %v3437 = vld [vmem:[%s3424 + $0x60] sm:$0xff]
        %v3438 = vld [vmem:[%s3424 + $0x68] sm:$0xff]
        %v3439 = vld [vmem:[%s3424 + $0x70] sm:$0xff]
        %v3440 = vld [vmem:[%s3424 + $0x78] sm:$0xff]
        %v3441 = vld [vmem:[%s3424 + $0x80] sm:$0xff]
        %v3442 = vld [vmem:[%s3424 + $0x88] sm:$0xff]
        %3443 = vmatpush.msra.mxu0 %v3440
        %3444 = vmatpush.msra.mxu0 %v3439
        %3445 = vmatpush.msra.mxu0 %v3438
        %3446 = vmatpush.msra.mxu0 %v3437
        %3447 = vmatpush.msra.mxu0 %v3436
        %3448 = vmatpush.msra.mxu0 %v3435
        %3449 = vmatpush.msra.mxu0 %v3434
        %3450 = vmatpush.msra.mxu0 %v3433
        %3451 = vmatpush.msra.mxu0 %v3432
        %3452 = vmatpush.msra.mxu0 %v3431
        %3453 = vmatpush.msra.mxu0 %v3430
        %3454 = vmatpush.msra.mxu0 %v3429
        %3455 = vmatpush.msra.mxu0 %v3428
        %3456 = vmatpush.msra.mxu0 %v3427
        %3457 = vmatpush.msra.mxu0 %v3426
        %3458 = vmatpush.msra.mxu0 %v3425
        %3459 = vmatmul.f32.gmra.mxu0 %v3218
        %v3460 = vpop.f32.mrf.mxu0
        %v3461 = vadd.f32 0.0, %v3460
        %3462 = vmatmul.f32.gmra.mxu0 %v3220
        %v3463 = vpop.f32.mrf.mxu0
        %v3464 = vadd.f32 0.0, %v3463
        %3465 = vdwg.mxu0
        %3466 = vmatpush.msra.mxu0 0.0
        %3467 = vmatpush.msra.mxu0 0.0
        %3468 = vmatpush.msra.mxu0 0.0
        %3469 = vmatpush.msra.mxu0 0.0
        %3470 = vmatpush.msra.mxu0 0.0
        %3471 = vmatpush.msra.mxu0 0.0
        %3472 = vmatpush.msra.mxu0 0.0
        %3473 = vmatpush.msra.mxu0 0.0
        %3474 = vmatpush.msra.mxu0 0.0
        %3475 = vmatpush.msra.mxu0 0.0
        %3476 = vmatpush.msra.mxu0 0.0
        %3477 = vmatpush.msra.mxu0 0.0
        %3478 = vmatpush.msra.mxu0 0.0
        %3479 = vmatpush.msra.mxu0 0.0
        %3480 = vmatpush.msra.mxu0 %v3442
        %3481 = vmatpush.msra.mxu0 %v3441
        %3482 = vmatmul.f32.gmra.mxu0 %v3241
        %v3483 = vpop.f32.mrf.mxu0
        %v3484 = vadd.f32 %v3461, %v3483
        %3485 = vmatmul.f32.gmra.mxu0 %v3244
        %v3486 = vpop.f32.mrf.mxu0
        %v3487 = vadd.f32 %v3464, %v3486
        %3488 = vdwg.mxu0
        %v3489 = vmax.f32 %v3419, %v3484
        %v3490 = vmax.f32 %v3422, %v3487
        %v3491 = vmax.f32 %v3357, %v3489
        %v3492 = vmax.f32 %v3358, %v3490
        %v3493 = vld [vmem:[%s8] sm:$0x1]
        %v3494 = vld [vmem:[%s7] sm:$0xff]
        %v3495 = vld [vmem:[%s7 + $0x8] sm:$0xff]
        %v3497 = vsel %vm617, %v3491, 0
        %3499 = vmatpush.msra.mxu0 0.0
        %3500 = vmatpush.msra.mxu0 0.0
        %3501 = vmatpush.msra.mxu0 0.0
        %3502 = vmatpush.msra.mxu0 0.0
        %3503 = vmatpush.msra.mxu0 0.0
        %3504 = vmatpush.msra.mxu0 0.0
        %3505 = vmatpush.msra.mxu0 0.0
        %3506 = vmatpush.msra.mxu0 0.0
        %3507 = vmatpush.msra.mxu0 0.0
        %3508 = vmatpush.msra.mxu0 0.0
        %3509 = vmatpush.msra.mxu0 0.0
        %3510 = vmatpush.msra.mxu0 0.0
        %3511 = vmatpush.msra.mxu0 0.0
        %3512 = vmatpush.msra.mxu0 0.0
        %3513 = vmatpush.msra.mxu0 %v3495
        %3514 = vmatpush.msra.mxu0 %v3494
        %3515 = vmatmul.f32.gmra.mxu0 %v3497
        %v3516 = vpop.f32.mrf.mxu0
        %v3517 = vadd.f32 0.0, %v3516
        %3518 = vdwg.mxu0
        %v3519 = vadd.f32 %v3493, %v3517
        %v3520 = vld [vmem:[%s7 + $0x10] sm:$0xff]
        %v3521 = vld [vmem:[%s7 + $0x18] sm:$0xff]
        %v3522 = vrot.slane %v3491, 1
        %v3523 = vsel %vm617, %v3522, 0
        %3525 = vmatpush.msra.mxu0 0.0
        %3526 = vmatpush.msra.mxu0 0.0
        %3527 = vmatpush.msra.mxu0 0.0
        %3528 = vmatpush.msra.mxu0 0.0
        %3529 = vmatpush.msra.mxu0 0.0
        %3530 = vmatpush.msra.mxu0 0.0
        %3531 = vmatpush.msra.mxu0 0.0
        %3532 = vmatpush.msra.mxu0 0.0
        %3533 = vmatpush.msra.mxu0 0.0
        %3534 = vmatpush.msra.mxu0 0.0
        %3535 = vmatpush.msra.mxu0 0.0
        %3536 = vmatpush.msra.mxu0 0.0
        %3537 = vmatpush.msra.mxu0 0.0
        %3538 = vmatpush.msra.mxu0 0.0
        %3539 = vmatpush.msra.mxu0 %v3521
        %3540 = vmatpush.msra.mxu0 %v3520
        %3541 = vmatmul.f32.gmra.mxu0 %v3523
        %v3542 = vpop.f32.mrf.mxu0
        %v3543 = vadd.f32 0.0, %v3542
        %3544 = vdwg.mxu0
        %v3545 = vadd.f32 %v3519, %v3543
        %v3546 = vld [vmem:[%s7 + $0x20] sm:$0xff]
        %v3547 = vld [vmem:[%s7 + $0x28] sm:$0xff]
        %v3548 = vrot.slane %v3491, 2
        %v3549 = vsel %vm617, %v3548, 0
        %3551 = vmatpush.msra.mxu0 0.0
        %3552 = vmatpush.msra.mxu0 0.0
        %3553 = vmatpush.msra.mxu0 0.0
        %3554 = vmatpush.msra.mxu0 0.0
        %3555 = vmatpush.msra.mxu0 0.0
        %3556 = vmatpush.msra.mxu0 0.0
        %3557 = vmatpush.msra.mxu0 0.0
        %3558 = vmatpush.msra.mxu0 0.0
        %3559 = vmatpush.msra.mxu0 0.0
        %3560 = vmatpush.msra.mxu0 0.0
        %3561 = vmatpush.msra.mxu0 0.0
        %3562 = vmatpush.msra.mxu0 0.0
        %3563 = vmatpush.msra.mxu0 0.0
        %3564 = vmatpush.msra.mxu0 0.0
        %3565 = vmatpush.msra.mxu0 %v3547
        %3566 = vmatpush.msra.mxu0 %v3546
        %3567 = vmatmul.f32.gmra.mxu0 %v3549
        %v3568 = vpop.f32.mrf.mxu0
        %v3569 = vadd.f32 0.0, %v3568
        %3570 = vdwg.mxu0
        %v3571 = vadd.f32 %v3545, %v3569
        %v3572 = vld [vmem:[%s7 + $0x30] sm:$0xff]
        %v3573 = vld [vmem:[%s7 + $0x38] sm:$0xff]
        %v3574 = vrot.slane %v3491, 3
        %v3575 = vsel %vm617, %v3574, 0
        %3577 = vmatpush.msra.mxu0 0.0
        %3578 = vmatpush.msra.mxu0 0.0
        %3579 = vmatpush.msra.mxu0 0.0
        %3580 = vmatpush.msra.mxu0 0.0
        %3581 = vmatpush.msra.mxu0 0.0
        %3582 = vmatpush.msra.mxu0 0.0
        %3583 = vmatpush.msra.mxu0 0.0
        %3584 = vmatpush.msra.mxu0 0.0
        %3585 = vmatpush.msra.mxu0 0.0
        %3586 = vmatpush.msra.mxu0 0.0
        %3587 = vmatpush.msra.mxu0 0.0
        %3588 = vmatpush.msra.mxu0 0.0
        %3589 = vmatpush.msra.mxu0 0.0
        %3590 = vmatpush.msra.mxu0 0.0
        %3591 = vmatpush.msra.mxu0 %v3573
        %3592 = vmatpush.msra.mxu0 %v3572
        %3593 = vmatmul.f32.gmra.mxu0 %v3575
        %v3594 = vpop.f32.mrf.mxu0
        %v3595 = vadd.f32 0.0, %v3594
        %3596 = vdwg.mxu0
        %v3597 = vadd.f32 %v3571, %v3595
        %v3598 = vld [vmem:[%s7 + $0x40] sm:$0xff]
        %v3599 = vld [vmem:[%s7 + $0x48] sm:$0xff]
        %v3600 = vrot.slane %v3491, 4
        %v3601 = vsel %vm617, %v3600, 0
        %3603 = vmatpush.msra.mxu0 0.0
        %3604 = vmatpush.msra.mxu0 0.0
        %3605 = vmatpush.msra.mxu0 0.0
        %3606 = vmatpush.msra.mxu0 0.0
        %3607 = vmatpush.msra.mxu0 0.0
        %3608 = vmatpush.msra.mxu0 0.0
        %3609 = vmatpush.msra.mxu0 0.0
        %3610 = vmatpush.msra.mxu0 0.0
        %3611 = vmatpush.msra.mxu0 0.0
        %3612 = vmatpush.msra.mxu0 0.0
        %3613 = vmatpush.msra.mxu0 0.0
        %3614 = vmatpush.msra.mxu0 0.0
        %3615 = vmatpush.msra.mxu0 0.0
        %3616 = vmatpush.msra.mxu0 0.0
        %3617 = vmatpush.msra.mxu0 %v3599
        %3618 = vmatpush.msra.mxu0 %v3598
        %3619 = vmatmul.f32.gmra.mxu0 %v3601
        %v3620 = vpop.f32.mrf.mxu0
        %v3621 = vadd.f32 0.0, %v3620
        %3622 = vdwg.mxu0
        %v3623 = vadd.f32 %v3597, %v3621
        %v3624 = vld [vmem:[%s7 + $0x50] sm:$0xff]
        %v3625 = vld [vmem:[%s7 + $0x58] sm:$0xff]
        %v3626 = vrot.slane %v3491, 5
        %v3627 = vsel %vm617, %v3626, 0
        %3629 = vmatpush.msra.mxu0 0.0
        %3630 = vmatpush.msra.mxu0 0.0
        %3631 = vmatpush.msra.mxu0 0.0
        %3632 = vmatpush.msra.mxu0 0.0
        %3633 = vmatpush.msra.mxu0 0.0
        %3634 = vmatpush.msra.mxu0 0.0
        %3635 = vmatpush.msra.mxu0 0.0
        %3636 = vmatpush.msra.mxu0 0.0
        %3637 = vmatpush.msra.mxu0 0.0
        %3638 = vmatpush.msra.mxu0 0.0
        %3639 = vmatpush.msra.mxu0 0.0
        %3640 = vmatpush.msra.mxu0 0.0
        %3641 = vmatpush.msra.mxu0 0.0
        %3642 = vmatpush.msra.mxu0 0.0
        %3643 = vmatpush.msra.mxu0 %v3625
        %3644 = vmatpush.msra.mxu0 %v3624
        %3645 = vmatmul.f32.gmra.mxu0 %v3627
        %v3646 = vpop.f32.mrf.mxu0
        %v3647 = vadd.f32 0.0, %v3646
        %3648 = vdwg.mxu0
        %v3649 = vadd.f32 %v3623, %v3647
        %v3650 = vld [vmem:[%s7 + $0x60] sm:$0xff]
        %v3651 = vld [vmem:[%s7 + $0x68] sm:$0xff]
        %v3652 = vrot.slane %v3491, 6
        %v3653 = vsel %vm617, %v3652, 0
        %3655 = vmatpush.msra.mxu0 0.0
        %3656 = vmatpush.msra.mxu0 0.0
        %3657 = vmatpush.msra.mxu0 0.0
        %3658 = vmatpush.msra.mxu0 0.0
        %3659 = vmatpush.msra.mxu0 0.0
        %3660 = vmatpush.msra.mxu0 0.0
        %3661 = vmatpush.msra.mxu0 0.0
        %3662 = vmatpush.msra.mxu0 0.0
        %3663 = vmatpush.msra.mxu0 0.0
        %3664 = vmatpush.msra.mxu0 0.0
        %3665 = vmatpush.msra.mxu0 0.0
        %3666 = vmatpush.msra.mxu0 0.0
        %3667 = vmatpush.msra.mxu0 0.0
        %3668 = vmatpush.msra.mxu0 0.0
        %3669 = vmatpush.msra.mxu0 %v3651
        %3670 = vmatpush.msra.mxu0 %v3650
        %3671 = vmatmul.f32.gmra.mxu0 %v3653
        %v3672 = vpop.f32.mrf.mxu0
        %v3673 = vadd.f32 0.0, %v3672
        %3674 = vdwg.mxu0
        %v3675 = vadd.f32 %v3649, %v3673
        %v3676 = vld [vmem:[%s7 + $0x70] sm:$0xff]
        %v3677 = vld [vmem:[%s7 + $0x78] sm:$0xff]
        %v3678 = vrot.slane %v3491, 7
        %v3679 = vsel %vm617, %v3678, 0
        %3681 = vmatpush.msra.mxu0 0.0
        %3682 = vmatpush.msra.mxu0 0.0
        %3683 = vmatpush.msra.mxu0 0.0
        %3684 = vmatpush.msra.mxu0 0.0
        %3685 = vmatpush.msra.mxu0 0.0
        %3686 = vmatpush.msra.mxu0 0.0
        %3687 = vmatpush.msra.mxu0 0.0
        %3688 = vmatpush.msra.mxu0 0.0
        %3689 = vmatpush.msra.mxu0 0.0
        %3690 = vmatpush.msra.mxu0 0.0
        %3691 = vmatpush.msra.mxu0 0.0
        %3692 = vmatpush.msra.mxu0 0.0
        %3693 = vmatpush.msra.mxu0 0.0
        %3694 = vmatpush.msra.mxu0 0.0
        %3695 = vmatpush.msra.mxu0 %v3677
        %3696 = vmatpush.msra.mxu0 %v3676
        %3697 = vmatmul.f32.gmra.mxu0 %v3679
        %v3698 = vpop.f32.mrf.mxu0
        %v3699 = vadd.f32 0.0, %v3698
        %3700 = vdwg.mxu0
        %v3701 = vadd.f32 %v3675, %v3699
        %v3702 = vld [vmem:[%s7 + $0x80] sm:$0xff]
        %v3703 = vld [vmem:[%s7 + $0x88] sm:$0xff]
        %v3705 = vsel %vm617, %v3492, 0
        %3707 = vmatpush.msra.mxu0 0.0
        %3708 = vmatpush.msra.mxu0 0.0
        %3709 = vmatpush.msra.mxu0 0.0
        %3710 = vmatpush.msra.mxu0 0.0
        %3711 = vmatpush.msra.mxu0 0.0
        %3712 = vmatpush.msra.mxu0 0.0
        %3713 = vmatpush.msra.mxu0 0.0
        %3714 = vmatpush.msra.mxu0 0.0
        %3715 = vmatpush.msra.mxu0 0.0
        %3716 = vmatpush.msra.mxu0 0.0
        %3717 = vmatpush.msra.mxu0 0.0
        %3718 = vmatpush.msra.mxu0 0.0
        %3719 = vmatpush.msra.mxu0 0.0
        %3720 = vmatpush.msra.mxu0 0.0
        %3721 = vmatpush.msra.mxu0 %v3703
        %3722 = vmatpush.msra.mxu0 %v3702
        %3723 = vmatmul.f32.gmra.mxu0 %v3705
        %v3724 = vpop.f32.mrf.mxu0
        %v3725 = vadd.f32 0.0, %v3724
        %3726 = vdwg.mxu0
        %v3727 = vadd.f32 %v3701, %v3725
        %v3728 = vld [vmem:[%s7 + $0x90] sm:$0xff]
        %v3729 = vld [vmem:[%s7 + $0x98] sm:$0xff]
        %v3730 = vrot.slane %v3492, 1
        %v3731 = vsel %vm617, %v3730, 0
        %3733 = vmatpush.msra.mxu0 0.0
        %3734 = vmatpush.msra.mxu0 0.0
        %3735 = vmatpush.msra.mxu0 0.0
        %3736 = vmatpush.msra.mxu0 0.0
        %3737 = vmatpush.msra.mxu0 0.0
        %3738 = vmatpush.msra.mxu0 0.0
        %3739 = vmatpush.msra.mxu0 0.0
        %3740 = vmatpush.msra.mxu0 0.0
        %3741 = vmatpush.msra.mxu0 0.0
        %3742 = vmatpush.msra.mxu0 0.0
        %3743 = vmatpush.msra.mxu0 0.0
        %3744 = vmatpush.msra.mxu0 0.0
        %3745 = vmatpush.msra.mxu0 0.0
        %3746 = vmatpush.msra.mxu0 0.0
        %3747 = vmatpush.msra.mxu0 %v3729
        %3748 = vmatpush.msra.mxu0 %v3728
        %3749 = vmatmul.f32.gmra.mxu0 %v3731
        %v3750 = vpop.f32.mrf.mxu0
        %v3751 = vadd.f32 0.0, %v3750
        %3752 = vdwg.mxu0
        %v3753 = vadd.f32 %v3727, %v3751
        %v3754 = vld [vmem:[%s7 + $0xa0] sm:$0xff]
        %v3755 = vld [vmem:[%s7 + $0xa8] sm:$0xff]
        %v3756 = vrot.slane %v3492, 2
        %v3757 = vsel %vm617, %v3756, 0
        %3759 = vmatpush.msra.mxu0 0.0
        %3760 = vmatpush.msra.mxu0 0.0
        %3761 = vmatpush.msra.mxu0 0.0
        %3762 = vmatpush.msra.mxu0 0.0
        %3763 = vmatpush.msra.mxu0 0.0
        %3764 = vmatpush.msra.mxu0 0.0
        %3765 = vmatpush.msra.mxu0 0.0
        %3766 = vmatpush.msra.mxu0 0.0
        %3767 = vmatpush.msra.mxu0 0.0
        %3768 = vmatpush.msra.mxu0 0.0
        %3769 = vmatpush.msra.mxu0 0.0
        %3770 = vmatpush.msra.mxu0 0.0
        %3771 = vmatpush.msra.mxu0 0.0
        %3772 = vmatpush.msra.mxu0 0.0
        %3773 = vmatpush.msra.mxu0 %v3755
        %3774 = vmatpush.msra.mxu0 %v3754
        %3775 = vmatmul.f32.gmra.mxu0 %v3757
        %v3776 = vpop.f32.mrf.mxu0
        %v3777 = vadd.f32 0.0, %v3776
        %3778 = vdwg.mxu0
        %v3779 = vadd.f32 %v3753, %v3777
        %v3780 = vld [vmem:[%s7 + $0xb0] sm:$0xff]
        %v3781 = vld [vmem:[%s7 + $0xb8] sm:$0xff]
        %v3782 = vrot.slane %v3492, 3
        %v3783 = vsel %vm617, %v3782, 0
        %3785 = vmatpush.msra.mxu0 0.0
        %3786 = vmatpush.msra.mxu0 0.0
        %3787 = vmatpush.msra.mxu0 0.0
        %3788 = vmatpush.msra.mxu0 0.0
        %3789 = vmatpush.msra.mxu0 0.0
        %3790 = vmatpush.msra.mxu0 0.0
        %3791 = vmatpush.msra.mxu0 0.0
        %3792 = vmatpush.msra.mxu0 0.0
        %3793 = vmatpush.msra.mxu0 0.0
        %3794 = vmatpush.msra.mxu0 0.0
        %3795 = vmatpush.msra.mxu0 0.0
        %3796 = vmatpush.msra.mxu0 0.0
        %3797 = vmatpush.msra.mxu0 0.0
        %3798 = vmatpush.msra.mxu0 0.0
        %3799 = vmatpush.msra.mxu0 %v3781
        %3800 = vmatpush.msra.mxu0 %v3780
        %3801 = vmatmul.f32.gmra.mxu0 %v3783
        %v3802 = vpop.f32.mrf.mxu0
        %v3803 = vadd.f32 0.0, %v3802
        %3804 = vdwg.mxu0
        %v3805 = vadd.f32 %v3779, %v3803
        %v3806 = vld [vmem:[%s7 + $0xc0] sm:$0xff]
        %v3807 = vld [vmem:[%s7 + $0xc8] sm:$0xff]
        %v3808 = vrot.slane %v3492, 4
        %v3809 = vsel %vm617, %v3808, 0
        %3811 = vmatpush.msra.mxu0 0.0
        %3812 = vmatpush.msra.mxu0 0.0
        %3813 = vmatpush.msra.mxu0 0.0
        %3814 = vmatpush.msra.mxu0 0.0
        %3815 = vmatpush.msra.mxu0 0.0
        %3816 = vmatpush.msra.mxu0 0.0
        %3817 = vmatpush.msra.mxu0 0.0
        %3818 = vmatpush.msra.mxu0 0.0
        %3819 = vmatpush.msra.mxu0 0.0
        %3820 = vmatpush.msra.mxu0 0.0
        %3821 = vmatpush.msra.mxu0 0.0
        %3822 = vmatpush.msra.mxu0 0.0
        %3823 = vmatpush.msra.mxu0 0.0
        %3824 = vmatpush.msra.mxu0 0.0
        %3825 = vmatpush.msra.mxu0 %v3807
        %3826 = vmatpush.msra.mxu0 %v3806
        %3827 = vmatmul.f32.gmra.mxu0 %v3809
        %v3828 = vpop.f32.mrf.mxu0
        %v3829 = vadd.f32 0.0, %v3828
        %3830 = vdwg.mxu0
        %v3831 = vadd.f32 %v3805, %v3829
        %v3832 = vld [vmem:[%s7 + $0xd0] sm:$0xff]
        %v3833 = vld [vmem:[%s7 + $0xd8] sm:$0xff]
        %v3834 = vrot.slane %v3492, 5
        %v3835 = vsel %vm617, %v3834, 0
        %3837 = vmatpush.msra.mxu0 0.0
        %3838 = vmatpush.msra.mxu0 0.0
        %3839 = vmatpush.msra.mxu0 0.0
        %3840 = vmatpush.msra.mxu0 0.0
        %3841 = vmatpush.msra.mxu0 0.0
        %3842 = vmatpush.msra.mxu0 0.0
        %3843 = vmatpush.msra.mxu0 0.0
        %3844 = vmatpush.msra.mxu0 0.0
        %3845 = vmatpush.msra.mxu0 0.0
        %3846 = vmatpush.msra.mxu0 0.0
        %3847 = vmatpush.msra.mxu0 0.0
        %3848 = vmatpush.msra.mxu0 0.0
        %3849 = vmatpush.msra.mxu0 0.0
        %3850 = vmatpush.msra.mxu0 0.0
        %3851 = vmatpush.msra.mxu0 %v3833
        %3852 = vmatpush.msra.mxu0 %v3832
        %3853 = vmatmul.f32.gmra.mxu0 %v3835
        %v3854 = vpop.f32.mrf.mxu0
        %v3855 = vadd.f32 0.0, %v3854
        %3856 = vdwg.mxu0
        %v3857 = vadd.f32 %v3831, %v3855
        %v3858 = vld [vmem:[%s7 + $0xe0] sm:$0xff]
        %v3859 = vld [vmem:[%s7 + $0xe8] sm:$0xff]
        %v3860 = vrot.slane %v3492, 6
        %v3861 = vsel %vm617, %v3860, 0
        %3863 = vmatpush.msra.mxu0 0.0
        %3864 = vmatpush.msra.mxu0 0.0
        %3865 = vmatpush.msra.mxu0 0.0
        %3866 = vmatpush.msra.mxu0 0.0
        %3867 = vmatpush.msra.mxu0 0.0
        %3868 = vmatpush.msra.mxu0 0.0
        %3869 = vmatpush.msra.mxu0 0.0
        %3870 = vmatpush.msra.mxu0 0.0
        %3871 = vmatpush.msra.mxu0 0.0
        %3872 = vmatpush.msra.mxu0 0.0
        %3873 = vmatpush.msra.mxu0 0.0
        %3874 = vmatpush.msra.mxu0 0.0
        %3875 = vmatpush.msra.mxu0 0.0
        %3876 = vmatpush.msra.mxu0 0.0
        %3877 = vmatpush.msra.mxu0 %v3859
        %3878 = vmatpush.msra.mxu0 %v3858
        %3879 = vmatmul.f32.gmra.mxu0 %v3861
        %v3880 = vpop.f32.mrf.mxu0
        %v3881 = vadd.f32 0.0, %v3880
        %3882 = vdwg.mxu0
        %v3883 = vadd.f32 %v3857, %v3881
        %v3884 = vld [vmem:[%s7 + $0xf0] sm:$0xff]
        %v3885 = vld [vmem:[%s7 + $0xf8] sm:$0xff]
        %v3886 = vrot.slane %v3492, 7
        %v3887 = vsel %vm617, %v3886, 0
        %3889 = vmatpush.msra.mxu0 0.0
        %3890 = vmatpush.msra.mxu0 0.0
        %3891 = vmatpush.msra.mxu0 0.0
        %3892 = vmatpush.msra.mxu0 0.0
        %3893 = vmatpush.msra.mxu0 0.0
        %3894 = vmatpush.msra.mxu0 0.0
        %3895 = vmatpush.msra.mxu0 0.0
        %3896 = vmatpush.msra.mxu0 0.0
        %3897 = vmatpush.msra.mxu0 0.0
        %3898 = vmatpush.msra.mxu0 0.0
        %3899 = vmatpush.msra.mxu0 0.0
        %3900 = vmatpush.msra.mxu0 0.0
        %3901 = vmatpush.msra.mxu0 0.0
        %3902 = vmatpush.msra.mxu0 0.0
        %3903 = vmatpush.msra.mxu0 %v3885
        %3904 = vmatpush.msra.mxu0 %v3884
        %3905 = vmatmul.f32.gmra.mxu0 %v3887
        %v3906 = vpop.f32.mrf.mxu0
        %v3907 = vadd.f32 0.0, %v3906
        %3908 = vdwg.mxu0
        %v3909 = vadd.f32 %v3883, %v3907
        %v3910 = vmax.f32 %v3909, 0.0
        %v3911 = vld [vmem:[%s9] sm:$0xff]
        %v3912 = vld [vmem:[%s9 + $0x8] sm:$0xff]
        %v3913 = vld [vmem:[%s9 + $0x10] sm:$0xff]
        %v3914 = vld [vmem:[%s9 + $0x18] sm:$0xff]
        %v3915 = vld [vmem:[%s9 + $0x20] sm:$0xff]
        %v3916 = vld [vmem:[%s9 + $0x28] sm:$0xff]
        %v3917 = vld [vmem:[%s9 + $0x30] sm:$0xff]
        %v3918 = vld [vmem:[%s9 + $0x38] sm:$0xff]
        %v3919 = vld [vmem:[%s9 + $0x40] sm:$0xff]
        %v3920 = vld [vmem:[%s9 + $0x48] sm:$0xff]
        %v3921 = vld [vmem:[%s9 + $0x50] sm:$0xff]
        %v3922 = vld [vmem:[%s9 + $0x58] sm:$0xff]
        %v3923 = vld [vmem:[%s9 + $0x60] sm:$0xff]
        %v3924 = vld [vmem:[%s9 + $0x68] sm:$0xff]
        %v3925 = vld [vmem:[%s9 + $0x70] sm:$0xff]
        %v3926 = vld [vmem:[%s10] sm:$0x1]
        %vm3927 = vcmask 982016
        %v3929 = vsel %vm3927, %v3910, 0
        %3931 = vmatpush.msra.mxu0 0.0
        %3932 = vmatpush.msra.mxu0 %v3925
        %3933 = vmatpush.msra.mxu0 %v3924
        %3934 = vmatpush.msra.mxu0 %v3923
        %3935 = vmatpush.msra.mxu0 %v3922
        %3936 = vmatpush.msra.mxu0 %v3921
        %3937 = vmatpush.msra.mxu0 %v3920
        %3938 = vmatpush.msra.mxu0 %v3919
        %3939 = vmatpush.msra.mxu0 %v3918
        %3940 = vmatpush.msra.mxu0 %v3917
        %3941 = vmatpush.msra.mxu0 %v3916
        %3942 = vmatpush.msra.mxu0 %v3915
        %3943 = vmatpush.msra.mxu0 %v3914
        %3944 = vmatpush.msra.mxu0 %v3913
        %3945 = vmatpush.msra.mxu0 %v3912
        %3946 = vmatpush.msra.mxu0 %v3911
        %3947 = vmatmul.f32.gmra.mxu0 %v3929
        %v3948 = vpop.f32.mrf.mxu0
        %v3949 = vadd.f32 %v3926, %v3948
        %3950 = vdwg.mxu0
        %v3951 = vmax.f32 %v3949, 0.0
        %v3952 = vld [vmem:[%s11] sm:$0xff]
        %v3953 = vld [vmem:[%s11 + $0x8] sm:$0xff]
        %v3954 = vld [vmem:[%s11 + $0x10] sm:$0xff]
        %v3955 = vld [vmem:[%s11 + $0x18] sm:$0xff]
        %v3956 = vld [vmem:[%s11 + $0x20] sm:$0xff]
        %v3957 = vld [vmem:[%s11 + $0x28] sm:$0xff]
        %v3958 = vld [vmem:[%s11 + $0x30] sm:$0xff]
        %v3959 = vld [vmem:[%s11 + $0x38] sm:$0xff]
        %v3960 = vld [vmem:[%s11 + $0x40] sm:$0xff]
        %v3961 = vld [vmem:[%s11 + $0x48] sm:$0xff]
        %v3962 = vld [vmem:[%s11 + $0x50] sm:$0xf]
        %v3963 = vld [vmem:[%s12] sm:$0x1]
        %vm3964 = vcmask 687104
        %v3966 = vsel %vm3964, %v3951, 0
        %vm3968 = vcmask 1043456
        %v3970 = vsel %vm3968, %v3962, 0
        %3972 = vmatpush.msra.mxu0 0.0
        %3973 = vmatpush.msra.mxu0 0.0
        %3974 = vmatpush.msra.mxu0 0.0
        %3975 = vmatpush.msra.mxu0 0.0
        %3976 = vmatpush.msra.mxu0 0.0
        %3977 = vmatpush.msra.mxu0 %v3970
        %3978 = vmatpush.msra.mxu0 %v3961
        %3979 = vmatpush.msra.mxu0 %v3960
        %3980 = vmatpush.msra.mxu0 %v3959
        %3981 = vmatpush.msra.mxu0 %v3958
        %3982 = vmatpush.msra.mxu0 %v3957
        %3983 = vmatpush.msra.mxu0 %v3956
        %3984 = vmatpush.msra.mxu0 %v3955
        %3985 = vmatpush.msra.mxu0 %v3954
        %3986 = vmatpush.msra.mxu0 %v3953
        %3987 = vmatpush.msra.mxu0 %v3952
        %3988 = vmatmul.f32.gmra.mxu0 %v3966
        %v3989 = vpop.f32.mrf.mxu0
        %v3990 = vadd.f32 %v3963, %v3989
        %3991 = vdwg.mxu0
        %v3992 = vmax.f32 %v3990, 0.0
        %vm3993 = vcmask 73728
        %3994 = vst.msk [vmem:[%s430] sm:$0x1] %vm3993, %v3992
        %s3995 = sand.u32 %s313, 1
        %s3996 = scalar_lea.sflag [#allocation5], %s3995
        %s3997 = sand.u32 %s313, 1
        %s3998 = scalar_lea.vmem [#allocation4], %s3997
        // Predicated region
        $region73: #{forward.1} parent=71 // pred_check
          %p3999 = pneg %p323
        $region74: #{forward.1} parent=71 // pred_check_branch
          %4001 = sbr.rel (%p3999) target = $region76
        $region75: #{forward.1} parent=71 // pred_region
          %4003 = vsyncadd %s3996, 0
          %s4004 = scalar_lea.hbm %s13, %s27
          %s4006 = sshll.u32 %s3998, 4
          %s4007 = int_to_ptr.vmem [resolvable:$true] %s4006
          %s4008 = sshll.u32 %s4004, 4
          %s4009 = int_to_ptr.hbm [resolvable:$true] %s4008
          %4011 = dma.vmem_to_hbm [thread:$0]  %s4007, 16, %s4009, %s3996
        $region76: #{forward.1} parent=71 // pred_fallthru
          _
      $region72: #{forward.1} parent=5 // pred_fallthru
        _
      %p4012 = scmp.le.s32.totalorder 2, %s22
      // Predicated region
      $region77: #{forward.1} parent=5 // pred_check
        %p4013 = pneg %p4012
      $region78: #{forward.1} parent=5 // pred_check_branch
        %4015 = sbr.rel (%p4013) target = $region80
      $region79: #{forward.1} parent=5 // pred_region
        %s4016 = ssub.s32 %s22, 2
        // Predicated region
        $region81: #{forward.1} parent=79 // pred_check
          %p4017 = pneg %p329
        $region82: #{forward.1} parent=79 // pred_check_branch
          %4019 = sbr.rel (%p4017) target = $region84
        $region83: #{forward.1} parent=79 // pred_region
          %s4020 = sand.u32 %s314, 1
          %s4021 = scalar_lea.sflag [#allocation5], %s4020
          %s4022 = sand.u32 %s314, 1
          %s4023 = scalar_lea.vmem [#allocation4], %s4022
          %4025 = dma.done %s4021, 16
        $region84: #{forward.1} parent=79 // pred_fallthru
          _
      $region80: #{forward.1} parent=5 // pred_fallthru
        _
    $region6: #{forward.1} parent=1 // loop_footer
      %s26 = sadd.s32 1, %s22
    $region7: #{forward.1} parent=1 // loop_footer_branch
      %21 = sbr.rel target = $region3
    $region8: #{forward.1} parent=1 // loop_exit
      _
    %4026 = vsyncpa [#allocation5], 1
    %s4027 = scalar_lea.sflag [#allocation5], 1
    %4028 = vsyncpa %s4027, 1

</llo_original>
